<compile_context>
chip_gen: v6e
topology: v6e:2x2x1
jax: 0.10.0
libtpu: 0.0.40
codegen_flags: <defaults>
</compile_context>

<pallas_src>
import functools

import jax
import jax.numpy as jnp
from jax import lax
from jax.experimental import pallas as pl
from jax.experimental.pallas import tpu as pltpu

EPS = 1e-5
VW = 128          # lane width of the packed-parameter arrays / padded fc5 out
FC4_OUT = 256     # fc4 hidden width (fixed by the module)
PADROWS = 8       # sublane-aligned border of the shift / pool staging refs


# --------------------------- Fused Pallas kernel -----------------------------

def _fused_forward_kernel(cfg,
                          # inputs
                          x_ref, wpk_ref, vpk_ref, bfc4_ref, wfc4_hbm,
                          # output
                          o_ref,
                          # scratch (VMEM + DMA semaphore)
                          s1, p1, s2b, p2, s3b, p3, flat, wfc4_vmem, dma_sem):
    B, K, pad = cfg["B"], cfg["K"], cfg["pad"]
    c1, c2, c3, c4, c5 = cfg["channels"]
    L0, Lp1, Lp2, Lp3 = cfg["L0"], cfg["Lp1"], cfg["Lp2"], cfg["Lp3"]
    Lc1, Lc2a, Lc2b, Lc3a, Lc3b = (cfg["Lc1"], cfg["Lc2a"], cfg["Lc2b"],
                                   cfg["Lc3a"], cfg["Lc3b"])
    wrow, vrow = cfg["wrow"], cfg["vrow"]

    # Kick off the only non-trivial weight transfer (fc4, bf16) immediately;
    # it overlaps every conv stage and is awaited just before the fc4 matmul.
    wfc4_cp = pltpu.make_async_copy(wfc4_hbm, wfc4_vmem, dma_sem)
    wfc4_cp.start()

    def vec(name):
        r, w = vrow[name]
        return vpk_ref[r:r + 1, 0:w]

    def conv_accum(tap, n, cin, L, wname, bname):
        # y[r] = relu(b + sum_t tap(t-pad)[r] @ W[t]); zero padding and
        # batch-boundary handling are done by masking the shifted tap inputs.
        roff, cout = wrow[wname]
        rows = lax.broadcasted_iota(jnp.int32, (n, 1), 0) % L
        y = jnp.zeros((n, cout), jnp.float32) + vec(bname)
        for t in range(K):
            s = t - pad
            xt = tap(s)
            if s != 0:
                valid = jnp.logical_and(rows + s >= 0, rows + s < L)
                xt = jnp.where(valid, xt, 0.0)
            wt = wpk_ref[roff + t * cin:roff + (t + 1) * cin, 0:cout]
            if cin == 1:
                y = y + xt * wt                      # outer product on the VPU
            else:
                y = y + jnp.dot(xt, wt, preferred_element_type=jnp.float32)
        return jnp.maximum(y, 0.0)

    def conv_from_value(h, scr, L, wname, bname):
        # Shift source = one aligned staging store + per-tap offset reads
        # (replaces the old im2col slab build).
        n, cin = h.shape
        scr[pl.ds(PADROWS, n), :] = h
        tap = lambda s: h if s == 0 else scr[pl.ds(PADROWS + s, n), :]
        return conv_accum(tap, n, cin, L, wname, bname)

    def conv_from_pool(p_ref, half, cin, L, sname, tname, wname, bname):
        # MaxPool1d(2) + eval-mode BN + tap shift fused into strided reads of
        # the previous conv's staged output (no pooled-activation round trip).
        g, t = vec(sname), vec(tname)

        def tap(s):
            e = p_ref[pl.ds(PADROWS + 2 * s, half, stride=2), :]
            o = p_ref[pl.ds(PADROWS + 1 + 2 * s, half, stride=2), :]
            return jnp.maximum(e, o) * g + t

        return conv_accum(tap, half, cin, L, wname, bname)

    # bn0: eval-mode BatchNorm1d(1) == scalar affine (scalars arrive as data).
    bn0 = vec("bn0")
    h = x_ref[...] * bn0[0:1, 0:1] + bn0[0:1, 1:2]            # (B*L0, 1)

    # stage 1
    h = conv_from_value(h, s1, L0, "w1", "b1")                # (B*Lc1, c1)
    p1[pl.ds(PADROWS, B * Lc1), :] = h

    # stage 2 (pool1+bn1 fused into conv2_1's tap reads)
    h = conv_from_pool(p1, B * Lp1, c1, Lp1, "bn1s", "bn1t", "w2_1", "b2_1")
    h = conv_from_value(h, s2b, Lc2a, "w2_2", "b2_2")         # (B*Lc2b, c3)
    p2[pl.ds(PADROWS, B * Lc2b), :] = h

    # stage 3 (pool2+bn2 fused into conv3_1's tap reads)
    h = conv_from_pool(p2, B * Lp2, c3, Lp2, "bn2s", "bn2t", "w3_1", "b3_1")
    h = conv_from_value(h, s3b, Lc3a, "w3_2", "b3_2")         # (B*Lc3b, c5)
    p3[...] = h

    # MaxPool3 + bn3 fused into the channels-last flatten (feature = l*c5+c);
    # wfc4's rows were permuted at call time so a single (B, fc4_in) matmul
    # matches PyTorch's NCW x.view(batch, -1) ordering.
    g3, t3 = vec("bn3s"), vec("bn3t")
    for li in range(Lp3):
        e = p3[pl.ds(2 * li, B, stride=Lc3b), :]
        o = p3[pl.ds(2 * li + 1, B, stride=Lc3b), :]
        flat[:, li * c5:(li + 1) * c5] = jnp.maximum(e, o) * g3 + t3

    # TODO(synk): nn.Dropout(p=0.5) layers are identity in inference mode;
    # training-mode stochastic masking is not implemented.
    wfc4_cp.wait()
    y = jnp.dot(flat[...].astype(jnp.bfloat16), wfc4_vmem[...],
                preferred_element_type=jnp.float32)
    y = jnp.maximum(y + bfc4_ref[...], 0.0)

    roff5, _ = wrow["wfc5"]
    y = jnp.dot(y, wpk_ref[roff5:roff5 + FC4_OUT, :],
                preferred_element_type=jnp.float32) + vec("bfc5")
    o_ref[...] = y


# --------------------------- Wrapper ------------------------------------------

def forward(params, x):
    cfg = params["cfg"]
    B, L0 = x.shape
    assert L0 == cfg["L0"]
    K, pad = cfg["K"], cfg["pad"]
    assert K % 2 == 1, "tap-accumulation conv assumes odd kernel_size"
    assert 2 * pad <= PADROWS
    c1, c2, c3, c4, c5 = cfg["channels"]
    assert c5 <= VW and cfg["out_shape"] <= VW
    for L in (cfg["Lc1"], cfg["Lc2b"], cfg["Lc3b"]):
        assert L % 2 == 0, "MaxPool1d(2) with odd length not supported"
    fc4_in, Lp3 = cfg["fc4_in"], cfg["Lp3"]
    f32 = jnp.float32

    x_col = x.astype(f32).reshape(B * L0, 1)      # channels-last column

    # --- host-side one-time layout plumbing (all tiny) ------------------------
    def rowpad(v):
        v = jnp.asarray(v, f32).reshape(-1)
        return jnp.pad(v, (0, VW - v.shape[0])).reshape(1, VW)

    vec_entries = [
        ("bn0",  jnp.array([params["bn0_scale"], params["bn0_shift"]], f32), 2),
        ("b1",   params["b1"], c1),
        ("bn1s", params["bn1_scale"], c1),
        ("bn1t", params["bn1_shift"], c1),
        ("b2_1", params["b2_1"], c2),
        ("b2_2", params["b2_2"], c3),
        ("bn2s", params["bn2_scale"], c3),
        ("bn2t", params["bn2_shift"], c3),
        ("b3_1", params["b3_1"], c4),
        ("b3_2", params["b3_2"], c5),
        ("bn3s", params["bn3_scale"], c5),
        ("bn3t", params["bn3_shift"], c5),
        ("bfc5", params["bfc5"], VW),
    ]
    vrow = {name: (i, width) for i, (name, _, width) in enumerate(vec_entries)}
    vpack = jnp.concatenate([rowpad(v) for _, v, _ in vec_entries], axis=0)
    if vpack.shape[0] % 8:
        vpack = jnp.pad(vpack, ((0, 8 - vpack.shape[0] % 8), (0, 0)))

    def wblock(w):                              # (..., cout) -> (rows, VW)
        w2 = jnp.asarray(w, f32)
        w2 = w2.reshape(-1, w2.shape[-1])
        return jnp.pad(w2, ((0, 0), (0, VW - w2.shape[-1])))

    w_entries = [
        ("w1",   wblock(params["w1"]),   c1),
        ("w2_1", wblock(params["w2_1"]), c2),
        ("w2_2", wblock(params["w2_2"]), c3),
        ("w3_1", wblock(params["w3_1"]), c4),
        ("w3_2", wblock(params["w3_2"]), c5),
        ("wfc5", wblock(params["wfc5"]), VW),
    ]
    blocks, wrow, off = [], {}, 0
    for name, blk, cout in w_entries:
        if off % 8:
            padr = 8 - off % 8
            blocks.append(jnp.zeros((padr, VW), f32))
            off += padr
        wrow[name] = (off, cout)
        blocks.append(blk)
        off += blk.shape[0]
    if off % 8:
        blocks.append(jnp.zeros((8 - off % 8, VW), f32))
    wpack = jnp.concatenate(blocks, axis=0)

    bfc4_row = jnp.asarray(params["bfc4"], f32).reshape(1, FC4_OUT)
    # Permute fc4 rows from PyTorch NCW-flatten order (c*Lp3 + l) to the
    # kernel's channels-last flatten order (l*c5 + c); cast to bf16 (halves
    # the dominant HBM->VMEM transfer, f32 accumulation on the MXU).
    wfc4p = (jnp.asarray(params["wfc4"], f32)
             .reshape(c5, Lp3, FC4_OUT).transpose(1, 0, 2)
             .reshape(fc4_in, FC4_OUT).astype(jnp.bfloat16))

    kcfg = dict(B=B, K=K, pad=pad, channels=(c1, c2, c3, c4, c5),
                L0=L0, Lc1=cfg["Lc1"], Lp1=cfg["Lp1"], Lc2a=cfg["Lc2a"],
                Lc2b=cfg["Lc2b"], Lp2=cfg["Lp2"], Lc3a=cfg["Lc3a"],
                Lc3b=cfg["Lc3b"], Lp3=Lp3, wrow=wrow, vrow=vrow)
    kern = functools.partial(_fused_forward_kernel, kcfg)

    out = pl.pallas_call(
        kern,
        out_shape=jax.ShapeDtypeStruct((B, VW), f32),
        in_specs=[
            pl.BlockSpec(memory_space=pltpu.MemorySpace.VMEM),   # x
            pl.BlockSpec(memory_space=pltpu.MemorySpace.VMEM),   # weight pack
            pl.BlockSpec(memory_space=pltpu.MemorySpace.VMEM),   # vector pack
            pl.BlockSpec(memory_space=pltpu.MemorySpace.VMEM),   # fc4 bias
            pl.BlockSpec(memory_space=pl.ANY),                   # wfc4 (HBM)
        ],
        out_specs=pl.BlockSpec(memory_space=pltpu.MemorySpace.VMEM),
        scratch_shapes=[
            pltpu.VMEM((B * L0 + 2 * PADROWS, 1), f32),              # s1
            pltpu.VMEM((B * cfg["Lc1"] + 2 * PADROWS, c1), f32),     # p1
            pltpu.VMEM((B * cfg["Lc2a"] + 2 * PADROWS, c2), f32),    # s2b
            pltpu.VMEM((B * cfg["Lc2b"] + 2 * PADROWS, c3), f32),    # p2
            pltpu.VMEM((B * cfg["Lc3a"] + 2 * PADROWS, c4), f32),    # s3b
            pltpu.VMEM((B * cfg["Lc3b"], c5), f32),                  # p3
            pltpu.VMEM((B, fc4_in), f32),                            # flat
            pltpu.VMEM((fc4_in, FC4_OUT), jnp.bfloat16),             # wfc4 dst
            pltpu.SemaphoreType.DMA(()),                             # DMA sem
        ],
        compiler_params=pltpu.CompilerParams(vmem_limit_bytes=32 * 1024 * 1024),
    )(x_col, wpack, vpack, bfc4_row, wfc4p)

    return out[:, :cfg["out_shape"]]


# --------------------------- Parameters --------------------------------------

def init_params(key, input_shape, out_shape, kernel_size, channel_size):
    k = kernel_size
    pad = k // 2
    c1 = channel_size
    c2, c3, c4, c5 = 2 * c1, 4 * c1, 8 * c1, 16 * c1

    keys = iter(jax.random.split(key, 64))

    def conv_w(cin, cout):
        fan = cin * k
        return (jax.random.normal(next(keys), (k, cin, cout), jnp.float32)
                / jnp.sqrt(float(fan)))

    def conv_b(cout):
        return 0.01 * jax.random.normal(next(keys), (cout,), jnp.float32)

    def bn(c):
        gamma = 1.0 + 0.1 * jax.random.normal(next(keys), (c,), jnp.float32)
        beta = 0.1 * jax.random.normal(next(keys), (c,), jnp.float32)
        mean = 0.1 * jax.random.normal(next(keys), (c,), jnp.float32)
        var = 1.0 + 0.1 * jax.random.uniform(next(keys), (c,), jnp.float32)
        scale = gamma / jnp.sqrt(var + EPS)
        shift = beta - mean * scale
        return scale, shift

    # bn0 has a single feature -> scalar affine.
    s0, t0 = bn(1)
    bn0_scale, bn0_shift = float(s0[0]), float(t0[0])

    # length bookkeeping (mirrors the PyTorch __init__ arithmetic)
    conv_len = lambda l: l + 2 * pad - (k - 1)
    L0 = input_shape
    Lc1 = conv_len(L0)
    Lp1 = Lc1 // 2
    Lc2a = conv_len(Lp1)
    Lc2b = conv_len(Lc2a)
    Lp2 = Lc2b // 2
    Lc3a = conv_len(Lp2)
    Lc3b = conv_len(Lc3a)
    Lp3 = Lc3b // 2
    fc4_in = c5 * Lp3

    def lin_w(fin, fout):
        return (jax.random.normal(next(keys), (fin, fout), jnp.float32)
                / jnp.sqrt(float(fin)))

    def lin_b(fout):
        return 0.01 * jax.random.normal(next(keys), (fout,), jnp.float32)

    bn1_scale, bn1_shift = bn(c1)
    bn2_scale, bn2_shift = bn(c3)
    bn3_scale, bn3_shift = bn(c5)

    cfg = dict(L0=L0, K=k, pad=pad, out_shape=out_shape,
               channels=(c1, c2, c3, c4, c5),
               Lc1=Lc1, Lp1=Lp1, Lc2a=Lc2a, Lc2b=Lc2b, Lp2=Lp2,
               Lc3a=Lc3a, Lc3b=Lc3b, Lp3=Lp3, fc4_in=fc4_in)

    return dict(
        cfg=cfg,
        bn0_scale=bn0_scale, bn0_shift=bn0_shift,
        w1=conv_w(1, c1), b1=conv_b(c1),
        bn1_scale=bn1_scale, bn1_shift=bn1_shift,
        w2_1=conv_w(c1, c2), b2_1=conv_b(c2),
        w2_2=conv_w(c2, c3), b2_2=conv_b(c3),
        bn2_scale=bn2_scale, bn2_shift=bn2_shift,
        w3_1=conv_w(c3, c4), b3_1=conv_b(c4),
        w3_2=conv_w(c4, c5), b3_2=conv_b(c5),
        bn3_scale=bn3_scale, bn3_shift=bn3_shift,
        # wfc4 rows are stored in PyTorch NCW-flatten order (feature = c*Lp3+l).
        wfc4=lin_w(fc4_in, 256), bfc4=lin_b(256),
        wfc5=lin_w(256, out_shape), bfc5=lin_b(out_shape),
    )


# --------------------------- Pure-JAX reference -------------------------------

def reference_forward(params, x):
    """Mirrors the PyTorch graph (eval mode) with high-precision XLA ops."""
    cfg = params["cfg"]
    pad = cfg["pad"]
    prec = jax.lax.Precision.HIGHEST

    def conv_relu(h, w, b):
        K = w.shape[0]
        L_out = h.shape[1] + 2 * pad - (K - 1)
        hp = jnp.pad(h, ((0, 0), (pad, pad), (0, 0)))
        y = b[None, None, :]
        for t in range(K):
            y = y + jnp.einsum("blc,cd->bld", hp[:, t:t + L_out, :], w[t],
                               precision=prec)
        return jnp.maximum(y, 0.0)

    def pool_bn(h, s, t):
        Bb, L, C = h.shape
        h = jnp.max(h.reshape(Bb, L // 2, 2, C), axis=2)
        return h * s[None, None, :] + t[None, None, :]

    h = x.astype(jnp.float32)[:, :, None]                     # (B, L, 1)
    h = h * params["bn0_scale"] + params["bn0_shift"]
    h = pool_bn(conv_relu(h, params["w1"], params["b1"]),
                params["bn1_scale"], params["bn1_shift"])
    h = conv_relu(h, params["w2_1"], params["b2_1"])
    h = pool_bn(conv_relu(h, params["w2_2"], params["b2_2"]),
                params["bn2_scale"], params["bn2_shift"])
    h = conv_relu(h, params["w3_1"], params["b3_1"])
    h = pool_bn(conv_relu(h, params["w3_2"], params["b3_2"]),
                params["bn3_scale"], params["bn3_shift"])
    B = h.shape[0]
    flat = jnp.transpose(h, (0, 2, 1)).reshape(B, -1)         # NCW flatten
    y = jnp.maximum(jnp.dot(flat, params["wfc4"], precision=prec)
                    + params["bfc4"][None, :], 0.0)
    return jnp.dot(y, params["wfc5"], precision=prec) + params["bfc5"][None, :]


# --------------------------- Main ---------------------------------------------

if __name__ == "__main__":
    input_shape = 64
    out_shape = 10
    kernel_size = 3
    channel_size = 4
    batch = 2

    key = jax.random.PRNGKey(0)
    pkey, xkey = jax.random.split(key)
    params = init_params(pkey, input_shape, out_shape, kernel_size, channel_size)
    x = jax.random.normal(xkey, (batch, input_shape), dtype=jnp.float32)

    y = forward(params, x)
    y = jax.block_until_ready(y)
    assert y.shape == (batch, out_shape), y.shape
    assert bool(jnp.all(jnp.isfinite(y)))

    y_ref = reference_forward(params, x)
    max_diff = float(jnp.max(jnp.abs(y - y_ref)))
    assert jnp.allclose(y, y_ref, rtol=1e-2, atol=1e-2), max_diff

    print("KERNEL_OK")
</pallas_src>

<mosaic_0001>
module attributes {stable_mosaic.version = 11 : i64} {
  func.func @_fused_forward_kernel(%arg0: memref<128x1xf32, #tpu.memory_space<vmem>>, %arg1: memref<448x128xf32, #tpu.memory_space<vmem>>, %arg2: memref<16x128xf32, #tpu.memory_space<vmem>>, %arg3: memref<1x256xf32, #tpu.memory_space<vmem>>, %arg4: memref<512x256xbf16, #tpu.memory_space<any>>, %arg5: memref<2x128xf32, #tpu.memory_space<vmem>>, %arg6: memref<144x1xf32, #tpu.memory_space<vmem>>, %arg7: memref<144x4xf32, #tpu.memory_space<vmem>>, %arg8: memref<80x8xf32, #tpu.memory_space<vmem>>, %arg9: memref<80x16xf32, #tpu.memory_space<vmem>>, %arg10: memref<48x32xf32, #tpu.memory_space<vmem>>, %arg11: memref<32x64xf32, #tpu.memory_space<vmem>>, %arg12: memref<2x512xf32, #tpu.memory_space<vmem>>, %arg13: memref<512x256xbf16, #tpu.memory_space<vmem>>, %arg14: memref<!tpu.dma_semaphore, #tpu.memory_space<semaphore_mem>>) attributes {dimension_semantics = [], scalar_prefetch = 0 : i64, scratch_operands = 9 : i64, tpu.core_type = #tpu.core_type<tc>} {
    tpu.enqueue_dma source(%arg4 : memref<512x256xbf16, #tpu.memory_space<any>>) target(%arg13 : memref<512x256xbf16, #tpu.memory_space<vmem>>) target_semaphore(%arg14 : memref<!tpu.dma_semaphore, #tpu.memory_space<semaphore_mem>>)
    %c0 = arith.constant 0 : index
    %c0_0 = arith.constant 0 : index
    %0 = vector.load %arg2[%c0, %c0_0] : memref<16x128xf32, #tpu.memory_space<vmem>>, vector<1x2xf32>
    %c0_1 = arith.constant 0 : index
    %c0_2 = arith.constant 0 : index
    %1 = vector.load %arg0[%c0_1, %c0_2] : memref<128x1xf32, #tpu.memory_space<vmem>>, vector<128x1xf32>
    %2 = vector.extract_strided_slice %0 {offsets = [0, 0], sizes = [1, 1], strides = [1, 1]} : vector<1x2xf32> to vector<1x1xf32>
    %3 = vector.broadcast %2 : vector<1x1xf32> to vector<128x1xf32>
    %4 = arith.mulf %1, %3 : vector<128x1xf32>
    %5 = vector.extract_strided_slice %0 {offsets = [0, 1], sizes = [1, 1], strides = [1, 1]} : vector<1x2xf32> to vector<1x1xf32>
    %6 = vector.broadcast %5 : vector<1x1xf32> to vector<128x1xf32>
    %7 = arith.addf %4, %6 : vector<128x1xf32>
    %c8 = arith.constant 8 : index
    %c0_3 = arith.constant 0 : index
    %8 = vector.load %arg6[%c8, %c0_3] : memref<144x1xf32, #tpu.memory_space<vmem>>, vector<128x1xf32>
    tpu.vector_store %arg6[%c8, %c0_3], %7 {strides = array<i32>} : memref<144x1xf32, #tpu.memory_space<vmem>>, vector<128x1xf32>,
    %9 = tpu.iota {dimensions = array<i32: 0>} : vector<128x1xi32>
    %c64_i32 = arith.constant 64 : i32
    %c0_i32 = arith.constant 0 : i32
    %10 = arith.cmpi eq, %c64_i32, %c0_i32 : i32
    %c1_i32 = arith.constant 1 : i32
    %11 = arith.select %10, %c1_i32, %c64_i32 : i32
    %12 = vector.broadcast %11 : i32 to vector<128x1xi32>
    %13 = arith.remsi %9, %12 : vector<128x1xi32>
    %c0_i32_4 = arith.constant 0 : i32
    %14 = vector.broadcast %c0_i32_4 : i32 to vector<128x1xi32>
    %15 = arith.cmpi ne, %13, %14 : vector<128x1xi32>
    %c0_i32_5 = arith.constant 0 : i32
    %16 = vector.broadcast %c0_i32_5 : i32 to vector<128x1xi32>
    %17 = arith.cmpi slt, %13, %16 : vector<128x1xi32>
    %c0_i32_6 = arith.constant 0 : i32
    %18 = arith.cmpi slt, %11, %c0_i32_6 : i32
    %19 = vector.broadcast %18 : i1 to vector<128x1xi1>
    %20 = vector.broadcast %19 : vector<128x1xi1> to vector<128x1xi1>
    %21 = arith.xori %17, %20 : vector<128x1xi1>
    %22 = arith.andi %21, %15 : vector<128x1xi1>
    %23 = vector.broadcast %11 : i32 to vector<128x1xi32>
    %24 = arith.addi %13, %23 : vector<128x1xi32>
    %25 = arith.select %22, %24, %13 : vector<128x1xi1>, vector<128x1xi32>
    %cst = arith.constant 0.000000e+00 : f32
    %26 = vector.broadcast %cst : f32 to vector<128x4xf32>
    %c1 = arith.constant 1 : index
    %c0_7 = arith.constant 0 : index
    %27 = vector.load %arg2[%c1, %c0_7] : memref<16x128xf32, #tpu.memory_space<vmem>>, vector<1x4xf32>
    %28 = vector.broadcast %27 : vector<1x4xf32> to vector<128x4xf32>
    %29 = arith.addf %26, %28 : vector<128x4xf32>
    %c7 = arith.constant 7 : index
    %c0_8 = arith.constant 0 : index
    %30 = vector.load %arg6[%c7, %c0_8] : memref<144x1xf32, #tpu.memory_space<vmem>>, vector<128x1xf32>
    %c-1_i32 = arith.constant -1 : i32
    %31 = vector.broadcast %c-1_i32 : i32 to vector<128x1xi32>
    %32 = arith.addi %25, %31 : vector<128x1xi32>
    %c0_i32_9 = arith.constant 0 : i32
    %33 = vector.broadcast %c0_i32_9 : i32 to vector<128x1xi32>
    %34 = arith.cmpi sge, %32, %33 : vector<128x1xi32>
    %c-1_i32_10 = arith.constant -1 : i32
    %35 = vector.broadcast %c-1_i32_10 : i32 to vector<128x1xi32>
    %36 = arith.addi %25, %35 : vector<128x1xi32>
    %c64_i32_11 = arith.constant 64 : i32
    %37 = vector.broadcast %c64_i32_11 : i32 to vector<128x1xi32>
    %38 = arith.cmpi slt, %36, %37 : vector<128x1xi32>
    %39 = arith.andi %34, %38 : vector<128x1xi1>
    %cst_12 = arith.constant 0.000000e+00 : f32
    %40 = vector.broadcast %cst_12 : f32 to vector<128x1xf32>
    %41 = arith.select %39, %30, %40 : vector<128x1xi1>, vector<128x1xf32>
    %c0_13 = arith.constant 0 : index
    %c0_14 = arith.constant 0 : index
    %42 = vector.load %arg1[%c0_13, %c0_14] : memref<448x128xf32, #tpu.memory_space<vmem>>, vector<1x4xf32>
    %43 = vector.broadcast %41 : vector<128x1xf32> to vector<128x4xf32>
    %44 = vector.broadcast %42 : vector<1x4xf32> to vector<128x4xf32>
    %45 = arith.mulf %43, %44 : vector<128x4xf32>
    %46 = arith.addf %29, %45 : vector<128x4xf32>
    %c1_15 = arith.constant 1 : index
    %c0_16 = arith.constant 0 : index
    %47 = vector.load %arg1[%c1_15, %c0_16] : memref<448x128xf32, #tpu.memory_space<vmem>>, vector<1x4xf32>
    %48 = vector.broadcast %7 : vector<128x1xf32> to vector<128x4xf32>
    %49 = vector.broadcast %47 : vector<1x4xf32> to vector<128x4xf32>
    %50 = arith.mulf %48, %49 : vector<128x4xf32>
    %51 = arith.addf %46, %50 : vector<128x4xf32>
    %c9 = arith.constant 9 : index
    %c0_17 = arith.constant 0 : index
    %52 = vector.load %arg6[%c9, %c0_17] : memref<144x1xf32, #tpu.memory_space<vmem>>, vector<128x1xf32>
    %c1_i32_18 = arith.constant 1 : i32
    %53 = vector.broadcast %c1_i32_18 : i32 to vector<128x1xi32>
    %54 = arith.addi %25, %53 : vector<128x1xi32>
    %c0_i32_19 = arith.constant 0 : i32
    %55 = vector.broadcast %c0_i32_19 : i32 to vector<128x1xi32>
    %56 = arith.cmpi sge, %54, %55 : vector<128x1xi32>
    %c1_i32_20 = arith.constant 1 : i32
    %57 = vector.broadcast %c1_i32_20 : i32 to vector<128x1xi32>
    %58 = arith.addi %25, %57 : vector<128x1xi32>
    %c64_i32_21 = arith.constant 64 : i32
    %59 = vector.broadcast %c64_i32_21 : i32 to vector<128x1xi32>
    %60 = arith.cmpi slt, %58, %59 : vector<128x1xi32>
    %61 = arith.andi %56, %60 : vector<128x1xi1>
    %cst_22 = arith.constant 0.000000e+00 : f32
    %62 = vector.broadcast %cst_22 : f32 to vector<128x1xf32>
    %63 = arith.select %61, %52, %62 : vector<128x1xi1>, vector<128x1xf32>
    %c2 = arith.constant 2 : index
    %c0_23 = arith.constant 0 : index
    %64 = vector.load %arg1[%c2, %c0_23] : memref<448x128xf32, #tpu.memory_space<vmem>>, vector<1x4xf32>
    %65 = vector.broadcast %63 : vector<128x1xf32> to vector<128x4xf32>
    %66 = vector.broadcast %64 : vector<1x4xf32> to vector<128x4xf32>
    %67 = arith.mulf %65, %66 : vector<128x4xf32>
    %68 = arith.addf %51, %67 : vector<128x4xf32>
    %cst_24 = arith.constant 0.000000e+00 : f32
    %69 = vector.broadcast %cst_24 : f32 to vector<128x4xf32>
    %70 = arith.maximumf %68, %69 : vector<128x4xf32>
    %c8_25 = arith.constant 8 : index
    %c0_26 = arith.constant 0 : index
    %71 = vector.load %arg7[%c8_25, %c0_26] : memref<144x4xf32, #tpu.memory_space<vmem>>, vector<128x4xf32>
    tpu.vector_store %arg7[%c8_25, %c0_26], %70 {strides = array<i32>} : memref<144x4xf32, #tpu.memory_space<vmem>>, vector<128x4xf32>,
    %c2_27 = arith.constant 2 : index
    %c0_28 = arith.constant 0 : index
    %72 = vector.load %arg2[%c2_27, %c0_28] : memref<16x128xf32, #tpu.memory_space<vmem>>, vector<1x4xf32>
    %c3 = arith.constant 3 : index
    %c0_29 = arith.constant 0 : index
    %73 = vector.load %arg2[%c3, %c0_29] : memref<16x128xf32, #tpu.memory_space<vmem>>, vector<1x4xf32>
    %74 = tpu.iota {dimensions = array<i32: 0>} : vector<64x1xi32>
    %c32_i32 = arith.constant 32 : i32
    %c0_i32_30 = arith.constant 0 : i32
    %75 = arith.cmpi eq, %c32_i32, %c0_i32_30 : i32
    %c1_i32_31 = arith.constant 1 : i32
    %76 = arith.select %75, %c1_i32_31, %c32_i32 : i32
    %77 = vector.broadcast %76 : i32 to vector<64x1xi32>
    %78 = arith.remsi %74, %77 : vector<64x1xi32>
    %c0_i32_32 = arith.constant 0 : i32
    %79 = vector.broadcast %c0_i32_32 : i32 to vector<64x1xi32>
    %80 = arith.cmpi ne, %78, %79 : vector<64x1xi32>
    %c0_i32_33 = arith.constant 0 : i32
    %81 = vector.broadcast %c0_i32_33 : i32 to vector<64x1xi32>
    %82 = arith.cmpi slt, %78, %81 : vector<64x1xi32>
    %c0_i32_34 = arith.constant 0 : i32
    %83 = arith.cmpi slt, %76, %c0_i32_34 : i32
    %84 = vector.broadcast %83 : i1 to vector<64x1xi1>
    %85 = vector.broadcast %84 : vector<64x1xi1> to vector<64x1xi1>
    %86 = arith.xori %82, %85 : vector<64x1xi1>
    %87 = arith.andi %86, %80 : vector<64x1xi1>
    %88 = vector.broadcast %76 : i32 to vector<64x1xi32>
    %89 = arith.addi %78, %88 : vector<64x1xi32>
    %90 = arith.select %87, %89, %78 : vector<64x1xi1>, vector<64x1xi32>
    %cst_35 = arith.constant 0.000000e+00 : f32
    %91 = vector.broadcast %cst_35 : f32 to vector<64x8xf32>
    %c4 = arith.constant 4 : index
    %c0_36 = arith.constant 0 : index
    %92 = vector.load %arg2[%c4, %c0_36] : memref<16x128xf32, #tpu.memory_space<vmem>>, vector<1x8xf32>
    %93 = vector.broadcast %92 : vector<1x8xf32> to vector<64x8xf32>
    %94 = arith.addf %91, %93 : vector<64x8xf32>
    %c6 = arith.constant 6 : index
    %c0_37 = arith.constant 0 : index
    %95 = tpu.strided_load %arg7[%c6, %c0_37] {strides = array<i32: 2, 1>} : memref<144x4xf32, #tpu.memory_space<vmem>>, vector<64x4xf32>
    %c7_38 = arith.constant 7 : index
    %c0_39 = arith.constant 0 : index
    %96 = tpu.strided_load %arg7[%c7_38, %c0_39] {strides = array<i32: 2, 1>} : memref<144x4xf32, #tpu.memory_space<vmem>>, vector<64x4xf32>
    %97 = arith.maximumf %95, %96 : vector<64x4xf32>
    %98 = vector.broadcast %72 : vector<1x4xf32> to vector<64x4xf32>
    %99 = arith.mulf %97, %98 : vector<64x4xf32>
    %100 = vector.broadcast %73 : vector<1x4xf32> to vector<64x4xf32>
    %101 = arith.addf %99, %100 : vector<64x4xf32>
    %c-1_i32_40 = arith.constant -1 : i32
    %102 = vector.broadcast %c-1_i32_40 : i32 to vector<64x1xi32>
    %103 = arith.addi %90, %102 : vector<64x1xi32>
    %c0_i32_41 = arith.constant 0 : i32
    %104 = vector.broadcast %c0_i32_41 : i32 to vector<64x1xi32>
    %105 = arith.cmpi sge, %103, %104 : vector<64x1xi32>
    %c-1_i32_42 = arith.constant -1 : i32
    %106 = vector.broadcast %c-1_i32_42 : i32 to vector<64x1xi32>
    %107 = arith.addi %90, %106 : vector<64x1xi32>
    %c32_i32_43 = arith.constant 32 : i32
    %108 = vector.broadcast %c32_i32_43 : i32 to vector<64x1xi32>
    %109 = arith.cmpi slt, %107, %108 : vector<64x1xi32>
    %110 = arith.andi %105, %109 : vector<64x1xi1>
    %cst_44 = arith.constant 0.000000e+00 : f32
    %111 = vector.shape_cast %110 : vector<64x1xi1> to vector<64x1xi1>
    %112 = vector.broadcast %111 : vector<64x1xi1> to vector<64x4xi1>
    %113 = vector.broadcast %cst_44 : f32 to vector<64x4xf32>
    %114 = arith.select %112, %101, %113 : vector<64x4xi1>, vector<64x4xf32>
    %c8_45 = arith.constant 8 : index
    %c0_46 = arith.constant 0 : index
    %115 = vector.load %arg1[%c8_45, %c0_46] : memref<448x128xf32, #tpu.memory_space<vmem>>, vector<4x8xf32>
    %cst_47 = arith.constant dense<0.000000e+00> : vector<64x8xf32>
    %116 = tpu.matmul %114, %115, %cst_47 {dimension_numbers = #tpu.dot_dimension_numbers<[1], [0], [0], [1], [0, 0, 1, 1], [], []>} : vector<64x4xf32>, vector<4x8xf32>, vector<64x8xf32> -> vector<64x8xf32>
    %117 = arith.addf %94, %116 : vector<64x8xf32>
    %c8_48 = arith.constant 8 : index
    %c0_49 = arith.constant 0 : index
    %118 = tpu.strided_load %arg7[%c8_48, %c0_49] {strides = array<i32: 2, 1>} : memref<144x4xf32, #tpu.memory_space<vmem>>, vector<64x4xf32>
    %c9_50 = arith.constant 9 : index
    %c0_51 = arith.constant 0 : index
    %119 = tpu.strided_load %arg7[%c9_50, %c0_51] {strides = array<i32: 2, 1>} : memref<144x4xf32, #tpu.memory_space<vmem>>, vector<64x4xf32>
    %120 = arith.maximumf %118, %119 : vector<64x4xf32>
    %121 = vector.broadcast %72 : vector<1x4xf32> to vector<64x4xf32>
    %122 = arith.mulf %120, %121 : vector<64x4xf32>
    %123 = vector.broadcast %73 : vector<1x4xf32> to vector<64x4xf32>
    %124 = arith.addf %122, %123 : vector<64x4xf32>
    %c12 = arith.constant 12 : index
    %c0_52 = arith.constant 0 : index
    %125 = vector.load %arg1[%c12, %c0_52] : memref<448x128xf32, #tpu.memory_space<vmem>>, vector<4x8xf32>
    %cst_53 = arith.constant dense<0.000000e+00> : vector<64x8xf32>
    %126 = tpu.matmul %124, %125, %cst_53 {dimension_numbers = #tpu.dot_dimension_numbers<[1], [0], [0], [1], [0, 0, 1, 1], [], []>} : vector<64x4xf32>, vector<4x8xf32>, vector<64x8xf32> -> vector<64x8xf32>
    %127 = arith.addf %117, %126 : vector<64x8xf32>
    %c10 = arith.constant 10 : index
    %c0_54 = arith.constant 0 : index
    %128 = tpu.strided_load %arg7[%c10, %c0_54] {strides = array<i32: 2, 1>} : memref<144x4xf32, #tpu.memory_space<vmem>>, vector<64x4xf32>
    %c11 = arith.constant 11 : index
    %c0_55 = arith.constant 0 : index
    %129 = tpu.strided_load %arg7[%c11, %c0_55] {strides = array<i32: 2, 1>} : memref<144x4xf32, #tpu.memory_space<vmem>>, vector<64x4xf32>
    %130 = arith.maximumf %128, %129 : vector<64x4xf32>
    %131 = vector.broadcast %72 : vector<1x4xf32> to vector<64x4xf32>
    %132 = arith.mulf %130, %131 : vector<64x4xf32>
    %133 = vector.broadcast %73 : vector<1x4xf32> to vector<64x4xf32>
    %134 = arith.addf %132, %133 : vector<64x4xf32>
    %c1_i32_56 = arith.constant 1 : i32
    %135 = vector.broadcast %c1_i32_56 : i32 to vector<64x1xi32>
    %136 = arith.addi %90, %135 : vector<64x1xi32>
    %c0_i32_57 = arith.constant 0 : i32
    %137 = vector.broadcast %c0_i32_57 : i32 to vector<64x1xi32>
    %138 = arith.cmpi sge, %136, %137 : vector<64x1xi32>
    %c1_i32_58 = arith.constant 1 : i32
    %139 = vector.broadcast %c1_i32_58 : i32 to vector<64x1xi32>
    %140 = arith.addi %90, %139 : vector<64x1xi32>
    %c32_i32_59 = arith.constant 32 : i32
    %141 = vector.broadcast %c32_i32_59 : i32 to vector<64x1xi32>
    %142 = arith.cmpi slt, %140, %141 : vector<64x1xi32>
    %143 = arith.andi %138, %142 : vector<64x1xi1>
    %cst_60 = arith.constant 0.000000e+00 : f32
    %144 = vector.shape_cast %143 : vector<64x1xi1> to vector<64x1xi1>
    %145 = vector.broadcast %144 : vector<64x1xi1> to vector<64x4xi1>
    %146 = vector.broadcast %cst_60 : f32 to vector<64x4xf32>
    %147 = arith.select %145, %134, %146 : vector<64x4xi1>, vector<64x4xf32>
    %c16 = arith.constant 16 : index
    %c0_61 = arith.constant 0 : index
    %148 = vector.load %arg1[%c16, %c0_61] : memref<448x128xf32, #tpu.memory_space<vmem>>, vector<4x8xf32>
    %cst_62 = arith.constant dense<0.000000e+00> : vector<64x8xf32>
    %149 = tpu.matmul %147, %148, %cst_62 {dimension_numbers = #tpu.dot_dimension_numbers<[1], [0], [0], [1], [0, 0, 1, 1], [], []>} : vector<64x4xf32>, vector<4x8xf32>, vector<64x8xf32> -> vector<64x8xf32>
    %150 = arith.addf %127, %149 : vector<64x8xf32>
    %cst_63 = arith.constant 0.000000e+00 : f32
    %151 = vector.broadcast %cst_63 : f32 to vector<64x8xf32>
    %152 = arith.maximumf %150, %151 : vector<64x8xf32>
    %c8_64 = arith.constant 8 : index
    %c0_65 = arith.constant 0 : index
    %153 = vector.load %arg8[%c8_64, %c0_65] : memref<80x8xf32, #tpu.memory_space<vmem>>, vector<64x8xf32>
    tpu.vector_store %arg8[%c8_64, %c0_65], %152 {strides = array<i32>} : memref<80x8xf32, #tpu.memory_space<vmem>>, vector<64x8xf32>,
    %154 = tpu.iota {dimensions = array<i32: 0>} : vector<64x1xi32>
    %c32_i32_66 = arith.constant 32 : i32
    %c0_i32_67 = arith.constant 0 : i32
    %155 = arith.cmpi eq, %c32_i32_66, %c0_i32_67 : i32
    %c1_i32_68 = arith.constant 1 : i32
    %156 = arith.select %155, %c1_i32_68, %c32_i32_66 : i32
    %157 = vector.broadcast %156 : i32 to vector<64x1xi32>
    %158 = arith.remsi %154, %157 : vector<64x1xi32>
    %c0_i32_69 = arith.constant 0 : i32
    %159 = vector.broadcast %c0_i32_69 : i32 to vector<64x1xi32>
    %160 = arith.cmpi ne, %158, %159 : vector<64x1xi32>
    %c0_i32_70 = arith.constant 0 : i32
    %161 = vector.broadcast %c0_i32_70 : i32 to vector<64x1xi32>
    %162 = arith.cmpi slt, %158, %161 : vector<64x1xi32>
    %c0_i32_71 = arith.constant 0 : i32
    %163 = arith.cmpi slt, %156, %c0_i32_71 : i32
    %164 = vector.broadcast %163 : i1 to vector<64x1xi1>
    %165 = vector.broadcast %164 : vector<64x1xi1> to vector<64x1xi1>
    %166 = arith.xori %162, %165 : vector<64x1xi1>
    %167 = arith.andi %166, %160 : vector<64x1xi1>
    %168 = vector.broadcast %156 : i32 to vector<64x1xi32>
    %169 = arith.addi %158, %168 : vector<64x1xi32>
    %170 = arith.select %167, %169, %158 : vector<64x1xi1>, vector<64x1xi32>
    %cst_72 = arith.constant 0.000000e+00 : f32
    %171 = vector.broadcast %cst_72 : f32 to vector<64x16xf32>
    %c5 = arith.constant 5 : index
    %c0_73 = arith.constant 0 : index
    %172 = vector.load %arg2[%c5, %c0_73] : memref<16x128xf32, #tpu.memory_space<vmem>>, vector<1x16xf32>
    %173 = vector.broadcast %172 : vector<1x16xf32> to vector<64x16xf32>
    %174 = arith.addf %171, %173 : vector<64x16xf32>
    %c7_74 = arith.constant 7 : index
    %c0_75 = arith.constant 0 : index
    %175 = vector.load %arg8[%c7_74, %c0_75] : memref<80x8xf32, #tpu.memory_space<vmem>>, vector<64x8xf32>
    %c-1_i32_76 = arith.constant -1 : i32
    %176 = vector.broadcast %c-1_i32_76 : i32 to vector<64x1xi32>
    %177 = arith.addi %170, %176 : vector<64x1xi32>
    %c0_i32_77 = arith.constant 0 : i32
    %178 = vector.broadcast %c0_i32_77 : i32 to vector<64x1xi32>
    %179 = arith.cmpi sge, %177, %178 : vector<64x1xi32>
    %c-1_i32_78 = arith.constant -1 : i32
    %180 = vector.broadcast %c-1_i32_78 : i32 to vector<64x1xi32>
    %181 = arith.addi %170, %180 : vector<64x1xi32>
    %c32_i32_79 = arith.constant 32 : i32
    %182 = vector.broadcast %c32_i32_79 : i32 to vector<64x1xi32>
    %183 = arith.cmpi slt, %181, %182 : vector<64x1xi32>
    %184 = arith.andi %179, %183 : vector<64x1xi1>
    %cst_80 = arith.constant 0.000000e+00 : f32
    %185 = vector.shape_cast %184 : vector<64x1xi1> to vector<64x1xi1>
    %186 = vector.broadcast %185 : vector<64x1xi1> to vector<64x8xi1>
    %187 = vector.broadcast %cst_80 : f32 to vector<64x8xf32>
    %188 = arith.select %186, %175, %187 : vector<64x8xi1>, vector<64x8xf32>
    %c24 = arith.constant 24 : index
    %c0_81 = arith.constant 0 : index
    %189 = vector.load %arg1[%c24, %c0_81] : memref<448x128xf32, #tpu.memory_space<vmem>>, vector<8x16xf32>
    %cst_82 = arith.constant dense<0.000000e+00> : vector<64x16xf32>
    %190 = tpu.matmul %188, %189, %cst_82 {dimension_numbers = #tpu.dot_dimension_numbers<[1], [0], [0], [1], [0, 0, 1, 1], [], []>} : vector<64x8xf32>, vector<8x16xf32>, vector<64x16xf32> -> vector<64x16xf32>
    %191 = arith.addf %174, %190 : vector<64x16xf32>
    %c32 = arith.constant 32 : index
    %c0_83 = arith.constant 0 : index
    %192 = vector.load %arg1[%c32, %c0_83] : memref<448x128xf32, #tpu.memory_space<vmem>>, vector<8x16xf32>
    %cst_84 = arith.constant dense<0.000000e+00> : vector<64x16xf32>
    %193 = tpu.matmul %152, %192, %cst_84 {dimension_numbers = #tpu.dot_dimension_numbers<[1], [0], [0], [1], [0, 0, 1, 1], [], []>} : vector<64x8xf32>, vector<8x16xf32>, vector<64x16xf32> -> vector<64x16xf32>
    %194 = arith.addf %191, %193 : vector<64x16xf32>
    %c9_85 = arith.constant 9 : index
    %c0_86 = arith.constant 0 : index
    %195 = vector.load %arg8[%c9_85, %c0_86] : memref<80x8xf32, #tpu.memory_space<vmem>>, vector<64x8xf32>
    %c1_i32_87 = arith.constant 1 : i32
    %196 = vector.broadcast %c1_i32_87 : i32 to vector<64x1xi32>
    %197 = arith.addi %170, %196 : vector<64x1xi32>
    %c0_i32_88 = arith.constant 0 : i32
    %198 = vector.broadcast %c0_i32_88 : i32 to vector<64x1xi32>
    %199 = arith.cmpi sge, %197, %198 : vector<64x1xi32>
    %c1_i32_89 = arith.constant 1 : i32
    %200 = vector.broadcast %c1_i32_89 : i32 to vector<64x1xi32>
    %201 = arith.addi %170, %200 : vector<64x1xi32>
    %c32_i32_90 = arith.constant 32 : i32
    %202 = vector.broadcast %c32_i32_90 : i32 to vector<64x1xi32>
    %203 = arith.cmpi slt, %201, %202 : vector<64x1xi32>
    %204 = arith.andi %199, %203 : vector<64x1xi1>
    %cst_91 = arith.constant 0.000000e+00 : f32
    %205 = vector.shape_cast %204 : vector<64x1xi1> to vector<64x1xi1>
    %206 = vector.broadcast %205 : vector<64x1xi1> to vector<64x8xi1>
    %207 = vector.broadcast %cst_91 : f32 to vector<64x8xf32>
    %208 = arith.select %206, %195, %207 : vector<64x8xi1>, vector<64x8xf32>
    %c40 = arith.constant 40 : index
    %c0_92 = arith.constant 0 : index
    %209 = vector.load %arg1[%c40, %c0_92] : memref<448x128xf32, #tpu.memory_space<vmem>>, vector<8x16xf32>
    %cst_93 = arith.constant dense<0.000000e+00> : vector<64x16xf32>
    %210 = tpu.matmul %208, %209, %cst_93 {dimension_numbers = #tpu.dot_dimension_numbers<[1], [0], [0], [1], [0, 0, 1, 1], [], []>} : vector<64x8xf32>, vector<8x16xf32>, vector<64x16xf32> -> vector<64x16xf32>
    %211 = arith.addf %194, %210 : vector<64x16xf32>
    %cst_94 = arith.constant 0.000000e+00 : f32
    %212 = vector.broadcast %cst_94 : f32 to vector<64x16xf32>
    %213 = arith.maximumf %211, %212 : vector<64x16xf32>
    %c8_95 = arith.constant 8 : index
    %c0_96 = arith.constant 0 : index
    %214 = vector.load %arg9[%c8_95, %c0_96] : memref<80x16xf32, #tpu.memory_space<vmem>>, vector<64x16xf32>
    tpu.vector_store %arg9[%c8_95, %c0_96], %213 {strides = array<i32>} : memref<80x16xf32, #tpu.memory_space<vmem>>, vector<64x16xf32>,
    %c6_97 = arith.constant 6 : index
    %c0_98 = arith.constant 0 : index
    %215 = vector.load %arg2[%c6_97, %c0_98] : memref<16x128xf32, #tpu.memory_space<vmem>>, vector<1x16xf32>
    %c7_99 = arith.constant 7 : index
    %c0_100 = arith.constant 0 : index
    %216 = vector.load %arg2[%c7_99, %c0_100] : memref<16x128xf32, #tpu.memory_space<vmem>>, vector<1x16xf32>
    %217 = tpu.iota {dimensions = array<i32: 0>} : vector<32x1xi32>
    %c16_i32 = arith.constant 16 : i32
    %c0_i32_101 = arith.constant 0 : i32
    %218 = arith.cmpi eq, %c16_i32, %c0_i32_101 : i32
    %c1_i32_102 = arith.constant 1 : i32
    %219 = arith.select %218, %c1_i32_102, %c16_i32 : i32
    %220 = vector.broadcast %219 : i32 to vector<32x1xi32>
    %221 = arith.remsi %217, %220 : vector<32x1xi32>
    %c0_i32_103 = arith.constant 0 : i32
    %222 = vector.broadcast %c0_i32_103 : i32 to vector<32x1xi32>
    %223 = arith.cmpi ne, %221, %222 : vector<32x1xi32>
    %c0_i32_104 = arith.constant 0 : i32
    %224 = vector.broadcast %c0_i32_104 : i32 to vector<32x1xi32>
    %225 = arith.cmpi slt, %221, %224 : vector<32x1xi32>
    %c0_i32_105 = arith.constant 0 : i32
    %226 = arith.cmpi slt, %219, %c0_i32_105 : i32
    %227 = vector.broadcast %226 : i1 to vector<32x1xi1>
    %228 = vector.broadcast %227 : vector<32x1xi1> to vector<32x1xi1>
    %229 = arith.xori %225, %228 : vector<32x1xi1>
    %230 = arith.andi %229, %223 : vector<32x1xi1>
    %231 = vector.broadcast %219 : i32 to vector<32x1xi32>
    %232 = arith.addi %221, %231 : vector<32x1xi32>
    %233 = arith.select %230, %232, %221 : vector<32x1xi1>, vector<32x1xi32>
    %cst_106 = arith.constant 0.000000e+00 : f32
    %234 = vector.broadcast %cst_106 : f32 to vector<32x32xf32>
    %c8_107 = arith.constant 8 : index
    %c0_108 = arith.constant 0 : index
    %235 = vector.load %arg2[%c8_107, %c0_108] : memref<16x128xf32, #tpu.memory_space<vmem>>, vector<1x32xf32>
    %236 = vector.broadcast %235 : vector<1x32xf32> to vector<32x32xf32>
    %237 = arith.addf %234, %236 : vector<32x32xf32>
    %c6_109 = arith.constant 6 : index
    %c0_110 = arith.constant 0 : index
    %238 = tpu.strided_load %arg9[%c6_109, %c0_110] {strides = array<i32: 2, 1>} : memref<80x16xf32, #tpu.memory_space<vmem>>, vector<32x16xf32>
    %c7_111 = arith.constant 7 : index
    %c0_112 = arith.constant 0 : index
    %239 = tpu.strided_load %arg9[%c7_111, %c0_112] {strides = array<i32: 2, 1>} : memref<80x16xf32, #tpu.memory_space<vmem>>, vector<32x16xf32>
    %240 = arith.maximumf %238, %239 : vector<32x16xf32>
    %241 = vector.broadcast %215 : vector<1x16xf32> to vector<32x16xf32>
    %242 = arith.mulf %240, %241 : vector<32x16xf32>
    %243 = vector.broadcast %216 : vector<1x16xf32> to vector<32x16xf32>
    %244 = arith.addf %242, %243 : vector<32x16xf32>
    %c-1_i32_113 = arith.constant -1 : i32
    %245 = vector.broadcast %c-1_i32_113 : i32 to vector<32x1xi32>
    %246 = arith.addi %233, %245 : vector<32x1xi32>
    %c0_i32_114 = arith.constant 0 : i32
    %247 = vector.broadcast %c0_i32_114 : i32 to vector<32x1xi32>
    %248 = arith.cmpi sge, %246, %247 : vector<32x1xi32>
    %c-1_i32_115 = arith.constant -1 : i32
    %249 = vector.broadcast %c-1_i32_115 : i32 to vector<32x1xi32>
    %250 = arith.addi %233, %249 : vector<32x1xi32>
    %c16_i32_116 = arith.constant 16 : i32
    %251 = vector.broadcast %c16_i32_116 : i32 to vector<32x1xi32>
    %252 = arith.cmpi slt, %250, %251 : vector<32x1xi32>
    %253 = arith.andi %248, %252 : vector<32x1xi1>
    %cst_117 = arith.constant 0.000000e+00 : f32
    %254 = vector.shape_cast %253 : vector<32x1xi1> to vector<32x1xi1>
    %255 = vector.broadcast %254 : vector<32x1xi1> to vector<32x16xi1>
    %256 = vector.broadcast %cst_117 : f32 to vector<32x16xf32>
    %257 = arith.select %255, %244, %256 : vector<32x16xi1>, vector<32x16xf32>
    %c48 = arith.constant 48 : index
    %c0_118 = arith.constant 0 : index
    %258 = vector.load %arg1[%c48, %c0_118] : memref<448x128xf32, #tpu.memory_space<vmem>>, vector<16x32xf32>
    %cst_119 = arith.constant dense<0.000000e+00> : vector<32x32xf32>
    %259 = tpu.matmul %257, %258, %cst_119 {dimension_numbers = #tpu.dot_dimension_numbers<[1], [0], [0], [1], [0, 0, 1, 1], [], []>} : vector<32x16xf32>, vector<16x32xf32>, vector<32x32xf32> -> vector<32x32xf32>
    %260 = arith.addf %237, %259 : vector<32x32xf32>
    %c8_120 = arith.constant 8 : index
    %c0_121 = arith.constant 0 : index
    %261 = tpu.strided_load %arg9[%c8_120, %c0_121] {strides = array<i32: 2, 1>} : memref<80x16xf32, #tpu.memory_space<vmem>>, vector<32x16xf32>
    %c9_122 = arith.constant 9 : index
    %c0_123 = arith.constant 0 : index
    %262 = tpu.strided_load %arg9[%c9_122, %c0_123] {strides = array<i32: 2, 1>} : memref<80x16xf32, #tpu.memory_space<vmem>>, vector<32x16xf32>
    %263 = arith.maximumf %261, %262 : vector<32x16xf32>
    %264 = vector.broadcast %215 : vector<1x16xf32> to vector<32x16xf32>
    %265 = arith.mulf %263, %264 : vector<32x16xf32>
    %266 = vector.broadcast %216 : vector<1x16xf32> to vector<32x16xf32>
    %267 = arith.addf %265, %266 : vector<32x16xf32>
    %c64 = arith.constant 64 : index
    %c0_124 = arith.constant 0 : index
    %268 = vector.load %arg1[%c64, %c0_124] : memref<448x128xf32, #tpu.memory_space<vmem>>, vector<16x32xf32>
    %cst_125 = arith.constant dense<0.000000e+00> : vector<32x32xf32>
    %269 = tpu.matmul %267, %268, %cst_125 {dimension_numbers = #tpu.dot_dimension_numbers<[1], [0], [0], [1], [0, 0, 1, 1], [], []>} : vector<32x16xf32>, vector<16x32xf32>, vector<32x32xf32> -> vector<32x32xf32>
    %270 = arith.addf %260, %269 : vector<32x32xf32>
    %c10_126 = arith.constant 10 : index
    %c0_127 = arith.constant 0 : index
    %271 = tpu.strided_load %arg9[%c10_126, %c0_127] {strides = array<i32: 2, 1>} : memref<80x16xf32, #tpu.memory_space<vmem>>, vector<32x16xf32>
    %c11_128 = arith.constant 11 : index
    %c0_129 = arith.constant 0 : index
    %272 = tpu.strided_load %arg9[%c11_128, %c0_129] {strides = array<i32: 2, 1>} : memref<80x16xf32, #tpu.memory_space<vmem>>, vector<32x16xf32>
    %273 = arith.maximumf %271, %272 : vector<32x16xf32>
    %274 = vector.broadcast %215 : vector<1x16xf32> to vector<32x16xf32>
    %275 = arith.mulf %273, %274 : vector<32x16xf32>
    %276 = vector.broadcast %216 : vector<1x16xf32> to vector<32x16xf32>
    %277 = arith.addf %275, %276 : vector<32x16xf32>
    %c1_i32_130 = arith.constant 1 : i32
    %278 = vector.broadcast %c1_i32_130 : i32 to vector<32x1xi32>
    %279 = arith.addi %233, %278 : vector<32x1xi32>
    %c0_i32_131 = arith.constant 0 : i32
    %280 = vector.broadcast %c0_i32_131 : i32 to vector<32x1xi32>
    %281 = arith.cmpi sge, %279, %280 : vector<32x1xi32>
    %c1_i32_132 = arith.constant 1 : i32
    %282 = vector.broadcast %c1_i32_132 : i32 to vector<32x1xi32>
    %283 = arith.addi %233, %282 : vector<32x1xi32>
    %c16_i32_133 = arith.constant 16 : i32
    %284 = vector.broadcast %c16_i32_133 : i32 to vector<32x1xi32>
    %285 = arith.cmpi slt, %283, %284 : vector<32x1xi32>
    %286 = arith.andi %281, %285 : vector<32x1xi1>
    %cst_134 = arith.constant 0.000000e+00 : f32
    %287 = vector.shape_cast %286 : vector<32x1xi1> to vector<32x1xi1>
    %288 = vector.broadcast %287 : vector<32x1xi1> to vector<32x16xi1>
    %289 = vector.broadcast %cst_134 : f32 to vector<32x16xf32>
    %290 = arith.select %288, %277, %289 : vector<32x16xi1>, vector<32x16xf32>
    %c80 = arith.constant 80 : index
    %c0_135 = arith.constant 0 : index
    %291 = vector.load %arg1[%c80, %c0_135] : memref<448x128xf32, #tpu.memory_space<vmem>>, vector<16x32xf32>
    %cst_136 = arith.constant dense<0.000000e+00> : vector<32x32xf32>
    %292 = tpu.matmul %290, %291, %cst_136 {dimension_numbers = #tpu.dot_dimension_numbers<[1], [0], [0], [1], [0, 0, 1, 1], [], []>} : vector<32x16xf32>, vector<16x32xf32>, vector<32x32xf32> -> vector<32x32xf32>
    %293 = arith.addf %270, %292 : vector<32x32xf32>
    %cst_137 = arith.constant 0.000000e+00 : f32
    %294 = vector.broadcast %cst_137 : f32 to vector<32x32xf32>
    %295 = arith.maximumf %293, %294 : vector<32x32xf32>
    %c8_138 = arith.constant 8 : index
    %c0_139 = arith.constant 0 : index
    %296 = vector.load %arg10[%c8_138, %c0_139] : memref<48x32xf32, #tpu.memory_space<vmem>>, vector<32x32xf32>
    tpu.vector_store %arg10[%c8_138, %c0_139], %295 {strides = array<i32>} : memref<48x32xf32, #tpu.memory_space<vmem>>, vector<32x32xf32>,
    %297 = tpu.iota {dimensions = array<i32: 0>} : vector<32x1xi32>
    %c16_i32_140 = arith.constant 16 : i32
    %c0_i32_141 = arith.constant 0 : i32
    %298 = arith.cmpi eq, %c16_i32_140, %c0_i32_141 : i32
    %c1_i32_142 = arith.constant 1 : i32
    %299 = arith.select %298, %c1_i32_142, %c16_i32_140 : i32
    %300 = vector.broadcast %299 : i32 to vector<32x1xi32>
    %301 = arith.remsi %297, %300 : vector<32x1xi32>
    %c0_i32_143 = arith.constant 0 : i32
    %302 = vector.broadcast %c0_i32_143 : i32 to vector<32x1xi32>
    %303 = arith.cmpi ne, %301, %302 : vector<32x1xi32>
    %c0_i32_144 = arith.constant 0 : i32
    %304 = vector.broadcast %c0_i32_144 : i32 to vector<32x1xi32>
    %305 = arith.cmpi slt, %301, %304 : vector<32x1xi32>
    %c0_i32_145 = arith.constant 0 : i32
    %306 = arith.cmpi slt, %299, %c0_i32_145 : i32
    %307 = vector.broadcast %306 : i1 to vector<32x1xi1>
    %308 = vector.broadcast %307 : vector<32x1xi1> to vector<32x1xi1>
    %309 = arith.xori %305, %308 : vector<32x1xi1>
    %310 = arith.andi %309, %303 : vector<32x1xi1>
    %311 = vector.broadcast %299 : i32 to vector<32x1xi32>
    %312 = arith.addi %301, %311 : vector<32x1xi32>
    %313 = arith.select %310, %312, %301 : vector<32x1xi1>, vector<32x1xi32>
    %cst_146 = arith.constant 0.000000e+00 : f32
    %314 = vector.broadcast %cst_146 : f32 to vector<32x64xf32>
    %c9_147 = arith.constant 9 : index
    %c0_148 = arith.constant 0 : index
    %315 = vector.load %arg2[%c9_147, %c0_148] : memref<16x128xf32, #tpu.memory_space<vmem>>, vector<1x64xf32>
    %316 = vector.broadcast %315 : vector<1x64xf32> to vector<32x64xf32>
    %317 = arith.addf %314, %316 : vector<32x64xf32>
    %c7_149 = arith.constant 7 : index
    %c0_150 = arith.constant 0 : index
    %318 = vector.load %arg10[%c7_149, %c0_150] : memref<48x32xf32, #tpu.memory_space<vmem>>, vector<32x32xf32>
    %c-1_i32_151 = arith.constant -1 : i32
    %319 = vector.broadcast %c-1_i32_151 : i32 to vector<32x1xi32>
    %320 = arith.addi %313, %319 : vector<32x1xi32>
    %c0_i32_152 = arith.constant 0 : i32
    %321 = vector.broadcast %c0_i32_152 : i32 to vector<32x1xi32>
    %322 = arith.cmpi sge, %320, %321 : vector<32x1xi32>
    %c-1_i32_153 = arith.constant -1 : i32
    %323 = vector.broadcast %c-1_i32_153 : i32 to vector<32x1xi32>
    %324 = arith.addi %313, %323 : vector<32x1xi32>
    %c16_i32_154 = arith.constant 16 : i32
    %325 = vector.broadcast %c16_i32_154 : i32 to vector<32x1xi32>
    %326 = arith.cmpi slt, %324, %325 : vector<32x1xi32>
    %327 = arith.andi %322, %326 : vector<32x1xi1>
    %cst_155 = arith.constant 0.000000e+00 : f32
    %328 = vector.shape_cast %327 : vector<32x1xi1> to vector<32x1xi1>
    %329 = vector.broadcast %328 : vector<32x1xi1> to vector<32x32xi1>
    %330 = vector.broadcast %cst_155 : f32 to vector<32x32xf32>
    %331 = arith.select %329, %318, %330 : vector<32x32xi1>, vector<32x32xf32>
    %c96 = arith.constant 96 : index
    %c0_156 = arith.constant 0 : index
    %332 = vector.load %arg1[%c96, %c0_156] : memref<448x128xf32, #tpu.memory_space<vmem>>, vector<32x64xf32>
    %cst_157 = arith.constant dense<0.000000e+00> : vector<32x64xf32>
    %333 = tpu.matmul %331, %332, %cst_157 {dimension_numbers = #tpu.dot_dimension_numbers<[1], [0], [0], [1], [0, 0, 1, 1], [], []>} : vector<32x32xf32>, vector<32x64xf32>, vector<32x64xf32> -> vector<32x64xf32>
    %334 = arith.addf %317, %333 : vector<32x64xf32>
    %c128 = arith.constant 128 : index
    %c0_158 = arith.constant 0 : index
    %335 = vector.load %arg1[%c128, %c0_158] : memref<448x128xf32, #tpu.memory_space<vmem>>, vector<32x64xf32>
    %cst_159 = arith.constant dense<0.000000e+00> : vector<32x64xf32>
    %336 = tpu.matmul %295, %335, %cst_159 {dimension_numbers = #tpu.dot_dimension_numbers<[1], [0], [0], [1], [0, 0, 1, 1], [], []>} : vector<32x32xf32>, vector<32x64xf32>, vector<32x64xf32> -> vector<32x64xf32>
    %337 = arith.addf %334, %336 : vector<32x64xf32>
    %c9_160 = arith.constant 9 : index
    %c0_161 = arith.constant 0 : index
    %338 = vector.load %arg10[%c9_160, %c0_161] : memref<48x32xf32, #tpu.memory_space<vmem>>, vector<32x32xf32>
    %c1_i32_162 = arith.constant 1 : i32
    %339 = vector.broadcast %c1_i32_162 : i32 to vector<32x1xi32>
    %340 = arith.addi %313, %339 : vector<32x1xi32>
    %c0_i32_163 = arith.constant 0 : i32
    %341 = vector.broadcast %c0_i32_163 : i32 to vector<32x1xi32>
    %342 = arith.cmpi sge, %340, %341 : vector<32x1xi32>
    %c1_i32_164 = arith.constant 1 : i32
    %343 = vector.broadcast %c1_i32_164 : i32 to vector<32x1xi32>
    %344 = arith.addi %313, %343 : vector<32x1xi32>
    %c16_i32_165 = arith.constant 16 : i32
    %345 = vector.broadcast %c16_i32_165 : i32 to vector<32x1xi32>
    %346 = arith.cmpi slt, %344, %345 : vector<32x1xi32>
    %347 = arith.andi %342, %346 : vector<32x1xi1>
    %cst_166 = arith.constant 0.000000e+00 : f32
    %348 = vector.shape_cast %347 : vector<32x1xi1> to vector<32x1xi1>
    %349 = vector.broadcast %348 : vector<32x1xi1> to vector<32x32xi1>
    %350 = vector.broadcast %cst_166 : f32 to vector<32x32xf32>
    %351 = arith.select %349, %338, %350 : vector<32x32xi1>, vector<32x32xf32>
    %c160 = arith.constant 160 : index
    %c0_167 = arith.constant 0 : index
    %352 = vector.load %arg1[%c160, %c0_167] : memref<448x128xf32, #tpu.memory_space<vmem>>, vector<32x64xf32>
    %cst_168 = arith.constant dense<0.000000e+00> : vector<32x64xf32>
    %353 = tpu.matmul %351, %352, %cst_168 {dimension_numbers = #tpu.dot_dimension_numbers<[1], [0], [0], [1], [0, 0, 1, 1], [], []>} : vector<32x32xf32>, vector<32x64xf32>, vector<32x64xf32> -> vector<32x64xf32>
    %354 = arith.addf %337, %353 : vector<32x64xf32>
    %cst_169 = arith.constant 0.000000e+00 : f32
    %355 = vector.broadcast %cst_169 : f32 to vector<32x64xf32>
    %356 = arith.maximumf %354, %355 : vector<32x64xf32>
    %c0_170 = arith.constant 0 : index
    %c0_171 = arith.constant 0 : index
    %357 = vector.load %arg11[%c0_170, %c0_171] : memref<32x64xf32, #tpu.memory_space<vmem>>, vector<32x64xf32>
    tpu.vector_store %arg11[%c0_170, %c0_171], %356 {strides = array<i32>} : memref<32x64xf32, #tpu.memory_space<vmem>>, vector<32x64xf32>,
    %c10_172 = arith.constant 10 : index
    %c0_173 = arith.constant 0 : index
    %358 = vector.load %arg2[%c10_172, %c0_173] : memref<16x128xf32, #tpu.memory_space<vmem>>, vector<1x64xf32>
    %c11_174 = arith.constant 11 : index
    %c0_175 = arith.constant 0 : index
    %359 = vector.load %arg2[%c11_174, %c0_175] : memref<16x128xf32, #tpu.memory_space<vmem>>, vector<1x64xf32>
    %c0_176 = arith.constant 0 : index
    %c0_177 = arith.constant 0 : index
    %360 = tpu.strided_load %arg11[%c0_176, %c0_177] {strides = array<i32: 16, 1>} : memref<32x64xf32, #tpu.memory_space<vmem>>, vector<2x64xf32>
    %c1_178 = arith.constant 1 : index
    %c0_179 = arith.constant 0 : index
    %361 = tpu.strided_load %arg11[%c1_178, %c0_179] {strides = array<i32: 16, 1>} : memref<32x64xf32, #tpu.memory_space<vmem>>, vector<2x64xf32>
    %362 = arith.maximumf %360, %361 : vector<2x64xf32>
    %363 = vector.broadcast %358 : vector<1x64xf32> to vector<2x64xf32>
    %364 = arith.mulf %362, %363 : vector<2x64xf32>
    %365 = vector.broadcast %359 : vector<1x64xf32> to vector<2x64xf32>
    %366 = arith.addf %364, %365 : vector<2x64xf32>
    %c0_180 = arith.constant 0 : index
    %c0_181 = arith.constant 0 : index
    %367 = vector.load %arg12[%c0_180, %c0_181] : memref<2x512xf32, #tpu.memory_space<vmem>>, vector<2x64xf32>
    tpu.vector_store %arg12[%c0_180, %c0_181], %366 {strides = array<i32>} : memref<2x512xf32, #tpu.memory_space<vmem>>, vector<2x64xf32>,
    %c2_182 = arith.constant 2 : index
    %c0_183 = arith.constant 0 : index
    %368 = tpu.strided_load %arg11[%c2_182, %c0_183] {strides = array<i32: 16, 1>} : memref<32x64xf32, #tpu.memory_space<vmem>>, vector<2x64xf32>
    %c3_184 = arith.constant 3 : index
    %c0_185 = arith.constant 0 : index
    %369 = tpu.strided_load %arg11[%c3_184, %c0_185] {strides = array<i32: 16, 1>} : memref<32x64xf32, #tpu.memory_space<vmem>>, vector<2x64xf32>
    %370 = arith.maximumf %368, %369 : vector<2x64xf32>
    %371 = vector.broadcast %358 : vector<1x64xf32> to vector<2x64xf32>
    %372 = arith.mulf %370, %371 : vector<2x64xf32>
    %373 = vector.broadcast %359 : vector<1x64xf32> to vector<2x64xf32>
    %374 = arith.addf %372, %373 : vector<2x64xf32>
    %c0_186 = arith.constant 0 : index
    %c64_187 = arith.constant 64 : index
    %375 = vector.load %arg12[%c0_186, %c64_187] : memref<2x512xf32, #tpu.memory_space<vmem>>, vector<2x64xf32>
    tpu.vector_store %arg12[%c0_186, %c64_187], %374 {strides = array<i32>} : memref<2x512xf32, #tpu.memory_space<vmem>>, vector<2x64xf32>,
    %c4_188 = arith.constant 4 : index
    %c0_189 = arith.constant 0 : index
    %376 = tpu.strided_load %arg11[%c4_188, %c0_189] {strides = array<i32: 16, 1>} : memref<32x64xf32, #tpu.memory_space<vmem>>, vector<2x64xf32>
    %c5_190 = arith.constant 5 : index
    %c0_191 = arith.constant 0 : index
    %377 = tpu.strided_load %arg11[%c5_190, %c0_191] {strides = array<i32: 16, 1>} : memref<32x64xf32, #tpu.memory_space<vmem>>, vector<2x64xf32>
    %378 = arith.maximumf %376, %377 : vector<2x64xf32>
    %379 = vector.broadcast %358 : vector<1x64xf32> to vector<2x64xf32>
    %380 = arith.mulf %378, %379 : vector<2x64xf32>
    %381 = vector.broadcast %359 : vector<1x64xf32> to vector<2x64xf32>
    %382 = arith.addf %380, %381 : vector<2x64xf32>
    %c0_192 = arith.constant 0 : index
    %c128_193 = arith.constant 128 : index
    %383 = vector.load %arg12[%c0_192, %c128_193] : memref<2x512xf32, #tpu.memory_space<vmem>>, vector<2x64xf32>
    tpu.vector_store %arg12[%c0_192, %c128_193], %382 {strides = array<i32>} : memref<2x512xf32, #tpu.memory_space<vmem>>, vector<2x64xf32>,
    %c6_194 = arith.constant 6 : index
    %c0_195 = arith.constant 0 : index
    %384 = tpu.strided_load %arg11[%c6_194, %c0_195] {strides = array<i32: 16, 1>} : memref<32x64xf32, #tpu.memory_space<vmem>>, vector<2x64xf32>
    %c7_196 = arith.constant 7 : index
    %c0_197 = arith.constant 0 : index
    %385 = tpu.strided_load %arg11[%c7_196, %c0_197] {strides = array<i32: 16, 1>} : memref<32x64xf32, #tpu.memory_space<vmem>>, vector<2x64xf32>
    %386 = arith.maximumf %384, %385 : vector<2x64xf32>
    %387 = vector.broadcast %358 : vector<1x64xf32> to vector<2x64xf32>
    %388 = arith.mulf %386, %387 : vector<2x64xf32>
    %389 = vector.broadcast %359 : vector<1x64xf32> to vector<2x64xf32>
    %390 = arith.addf %388, %389 : vector<2x64xf32>
    %c0_198 = arith.constant 0 : index
    %c192 = arith.constant 192 : index
    %391 = vector.load %arg12[%c0_198, %c192] : memref<2x512xf32, #tpu.memory_space<vmem>>, vector<2x64xf32>
    tpu.vector_store %arg12[%c0_198, %c192], %390 {strides = array<i32>} : memref<2x512xf32, #tpu.memory_space<vmem>>, vector<2x64xf32>,
    %c8_199 = arith.constant 8 : index
    %c0_200 = arith.constant 0 : index
    %392 = tpu.strided_load %arg11[%c8_199, %c0_200] {strides = array<i32: 16, 1>} : memref<32x64xf32, #tpu.memory_space<vmem>>, vector<2x64xf32>
    %c9_201 = arith.constant 9 : index
    %c0_202 = arith.constant 0 : index
    %393 = tpu.strided_load %arg11[%c9_201, %c0_202] {strides = array<i32: 16, 1>} : memref<32x64xf32, #tpu.memory_space<vmem>>, vector<2x64xf32>
    %394 = arith.maximumf %392, %393 : vector<2x64xf32>
    %395 = vector.broadcast %358 : vector<1x64xf32> to vector<2x64xf32>
    %396 = arith.mulf %394, %395 : vector<2x64xf32>
    %397 = vector.broadcast %359 : vector<1x64xf32> to vector<2x64xf32>
    %398 = arith.addf %396, %397 : vector<2x64xf32>
    %c0_203 = arith.constant 0 : index
    %c256 = arith.constant 256 : index
    %399 = vector.load %arg12[%c0_203, %c256] : memref<2x512xf32, #tpu.memory_space<vmem>>, vector<2x64xf32>
    tpu.vector_store %arg12[%c0_203, %c256], %398 {strides = array<i32>} : memref<2x512xf32, #tpu.memory_space<vmem>>, vector<2x64xf32>,
    %c10_204 = arith.constant 10 : index
    %c0_205 = arith.constant 0 : index
    %400 = tpu.strided_load %arg11[%c10_204, %c0_205] {strides = array<i32: 16, 1>} : memref<32x64xf32, #tpu.memory_space<vmem>>, vector<2x64xf32>
    %c11_206 = arith.constant 11 : index
    %c0_207 = arith.constant 0 : index
    %401 = tpu.strided_load %arg11[%c11_206, %c0_207] {strides = array<i32: 16, 1>} : memref<32x64xf32, #tpu.memory_space<vmem>>, vector<2x64xf32>
    %402 = arith.maximumf %400, %401 : vector<2x64xf32>
    %403 = vector.broadcast %358 : vector<1x64xf32> to vector<2x64xf32>
    %404 = arith.mulf %402, %403 : vector<2x64xf32>
    %405 = vector.broadcast %359 : vector<1x64xf32> to vector<2x64xf32>
    %406 = arith.addf %404, %405 : vector<2x64xf32>
    %c0_208 = arith.constant 0 : index
    %c320 = arith.constant 320 : index
    %407 = vector.load %arg12[%c0_208, %c320] : memref<2x512xf32, #tpu.memory_space<vmem>>, vector<2x64xf32>
    tpu.vector_store %arg12[%c0_208, %c320], %406 {strides = array<i32>} : memref<2x512xf32, #tpu.memory_space<vmem>>, vector<2x64xf32>,
    %c12_209 = arith.constant 12 : index
    %c0_210 = arith.constant 0 : index
    %408 = tpu.strided_load %arg11[%c12_209, %c0_210] {strides = array<i32: 16, 1>} : memref<32x64xf32, #tpu.memory_space<vmem>>, vector<2x64xf32>
    %c13 = arith.constant 13 : index
    %c0_211 = arith.constant 0 : index
    %409 = tpu.strided_load %arg11[%c13, %c0_211] {strides = array<i32: 16, 1>} : memref<32x64xf32, #tpu.memory_space<vmem>>, vector<2x64xf32>
    %410 = arith.maximumf %408, %409 : vector<2x64xf32>
    %411 = vector.broadcast %358 : vector<1x64xf32> to vector<2x64xf32>
    %412 = arith.mulf %410, %411 : vector<2x64xf32>
    %413 = vector.broadcast %359 : vector<1x64xf32> to vector<2x64xf32>
    %414 = arith.addf %412, %413 : vector<2x64xf32>
    %c0_212 = arith.constant 0 : index
    %c384 = arith.constant 384 : index
    %415 = vector.load %arg12[%c0_212, %c384] : memref<2x512xf32, #tpu.memory_space<vmem>>, vector<2x64xf32>
    tpu.vector_store %arg12[%c0_212, %c384], %414 {strides = array<i32>} : memref<2x512xf32, #tpu.memory_space<vmem>>, vector<2x64xf32>,
    %c14 = arith.constant 14 : index
    %c0_213 = arith.constant 0 : index
    %416 = tpu.strided_load %arg11[%c14, %c0_213] {strides = array<i32: 16, 1>} : memref<32x64xf32, #tpu.memory_space<vmem>>, vector<2x64xf32>
    %c15 = arith.constant 15 : index
    %c0_214 = arith.constant 0 : index
    %417 = tpu.strided_load %arg11[%c15, %c0_214] {strides = array<i32: 16, 1>} : memref<32x64xf32, #tpu.memory_space<vmem>>, vector<2x64xf32>
    %418 = arith.maximumf %416, %417 : vector<2x64xf32>
    %419 = vector.broadcast %358 : vector<1x64xf32> to vector<2x64xf32>
    %420 = arith.mulf %418, %419 : vector<2x64xf32>
    %421 = vector.broadcast %359 : vector<1x64xf32> to vector<2x64xf32>
    %422 = arith.addf %420, %421 : vector<2x64xf32>
    %c0_215 = arith.constant 0 : index
    %c448 = arith.constant 448 : index
    %423 = vector.load %arg12[%c0_215, %c448] : memref<2x512xf32, #tpu.memory_space<vmem>>, vector<2x64xf32>
    tpu.vector_store %arg12[%c0_215, %c448], %422 {strides = array<i32>} : memref<2x512xf32, #tpu.memory_space<vmem>>, vector<2x64xf32>,
    tpu.wait_dma2 semaphore(%arg14 : memref<!tpu.dma_semaphore, #tpu.memory_space<semaphore_mem>>) src(%arg4 : memref<512x256xbf16, #tpu.memory_space<any>>) dst(%arg13 : memref<512x256xbf16, #tpu.memory_space<vmem>>)
    %c0_216 = arith.constant 0 : index
    %c0_217 = arith.constant 0 : index
    %424 = vector.load %arg12[%c0_216, %c0_217] : memref<2x512xf32, #tpu.memory_space<vmem>>, vector<2x512xf32>
    %425 = arith.truncf %424 : vector<2x512xf32> to vector<2x512xbf16>
    %c0_218 = arith.constant 0 : index
    %c0_219 = arith.constant 0 : index
    %426 = vector.load %arg13[%c0_218, %c0_219] : memref<512x256xbf16, #tpu.memory_space<vmem>>, vector<512x256xbf16>
    %cst_220 = arith.constant dense<0.000000e+00> : vector<2x256xf32>
    %427 = tpu.matmul %425, %426, %cst_220 {dimension_numbers = #tpu.dot_dimension_numbers<[1], [0], [0], [1], [0, 0, 1, 1], [], []>} : vector<2x512xbf16>, vector<512x256xbf16>, vector<2x256xf32> -> vector<2x256xf32>
    %c0_221 = arith.constant 0 : index
    %c0_222 = arith.constant 0 : index
    %428 = vector.load %arg3[%c0_221, %c0_222] : memref<1x256xf32, #tpu.memory_space<vmem>>, vector<1x256xf32>
    %429 = vector.broadcast %428 : vector<1x256xf32> to vector<2x256xf32>
    %430 = arith.addf %427, %429 : vector<2x256xf32>
    %cst_223 = arith.constant 0.000000e+00 : f32
    %431 = vector.broadcast %cst_223 : f32 to vector<2x256xf32>
    %432 = arith.maximumf %430, %431 : vector<2x256xf32>
    %c192_224 = arith.constant 192 : index
    %c0_225 = arith.constant 0 : index
    %433 = vector.load %arg1[%c192_224, %c0_225] : memref<448x128xf32, #tpu.memory_space<vmem>>, vector<256x128xf32>
    %cst_226 = arith.constant dense<0.000000e+00> : vector<2x128xf32>
    %434 = tpu.matmul %432, %433, %cst_226 {dimension_numbers = #tpu.dot_dimension_numbers<[1], [0], [0], [1], [0, 0, 1, 1], [], []>} : vector<2x256xf32>, vector<256x128xf32>, vector<2x128xf32> -> vector<2x128xf32>
    %c12_227 = arith.constant 12 : index
    %c0_228 = arith.constant 0 : index
    %435 = vector.load %arg2[%c12_227, %c0_228] : memref<16x128xf32, #tpu.memory_space<vmem>>, vector<1x128xf32>
    %436 = vector.broadcast %435 : vector<1x128xf32> to vector<2x128xf32>
    %437 = arith.addf %434, %436 : vector<2x128xf32>
    %c0_229 = arith.constant 0 : index
    %c0_230 = arith.constant 0 : index
    %438 = vector.load %arg5[%c0_229, %c0_230] : memref<2x128xf32, #tpu.memory_space<vmem>>, vector<2x128xf32>
    tpu.vector_store %arg5[%c0_229, %c0_230], %437 {strides = array<i32>} : memref<2x128xf32, #tpu.memory_space<vmem>>, vector<2x128xf32>,
    return
  }
}

</mosaic_0001>

<llo_original>
// kernel: tpu_custom_call.1
$region0: #{tpu_custom_call.1}
  #allocation0 [shape = 'u32[]', space=smem, size = 0x4, offset = 0x4, fixed_abs, tag = 'smem constant byte address 0x4 - core index']
  #allocation1 [shape = 'u32[144,128]{1,0:T(1,128)}', space=vmem, size = 0x12000, scoped, tag = 'internal scratch']
  #allocation2 [shape = 'f32[144,1]{1,0:T(8,128)}', space=vmem, size = 0x12000, scoped, tag = 'scratch operand']
  #allocation3 [shape = 'f32[144,4]{1,0:T(8,128)}', space=vmem, size = 0x12000, scoped, tag = 'scratch operand']
  #allocation4 [shape = 'f32[80,8]{1,0:T(8,128)}', space=vmem, size = 0xa000, scoped, tag = 'scratch operand']
  #allocation5 [shape = 'f32[80,16]{1,0:T(8,128)}', space=vmem, size = 0xa000, scoped, tag = 'scratch operand']
  #allocation6 [shape = 'f32[48,32]{1,0:T(8,128)}', space=vmem, size = 0x6000, scoped, tag = 'scratch operand']
  #allocation7 [shape = 'f32[32,64]{1,0:T(8,128)}', space=vmem, size = 0x4000, scoped, tag = 'scratch operand']
  #allocation8 [shape = 'f32[2,512]{1,0:T(2,128)}', space=vmem, size = 0x1000, scoped, tag = 'scratch operand']
  #allocation9 [shape = 'bf16[512,256]{1,0:T(8,128)(2,1)}', space=vmem, size = 0x40000, scoped, tag = 'scratch operand']
  #allocation10 [shape = 's32[1]{0}', space=sflag, size = 0x4, scoped, tag = 'scratch operand']
  #allocation15 [shape = 's32[]', space=sflag, size = 0x4, offset = 0, fixed_abs, tag = 'sflag constant byte address 0x0 - dummy sync flag']
  #allocation16 [shape = 's32[]', space=sflag, size = 0x4, offset = 0, fixed_abs, tag = 'sflag constant byte address 0x0 - dummy sync flag']
  #allocation17 [shape = 'u32[]', space=smem, size = 0x4, offset = 0x44, fixed_abs, tag = 'smem constant byte address 0x44 - assertion arg 0']
  #allocation18 [shape = 'u32[]', space=smem, size = 0x4, offset = 0x48, fixed_abs, tag = 'smem constant byte address 0x48 - assertion arg 1']
  %s0 = inlined_call_operand.vmem [shape: f32[128,1], index: 0, kind: input, shape index: {}]
  %s1 = inlined_call_operand.hbm [shape: f32[448,128], index: 1, kind: input, shape index: {}]
  %s2 = inlined_call_operand.vmem [shape: f32[16,128], index: 2, kind: input, shape index: {}]
  %s3 = inlined_call_operand.vmem [shape: f32[1,256], index: 3, kind: input, shape index: {}]
  %s4 = inlined_call_operand.hbm [shape: bf16[512,256], index: 4, kind: input, shape index: {}]
  %s5 = inlined_call_operand.hbm [shape: f32[2,128], index: 5, kind: output, shape index: {}]
  %s6 = sld [smem:[#allocation0]]
  $region34: #{tpu_custom_call.1} parent=0
    _
  %s8 = ssub.s32 1, %s6
  %s9 = scalar_select 0, %s8, %s6
  $region1: #{tpu_custom_call.1} parent=0
    #allocation11 [shape = 'u8[229376]{0}', space=vmem, size = 0x38000, scoped, tag = 'input window, operand 1, single buffered']
    #allocation12 [shape = 's32[1]{0}', space=sflag, size = 0x4, scoped, tag = 'scoped memory for tpu_custom_call.1']
    #allocation13 [shape = 's32[1]{0}', space=sflag, size = 0x4, scoped, tag = 'scoped memory for tpu_custom_call.1']
    #allocation14 [shape = 'u8[1024]{0}', space=vmem, size = 0x400, scoped, tag = 'output window, operand 0, single buffered']
    %10 = vsyncpa [#allocation12], 0
    %11 = vsyncpa [#allocation13], 0
    // Predicated region
    $region2: #{tpu_custom_call.1} parent=1 // pred_check
      _
    $region3: #{tpu_custom_call.1} parent=1 // pred_check_branch
      %13 = sbr.rel (0) target = $region5
    $region4: #{tpu_custom_call.1} parent=1 // pred_region
      _
    $region5: #{tpu_custom_call.1} parent=1 // pred_fallthru
      _
    // Predicated region
    $region6: #{tpu_custom_call.1} parent=1 // pred_check
      _
    $region7: #{tpu_custom_call.1} parent=1 // pred_check_branch
      %15 = sbr.rel (0) target = $region9
    $region8: #{tpu_custom_call.1} parent=1 // pred_region
      %s17 = ssub.s32 7168, 7168
      %18 = vsyncadd [#allocation12], %s17
      %s19 = sshll.u32 [#allocation11], 4
      %s20 = int_to_ptr.vmem [resolvable:$true] %s19
      %25 = dma.hbm_to_vmem [thread:$0]  %s1, 7168, %s20, [#allocation12], 128, 128, 8
    $region9: #{tpu_custom_call.1} parent=1 // pred_fallthru
      _
    // Predicated region
    $region10: #{tpu_custom_call.1} parent=1 // pred_check
      _
    $region11: #{tpu_custom_call.1} parent=1 // pred_check_branch
      %27 = sbr.rel (0) target = $region13
    $region12: #{tpu_custom_call.1} parent=1 // pred_region
      _
    $region13: #{tpu_custom_call.1} parent=1 // pred_fallthru
      _
    // Predicated region
    $region14: #{tpu_custom_call.1} parent=1 // pred_check
      _
    $region15: #{tpu_custom_call.1} parent=1 // pred_check_branch
      %29 = sbr.rel (0) target = $region17
    $region16: #{tpu_custom_call.1} parent=1 // pred_region
      _
    $region17: #{tpu_custom_call.1} parent=1 // pred_fallthru
      _
    // Predicated region
    $region18: #{tpu_custom_call.1} parent=1 // pred_check
      _
    $region19: #{tpu_custom_call.1} parent=1 // pred_check_branch
      %31 = sbr.rel (0) target = $region21
    $region20: #{tpu_custom_call.1} parent=1 // pred_region
      %32 = dma.done [#allocation12], 7168
    $region21: #{tpu_custom_call.1} parent=1 // pred_fallthru
      _
    // Predicated region
    $region22: #{tpu_custom_call.1} parent=1 // pred_check
      _
    $region23: #{tpu_custom_call.1} parent=1 // pred_check_branch
      %34 = sbr.rel target = $region25
    $region24: #{tpu_custom_call.1} parent=1 // pred_region
      %35 = sst [smem:[#allocation17]] [#allocation16]
      %36 = sst [smem:[#allocation18]] [#allocation15]
    $region25: #{tpu_custom_call.1} parent=1 // pred_fallthru
      _
    %38 = shalt.err (0)
    %s40 = sshll.u32 [#allocation9], 4
    %s41 = int_to_ptr.vmem [resolvable:$true] %s40
    %43 = dma.hbm_to_vmem [thread:$0]  %s4, 8192, %s41, [#allocation10]
    %v44 = vld [vmem:[%s2] sm:$0x1]
    %v45 = vld [vmem:[%s0] sm:$0xff]
    %v46 = vld [vmem:[%s0 + $0x8] sm:$0xff]
    %v47 = vld [vmem:[%s0 + $0x10] sm:$0xff]
    %v48 = vld [vmem:[%s0 + $0x18] sm:$0xff]
    %v49 = vld [vmem:[%s0 + $0x20] sm:$0xff]
    %v50 = vld [vmem:[%s0 + $0x28] sm:$0xff]
    %v51 = vld [vmem:[%s0 + $0x30] sm:$0xff]
    %v52 = vld [vmem:[%s0 + $0x38] sm:$0xff]
    %v53 = vld [vmem:[%s0 + $0x40] sm:$0xff]
    %v54 = vld [vmem:[%s0 + $0x48] sm:$0xff]
    %v55 = vld [vmem:[%s0 + $0x50] sm:$0xff]
    %v56 = vld [vmem:[%s0 + $0x58] sm:$0xff]
    %v57 = vld [vmem:[%s0 + $0x60] sm:$0xff]
    %v58 = vld [vmem:[%s0 + $0x68] sm:$0xff]
    %v59 = vld [vmem:[%s0 + $0x70] sm:$0xff]
    %v60 = vld [vmem:[%s0 + $0x78] sm:$0xff]
    %v61 = vlaneseq
    %v62 = vshrl.u32 %v61, 7
    %v63 = vsub.s32 0, %v62
    %v64 = vrot.slane %v44, %v63
    %v65 = vmul.f32 %v45, %v64
    %v66 = vmul.f32 %v46, %v64
    %v67 = vmul.f32 %v47, %v64
    %v68 = vmul.f32 %v48, %v64
    %v69 = vmul.f32 %v49, %v64
    %v70 = vmul.f32 %v50, %v64
    %v71 = vmul.f32 %v51, %v64
    %v72 = vmul.f32 %v52, %v64
    %v73 = vmul.f32 %v53, %v64
    %v74 = vmul.f32 %v54, %v64
    %v75 = vmul.f32 %v55, %v64
    %v76 = vmul.f32 %v56, %v64
    %v77 = vmul.f32 %v57, %v64
    %v78 = vmul.f32 %v58, %v64
    %v79 = vmul.f32 %v59, %v64
    %v80 = vmul.f32 %v60, %v64
    %82 = vrot.lane.b32.xlu0 %v64, 127
    %v83 = vpop.permute.xlu0 %82
    %v85 = vadd.f32 %v65, %v83
    %v86 = vadd.f32 %v66, %v83
    %v87 = vadd.f32 %v67, %v83
    %v88 = vadd.f32 %v68, %v83
    %v89 = vadd.f32 %v69, %v83
    %v90 = vadd.f32 %v70, %v83
    %v91 = vadd.f32 %v71, %v83
    %v92 = vadd.f32 %v72, %v83
    %v93 = vadd.f32 %v73, %v83
    %v94 = vadd.f32 %v74, %v83
    %v95 = vadd.f32 %v75, %v83
    %v96 = vadd.f32 %v76, %v83
    %v97 = vadd.f32 %v77, %v83
    %v98 = vadd.f32 %v78, %v83
    %v99 = vadd.f32 %v79, %v83
    %v100 = vadd.f32 %v80, %v83
    %vm101 = vcmask 7168
    %102 = vst.msk [vmem:[#allocation2 + $0x8] sm:$0xff] %vm101, %v85
    %103 = vst.msk [vmem:[#allocation2 + $0x10] sm:$0xff] %vm101, %v86
    %104 = vst.msk [vmem:[#allocation2 + $0x18] sm:$0xff] %vm101, %v87
    %105 = vst.msk [vmem:[#allocation2 + $0x20] sm:$0xff] %vm101, %v88
    %106 = vst.msk [vmem:[#allocation2 + $0x28] sm:$0xff] %vm101, %v89
    %107 = vst.msk [vmem:[#allocation2 + $0x30] sm:$0xff] %vm101, %v90
    %108 = vst.msk [vmem:[#allocation2 + $0x38] sm:$0xff] %vm101, %v91
    %109 = vst.msk [vmem:[#allocation2 + $0x40] sm:$0xff] %vm101, %v92
    %110 = vst.msk [vmem:[#allocation2 + $0x48] sm:$0xff] %vm101, %v93
    %111 = vst.msk [vmem:[#allocation2 + $0x50] sm:$0xff] %vm101, %v94
    %112 = vst.msk [vmem:[#allocation2 + $0x58] sm:$0xff] %vm101, %v95
    %113 = vst.msk [vmem:[#allocation2 + $0x60] sm:$0xff] %vm101, %v96
    %114 = vst.msk [vmem:[#allocation2 + $0x68] sm:$0xff] %vm101, %v97
    %115 = vst.msk [vmem:[#allocation2 + $0x70] sm:$0xff] %vm101, %v98
    %116 = vst.msk [vmem:[#allocation2 + $0x78] sm:$0xff] %vm101, %v99
    %117 = vst.msk [vmem:[#allocation2 + $0x80] sm:$0xff] %vm101, %v100
    %v118 = vlaneseq
    %v119 = vshrl.u32 %v118, 7
    %v120 = vadd.s32 %v119, 8
    %v121 = vadd.s32 %v119, 16
    %v122 = vadd.s32 %v119, 24
    %v123 = vadd.s32 %v119, 32
    %v124 = vadd.s32 %v119, 40
    %v125 = vadd.s32 %v119, 48
    %v126 = vadd.s32 %v119, 56
    %v127 = vadd.s32 %v119, 64
    %v128 = vadd.s32 %v119, 72
    %v129 = vadd.s32 %v119, 80
    %v130 = vadd.s32 %v119, 88
    %v131 = vadd.s32 %v119, 96
    %v132 = vadd.s32 %v119, 104
    %v133 = vadd.s32 %v119, 112
    %v134 = vadd.s32 %v119, 120
    %vm135 = vcmp.lt.s32.totalorder %v119, 0
    %v136 = vsub.s32 0, %v119
    %v137 = vsel %vm135, %v136, %v119
    %v138 = vshrl.u32 %v137, 6
    %v139 = vand.u32 %v137, 63
    %v140 = vsub.s32 0, %v139
    %v141 = vsel %vm135, %v140, %v139
    %vm142 = vcmp.lt.s32.totalorder %v120, 0
    %v143 = vsub.s32 0, %v120
    %v144 = vsel %vm142, %v143, %v120
    %v145 = vshrl.u32 %v144, 6
    %v146 = vand.u32 %v144, 63
    %v147 = vsub.s32 0, %v146
    %v148 = vsel %vm142, %v147, %v146
    %vm149 = vcmp.lt.s32.totalorder %v121, 0
    %v150 = vsub.s32 0, %v121
    %v151 = vsel %vm149, %v150, %v121
    %v152 = vshrl.u32 %v151, 6
    %v153 = vand.u32 %v151, 63
    %v154 = vsub.s32 0, %v153
    %v155 = vsel %vm149, %v154, %v153
    %vm156 = vcmp.lt.s32.totalorder %v122, 0
    %v157 = vsub.s32 0, %v122
    %v158 = vsel %vm156, %v157, %v122
    %v159 = vshrl.u32 %v158, 6
    %v160 = vand.u32 %v158, 63
    %v161 = vsub.s32 0, %v160
    %v162 = vsel %vm156, %v161, %v160
    %vm163 = vcmp.lt.s32.totalorder %v123, 0
    %v164 = vsub.s32 0, %v123
    %v165 = vsel %vm163, %v164, %v123
    %v166 = vshrl.u32 %v165, 6
    %v167 = vand.u32 %v165, 63
    %v168 = vsub.s32 0, %v167
    %v169 = vsel %vm163, %v168, %v167
    %vm170 = vcmp.lt.s32.totalorder %v124, 0
    %v171 = vsub.s32 0, %v124
    %v172 = vsel %vm170, %v171, %v124
    %v173 = vshrl.u32 %v172, 6
    %v174 = vand.u32 %v172, 63
    %v175 = vsub.s32 0, %v174
    %v176 = vsel %vm170, %v175, %v174
    %vm177 = vcmp.lt.s32.totalorder %v125, 0
    %v178 = vsub.s32 0, %v125
    %v179 = vsel %vm177, %v178, %v125
    %v180 = vshrl.u32 %v179, 6
    %v181 = vand.u32 %v179, 63
    %v182 = vsub.s32 0, %v181
    %v183 = vsel %vm177, %v182, %v181
    %vm184 = vcmp.lt.s32.totalorder %v126, 0
    %v185 = vsub.s32 0, %v126
    %v186 = vsel %vm184, %v185, %v126
    %v187 = vshrl.u32 %v186, 6
    %v188 = vand.u32 %v186, 63
    %v189 = vsub.s32 0, %v188
    %v190 = vsel %vm184, %v189, %v188
    %vm191 = vcmp.lt.s32.totalorder %v127, 0
    %v192 = vsub.s32 0, %v127
    %v193 = vsel %vm191, %v192, %v127
    %v194 = vshrl.u32 %v193, 6
    %v195 = vand.u32 %v193, 63
    %v196 = vsub.s32 0, %v195
    %v197 = vsel %vm191, %v196, %v195
    %vm198 = vcmp.lt.s32.totalorder %v128, 0
    %v199 = vsub.s32 0, %v128
    %v200 = vsel %vm198, %v199, %v128
    %v201 = vshrl.u32 %v200, 6
    %v202 = vand.u32 %v200, 63
    %v203 = vsub.s32 0, %v202
    %v204 = vsel %vm198, %v203, %v202
    %vm205 = vcmp.lt.s32.totalorder %v129, 0
    %v206 = vsub.s32 0, %v129
    %v207 = vsel %vm205, %v206, %v129
    %v208 = vshrl.u32 %v207, 6
    %v209 = vand.u32 %v207, 63
    %v210 = vsub.s32 0, %v209
    %v211 = vsel %vm205, %v210, %v209
    %vm212 = vcmp.lt.s32.totalorder %v130, 0
    %v213 = vsub.s32 0, %v130
    %v214 = vsel %vm212, %v213, %v130
    %v215 = vshrl.u32 %v214, 6
    %v216 = vand.u32 %v214, 63
    %v217 = vsub.s32 0, %v216
    %v218 = vsel %vm212, %v217, %v216
    %vm219 = vcmp.lt.s32.totalorder %v131, 0
    %v220 = vsub.s32 0, %v131
    %v221 = vsel %vm219, %v220, %v131
    %v222 = vshrl.u32 %v221, 6
    %v223 = vand.u32 %v221, 63
    %v224 = vsub.s32 0, %v223
    %v225 = vsel %vm219, %v224, %v223
    %vm226 = vcmp.lt.s32.totalorder %v132, 0
    %v227 = vsub.s32 0, %v132
    %v228 = vsel %vm226, %v227, %v132
    %v229 = vshrl.u32 %v228, 6
    %v230 = vand.u32 %v228, 63
    %v231 = vsub.s32 0, %v230
    %v232 = vsel %vm226, %v231, %v230
    %vm233 = vcmp.lt.s32.totalorder %v133, 0
    %v234 = vsub.s32 0, %v133
    %v235 = vsel %vm233, %v234, %v133
    %v236 = vshrl.u32 %v235, 6
    %v237 = vand.u32 %v235, 63
    %v238 = vsub.s32 0, %v237
    %v239 = vsel %vm233, %v238, %v237
    %vm240 = vcmp.lt.s32.totalorder %v134, 0
    %v241 = vsub.s32 0, %v134
    %v242 = vsel %vm240, %v241, %v134
    %v243 = vshrl.u32 %v242, 6
    %v244 = vand.u32 %v242, 63
    %v245 = vsub.s32 0, %v244
    %v246 = vsel %vm240, %v245, %v244
    %vm247 = vcmp.ne.s32.totalorder %v141, 0
    %vm248 = vcmp.ne.s32.totalorder %v148, 0
    %vm249 = vcmp.ne.s32.totalorder %v155, 0
    %vm250 = vcmp.ne.s32.totalorder %v162, 0
    %vm251 = vcmp.ne.s32.totalorder %v169, 0
    %vm252 = vcmp.ne.s32.totalorder %v176, 0
    %vm253 = vcmp.ne.s32.totalorder %v183, 0
    %vm254 = vcmp.ne.s32.totalorder %v190, 0
    %vm255 = vcmp.ne.s32.totalorder %v197, 0
    %vm256 = vcmp.ne.s32.totalorder %v204, 0
    %vm257 = vcmp.ne.s32.totalorder %v211, 0
    %vm258 = vcmp.ne.s32.totalorder %v218, 0
    %vm259 = vcmp.ne.s32.totalorder %v225, 0
    %vm260 = vcmp.ne.s32.totalorder %v232, 0
    %vm261 = vcmp.ne.s32.totalorder %v239, 0
    %vm262 = vcmp.ne.s32.totalorder %v246, 0
    %vm263 = vcmp.lt.s32.totalorder %v141, 0
    %vm264 = vcmp.lt.s32.totalorder %v148, 0
    %vm265 = vcmp.lt.s32.totalorder %v155, 0
    %vm266 = vcmp.lt.s32.totalorder %v162, 0
    %vm267 = vcmp.lt.s32.totalorder %v169, 0
    %vm268 = vcmp.lt.s32.totalorder %v176, 0
    %vm269 = vcmp.lt.s32.totalorder %v183, 0
    %vm270 = vcmp.lt.s32.totalorder %v190, 0
    %vm271 = vcmp.lt.s32.totalorder %v197, 0
    %vm272 = vcmp.lt.s32.totalorder %v204, 0
    %vm273 = vcmp.lt.s32.totalorder %v211, 0
    %vm274 = vcmp.lt.s32.totalorder %v218, 0
    %vm275 = vcmp.lt.s32.totalorder %v225, 0
    %vm276 = vcmp.lt.s32.totalorder %v232, 0
    %vm277 = vcmp.lt.s32.totalorder %v239, 0
    %vm278 = vcmp.lt.s32.totalorder %v246, 0
    %vm279 = vmand %vm263, %vm247
    %vm280 = vmand %vm264, %vm248
    %vm281 = vmand %vm265, %vm249
    %vm282 = vmand %vm266, %vm250
    %vm283 = vmand %vm267, %vm251
    %vm284 = vmand %vm268, %vm252
    %vm285 = vmand %vm269, %vm253
    %vm286 = vmand %vm270, %vm254
    %vm287 = vmand %vm271, %vm255
    %vm288 = vmand %vm272, %vm256
    %vm289 = vmand %vm273, %vm257
    %vm290 = vmand %vm274, %vm258
    %vm291 = vmand %vm275, %vm259
    %vm292 = vmand %vm276, %vm260
    %vm293 = vmand %vm277, %vm261
    %vm294 = vmand %vm278, %vm262
    %v295 = vadd.s32 %v141, 64
    %v296 = vadd.s32 %v148, 64
    %v297 = vadd.s32 %v155, 64
    %v298 = vadd.s32 %v162, 64
    %v299 = vadd.s32 %v169, 64
    %v300 = vadd.s32 %v176, 64
    %v301 = vadd.s32 %v183, 64
    %v302 = vadd.s32 %v190, 64
    %v303 = vadd.s32 %v197, 64
    %v304 = vadd.s32 %v204, 64
    %v305 = vadd.s32 %v211, 64
    %v306 = vadd.s32 %v218, 64
    %v307 = vadd.s32 %v225, 64
    %v308 = vadd.s32 %v232, 64
    %v309 = vadd.s32 %v239, 64
    %v310 = vadd.s32 %v246, 64
    %v311 = vsel %vm279, %v295, %v141
    %v312 = vsel %vm280, %v296, %v148
    %v313 = vsel %vm281, %v297, %v155
    %v314 = vsel %vm282, %v298, %v162
    %v315 = vsel %vm283, %v299, %v169
    %v316 = vsel %vm284, %v300, %v176
    %v317 = vsel %vm285, %v301, %v183
    %v318 = vsel %vm286, %v302, %v190
    %v319 = vsel %vm287, %v303, %v197
    %v320 = vsel %vm288, %v304, %v204
    %v321 = vsel %vm289, %v305, %v211
    %v322 = vsel %vm290, %v306, %v218
    %v323 = vsel %vm291, %v307, %v225
    %v324 = vsel %vm292, %v308, %v232
    %v325 = vsel %vm293, %v309, %v239
    %v326 = vsel %vm294, %v310, %v246
    %v327 = vld [vmem:[%s2 + $0x1] sm:$0x1]
    %v328 = vlaneseq
    %v329 = vshrl.u32 %v328, 7
    %v330 = vsub.s32 0, %v329
    %v331 = vrot.slane %v327, %v330
    %v332 = vadd.f32 %v331, 0.0
    %v333 = vld [vmem:[#allocation2 + $0x7] sm:$0xff]
    %v334 = vld [vmem:[#allocation2 + $0xf] sm:$0xff]
    %v335 = vld [vmem:[#allocation2 + $0x17] sm:$0xff]
    %v336 = vld [vmem:[#allocation2 + $0x1f] sm:$0xff]
    %v337 = vld [vmem:[#allocation2 + $0x27] sm:$0xff]
    %v338 = vld [vmem:[#allocation2 + $0x2f] sm:$0xff]
    %v339 = vld [vmem:[#allocation2 + $0x37] sm:$0xff]
    %v340 = vld [vmem:[#allocation2 + $0x3f] sm:$0xff]
    %v341 = vld [vmem:[#allocation2 + $0x47] sm:$0xff]
    %v342 = vld [vmem:[#allocation2 + $0x4f] sm:$0xff]
    %v343 = vld [vmem:[#allocation2 + $0x57] sm:$0xff]
    %v344 = vld [vmem:[#allocation2 + $0x5f] sm:$0xff]
    %v345 = vld [vmem:[#allocation2 + $0x67] sm:$0xff]
    %v346 = vld [vmem:[#allocation2 + $0x6f] sm:$0xff]
    %v347 = vld [vmem:[#allocation2 + $0x77] sm:$0xff]
    %v348 = vld [vmem:[#allocation2 + $0x7f] sm:$0xff]
    %v349 = vadd.s32 %v311, 4294967295
    %v350 = vadd.s32 %v312, 4294967295
    %v351 = vadd.s32 %v313, 4294967295
    %v352 = vadd.s32 %v314, 4294967295
    %v353 = vadd.s32 %v315, 4294967295
    %v354 = vadd.s32 %v316, 4294967295
    %v355 = vadd.s32 %v317, 4294967295
    %v356 = vadd.s32 %v318, 4294967295
    %v357 = vadd.s32 %v319, 4294967295
    %v358 = vadd.s32 %v320, 4294967295
    %v359 = vadd.s32 %v321, 4294967295
    %v360 = vadd.s32 %v322, 4294967295
    %v361 = vadd.s32 %v323, 4294967295
    %v362 = vadd.s32 %v324, 4294967295
    %v363 = vadd.s32 %v325, 4294967295
    %v364 = vadd.s32 %v326, 4294967295
    %vm365 = vcmp.ge.s32.totalorder %v349, 0
    %vm366 = vcmp.ge.s32.totalorder %v350, 0
    %vm367 = vcmp.ge.s32.totalorder %v351, 0
    %vm368 = vcmp.ge.s32.totalorder %v352, 0
    %vm369 = vcmp.ge.s32.totalorder %v353, 0
    %vm370 = vcmp.ge.s32.totalorder %v354, 0
    %vm371 = vcmp.ge.s32.totalorder %v355, 0
    %vm372 = vcmp.ge.s32.totalorder %v356, 0
    %vm373 = vcmp.ge.s32.totalorder %v357, 0
    %vm374 = vcmp.ge.s32.totalorder %v358, 0
    %vm375 = vcmp.ge.s32.totalorder %v359, 0
    %vm376 = vcmp.ge.s32.totalorder %v360, 0
    %vm377 = vcmp.ge.s32.totalorder %v361, 0
    %vm378 = vcmp.ge.s32.totalorder %v362, 0
    %vm379 = vcmp.ge.s32.totalorder %v363, 0
    %vm380 = vcmp.ge.s32.totalorder %v364, 0
    %vm381 = vcmp.lt.s32.totalorder %v349, 64
    %vm382 = vcmp.lt.s32.totalorder %v350, 64
    %vm383 = vcmp.lt.s32.totalorder %v351, 64
    %vm384 = vcmp.lt.s32.totalorder %v352, 64
    %vm385 = vcmp.lt.s32.totalorder %v353, 64
    %vm386 = vcmp.lt.s32.totalorder %v354, 64
    %vm387 = vcmp.lt.s32.totalorder %v355, 64
    %vm388 = vcmp.lt.s32.totalorder %v356, 64
    %vm389 = vcmp.lt.s32.totalorder %v357, 64
    %vm390 = vcmp.lt.s32.totalorder %v358, 64
    %vm391 = vcmp.lt.s32.totalorder %v359, 64
    %vm392 = vcmp.lt.s32.totalorder %v360, 64
    %vm393 = vcmp.lt.s32.totalorder %v361, 64
    %vm394 = vcmp.lt.s32.totalorder %v362, 64
    %vm395 = vcmp.lt.s32.totalorder %v363, 64
    %vm396 = vcmp.lt.s32.totalorder %v364, 64
    %vm397 = vmand %vm365, %vm381
    %vm398 = vmand %vm366, %vm382
    %vm399 = vmand %vm367, %vm383
    %vm400 = vmand %vm368, %vm384
    %vm401 = vmand %vm369, %vm385
    %vm402 = vmand %vm370, %vm386
    %vm403 = vmand %vm371, %vm387
    %vm404 = vmand %vm372, %vm388
    %vm405 = vmand %vm373, %vm389
    %vm406 = vmand %vm374, %vm390
    %vm407 = vmand %vm375, %vm391
    %vm408 = vmand %vm376, %vm392
    %vm409 = vmand %vm377, %vm393
    %vm410 = vmand %vm378, %vm394
    %vm411 = vmand %vm379, %vm395
    %vm412 = vmand %vm380, %vm396
    %v413 = vsel %vm397, %v333, 0.0
    %v414 = vsel %vm398, %v334, 0.0
    %v415 = vsel %vm399, %v335, 0.0
    %v416 = vsel %vm400, %v336, 0.0
    %v417 = vsel %vm401, %v337, 0.0
    %v418 = vsel %vm402, %v338, 0.0
    %v419 = vsel %vm403, %v339, 0.0
    %v420 = vsel %vm404, %v340, 0.0
    %v421 = vsel %vm405, %v341, 0.0
    %v422 = vsel %vm406, %v342, 0.0
    %v423 = vsel %vm407, %v343, 0.0
    %v424 = vsel %vm408, %v344, 0.0
    %v425 = vsel %vm409, %v345, 0.0
    %v426 = vsel %vm410, %v346, 0.0
    %v427 = vsel %vm411, %v347, 0.0
    %v428 = vsel %vm412, %v348, 0.0
    %v429 = vld [vmem:[#allocation11] sm:$0x1]
    %431 = vset.pattern.permute.xlu0 0
    %432 = vperm.xlu0 %431, %v413
    %v433 = vpop.permute.xlu0 %432
    %436 = vset.pattern.permute.xlu0 0
    %437 = vperm.xlu0 %436, %v414
    %v438 = vpop.permute.xlu0 %437
    %441 = vset.pattern.permute.xlu0 0
    %442 = vperm.xlu0 %441, %v415
    %v443 = vpop.permute.xlu0 %442
    %446 = vset.pattern.permute.xlu0 0
    %447 = vperm.xlu0 %446, %v416
    %v448 = vpop.permute.xlu0 %447
    %451 = vset.pattern.permute.xlu0 0
    %452 = vperm.xlu0 %451, %v417
    %v453 = vpop.permute.xlu0 %452
    %456 = vset.pattern.permute.xlu0 0
    %457 = vperm.xlu0 %456, %v418
    %v458 = vpop.permute.xlu0 %457
    %461 = vset.pattern.permute.xlu0 0
    %462 = vperm.xlu0 %461, %v419
    %v463 = vpop.permute.xlu0 %462
    %466 = vset.pattern.permute.xlu0 0
    %467 = vperm.xlu0 %466, %v420
    %v468 = vpop.permute.xlu0 %467
    %471 = vset.pattern.permute.xlu0 0
    %472 = vperm.xlu0 %471, %v421
    %v473 = vpop.permute.xlu0 %472
    %476 = vset.pattern.permute.xlu0 0
    %477 = vperm.xlu0 %476, %v422
    %v478 = vpop.permute.xlu0 %477
    %481 = vset.pattern.permute.xlu0 0
    %482 = vperm.xlu0 %481, %v423
    %v483 = vpop.permute.xlu0 %482
    %486 = vset.pattern.permute.xlu0 0
    %487 = vperm.xlu0 %486, %v424
    %v488 = vpop.permute.xlu0 %487
    %491 = vset.pattern.permute.xlu0 0
    %492 = vperm.xlu0 %491, %v425
    %v493 = vpop.permute.xlu0 %492
    %496 = vset.pattern.permute.xlu0 0
    %497 = vperm.xlu0 %496, %v426
    %v498 = vpop.permute.xlu0 %497
    %501 = vset.pattern.permute.xlu0 0
    %502 = vperm.xlu0 %501, %v427
    %v503 = vpop.permute.xlu0 %502
    %506 = vset.pattern.permute.xlu0 0
    %507 = vperm.xlu0 %506, %v428
    %v508 = vpop.permute.xlu0 %507
    %v510 = vlaneseq
    %v511 = vshrl.u32 %v510, 7
    %v512 = vsub.s32 0, %v511
    %v513 = vrot.slane %v429, %v512
    %v514 = vmul.f32 %v433, %v513
    %v515 = vmul.f32 %v438, %v513
    %v516 = vmul.f32 %v443, %v513
    %v517 = vmul.f32 %v448, %v513
    %v518 = vmul.f32 %v453, %v513
    %v519 = vmul.f32 %v458, %v513
    %v520 = vmul.f32 %v463, %v513
    %v521 = vmul.f32 %v468, %v513
    %v522 = vmul.f32 %v473, %v513
    %v523 = vmul.f32 %v478, %v513
    %v524 = vmul.f32 %v483, %v513
    %v525 = vmul.f32 %v488, %v513
    %v526 = vmul.f32 %v493, %v513
    %v527 = vmul.f32 %v498, %v513
    %v528 = vmul.f32 %v503, %v513
    %v529 = vmul.f32 %v508, %v513
    %v530 = vadd.f32 %v332, %v514
    %v531 = vadd.f32 %v332, %v515
    %v532 = vadd.f32 %v332, %v516
    %v533 = vadd.f32 %v332, %v517
    %v534 = vadd.f32 %v332, %v518
    %v535 = vadd.f32 %v332, %v519
    %v536 = vadd.f32 %v332, %v520
    %v537 = vadd.f32 %v332, %v521
    %v538 = vadd.f32 %v332, %v522
    %v539 = vadd.f32 %v332, %v523
    %v540 = vadd.f32 %v332, %v524
    %v541 = vadd.f32 %v332, %v525
    %v542 = vadd.f32 %v332, %v526
    %v543 = vadd.f32 %v332, %v527
    %v544 = vadd.f32 %v332, %v528
    %v545 = vadd.f32 %v332, %v529
    %v546 = vld [vmem:[#allocation11 + $0x1] sm:$0x1]
    %548 = vset.pattern.permute.xlu0 0
    %549 = vperm.xlu0 %548, %v85
    %v550 = vpop.permute.xlu0 %549
    %553 = vset.pattern.permute.xlu0 0
    %554 = vperm.xlu0 %553, %v86
    %v555 = vpop.permute.xlu0 %554
    %558 = vset.pattern.permute.xlu0 0
    %559 = vperm.xlu0 %558, %v87
    %v560 = vpop.permute.xlu0 %559
    %563 = vset.pattern.permute.xlu0 0
    %564 = vperm.xlu0 %563, %v88
    %v565 = vpop.permute.xlu0 %564
    %568 = vset.pattern.permute.xlu0 0
    %569 = vperm.xlu0 %568, %v89
    %v570 = vpop.permute.xlu0 %569
    %573 = vset.pattern.permute.xlu0 0
    %574 = vperm.xlu0 %573, %v90
    %v575 = vpop.permute.xlu0 %574
    %578 = vset.pattern.permute.xlu0 0
    %579 = vperm.xlu0 %578, %v91
    %v580 = vpop.permute.xlu0 %579
    %583 = vset.pattern.permute.xlu0 0
    %584 = vperm.xlu0 %583, %v92
    %v585 = vpop.permute.xlu0 %584
    %588 = vset.pattern.permute.xlu0 0
    %589 = vperm.xlu0 %588, %v93
    %v590 = vpop.permute.xlu0 %589
    %593 = vset.pattern.permute.xlu0 0
    %594 = vperm.xlu0 %593, %v94
    %v595 = vpop.permute.xlu0 %594
    %598 = vset.pattern.permute.xlu0 0
    %599 = vperm.xlu0 %598, %v95
    %v600 = vpop.permute.xlu0 %599
    %603 = vset.pattern.permute.xlu0 0
    %604 = vperm.xlu0 %603, %v96
    %v605 = vpop.permute.xlu0 %604
    %608 = vset.pattern.permute.xlu0 0
    %609 = vperm.xlu0 %608, %v97
    %v610 = vpop.permute.xlu0 %609
    %613 = vset.pattern.permute.xlu0 0
    %614 = vperm.xlu0 %613, %v98
    %v615 = vpop.permute.xlu0 %614
    %618 = vset.pattern.permute.xlu0 0
    %619 = vperm.xlu0 %618, %v99
    %v620 = vpop.permute.xlu0 %619
    %623 = vset.pattern.permute.xlu0 0
    %624 = vperm.xlu0 %623, %v100
    %v625 = vpop.permute.xlu0 %624
    %v627 = vlaneseq
    %v628 = vshrl.u32 %v627, 7
    %v629 = vsub.s32 0, %v628
    %v630 = vrot.slane %v546, %v629
    %v631 = vmul.f32 %v550, %v630
    %v632 = vmul.f32 %v555, %v630
    %v633 = vmul.f32 %v560, %v630
    %v634 = vmul.f32 %v565, %v630
    %v635 = vmul.f32 %v570, %v630
    %v636 = vmul.f32 %v575, %v630
    %v637 = vmul.f32 %v580, %v630
    %v638 = vmul.f32 %v585, %v630
    %v639 = vmul.f32 %v590, %v630
    %v640 = vmul.f32 %v595, %v630
    %v641 = vmul.f32 %v600, %v630
    %v642 = vmul.f32 %v605, %v630
    %v643 = vmul.f32 %v610, %v630
    %v644 = vmul.f32 %v615, %v630
    %v645 = vmul.f32 %v620, %v630
    %v646 = vmul.f32 %v625, %v630
    %v647 = vadd.f32 %v530, %v631
    %v648 = vadd.f32 %v531, %v632
    %v649 = vadd.f32 %v532, %v633
    %v650 = vadd.f32 %v533, %v634
    %v651 = vadd.f32 %v534, %v635
    %v652 = vadd.f32 %v535, %v636
    %v653 = vadd.f32 %v536, %v637
    %v654 = vadd.f32 %v537, %v638
    %v655 = vadd.f32 %v538, %v639
    %v656 = vadd.f32 %v539, %v640
    %v657 = vadd.f32 %v540, %v641
    %v658 = vadd.f32 %v541, %v642
    %v659 = vadd.f32 %v542, %v643
    %v660 = vadd.f32 %v543, %v644
    %v661 = vadd.f32 %v544, %v645
    %v662 = vadd.f32 %v545, %v646
    %v663 = vld [vmem:[#allocation2 + $0x9] sm:$0xff]
    %v664 = vld [vmem:[#allocation2 + $0x11] sm:$0xff]
    %v665 = vld [vmem:[#allocation2 + $0x19] sm:$0xff]
    %v666 = vld [vmem:[#allocation2 + $0x21] sm:$0xff]
    %v667 = vld [vmem:[#allocation2 + $0x29] sm:$0xff]
    %v668 = vld [vmem:[#allocation2 + $0x31] sm:$0xff]
    %v669 = vld [vmem:[#allocation2 + $0x39] sm:$0xff]
    %v670 = vld [vmem:[#allocation2 + $0x41] sm:$0xff]
    %v671 = vld [vmem:[#allocation2 + $0x49] sm:$0xff]
    %v672 = vld [vmem:[#allocation2 + $0x51] sm:$0xff]
    %v673 = vld [vmem:[#allocation2 + $0x59] sm:$0xff]
    %v674 = vld [vmem:[#allocation2 + $0x61] sm:$0xff]
    %v675 = vld [vmem:[#allocation2 + $0x69] sm:$0xff]
    %v676 = vld [vmem:[#allocation2 + $0x71] sm:$0xff]
    %v677 = vld [vmem:[#allocation2 + $0x79] sm:$0xff]
    %v678 = vld [vmem:[#allocation2 + $0x81] sm:$0xff]
    %v679 = vadd.s32 %v311, 1
    %v680 = vadd.s32 %v312, 1
    %v681 = vadd.s32 %v313, 1
    %v682 = vadd.s32 %v314, 1
    %v683 = vadd.s32 %v315, 1
    %v684 = vadd.s32 %v316, 1
    %v685 = vadd.s32 %v317, 1
    %v686 = vadd.s32 %v318, 1
    %v687 = vadd.s32 %v319, 1
    %v688 = vadd.s32 %v320, 1
    %v689 = vadd.s32 %v321, 1
    %v690 = vadd.s32 %v322, 1
    %v691 = vadd.s32 %v323, 1
    %v692 = vadd.s32 %v324, 1
    %v693 = vadd.s32 %v325, 1
    %v694 = vadd.s32 %v326, 1
    %vm695 = vcmp.ge.s32.totalorder %v679, 0
    %vm696 = vcmp.ge.s32.totalorder %v680, 0
    %vm697 = vcmp.ge.s32.totalorder %v681, 0
    %vm698 = vcmp.ge.s32.totalorder %v682, 0
    %vm699 = vcmp.ge.s32.totalorder %v683, 0
    %vm700 = vcmp.ge.s32.totalorder %v684, 0
    %vm701 = vcmp.ge.s32.totalorder %v685, 0
    %vm702 = vcmp.ge.s32.totalorder %v686, 0
    %vm703 = vcmp.ge.s32.totalorder %v687, 0
    %vm704 = vcmp.ge.s32.totalorder %v688, 0
    %vm705 = vcmp.ge.s32.totalorder %v689, 0
    %vm706 = vcmp.ge.s32.totalorder %v690, 0
    %vm707 = vcmp.ge.s32.totalorder %v691, 0
    %vm708 = vcmp.ge.s32.totalorder %v692, 0
    %vm709 = vcmp.ge.s32.totalorder %v693, 0
    %vm710 = vcmp.ge.s32.totalorder %v694, 0
    %vm711 = vcmp.lt.s32.totalorder %v679, 64
    %vm712 = vcmp.lt.s32.totalorder %v680, 64
    %vm713 = vcmp.lt.s32.totalorder %v681, 64
    %vm714 = vcmp.lt.s32.totalorder %v682, 64
    %vm715 = vcmp.lt.s32.totalorder %v683, 64
    %vm716 = vcmp.lt.s32.totalorder %v684, 64
    %vm717 = vcmp.lt.s32.totalorder %v685, 64
    %vm718 = vcmp.lt.s32.totalorder %v686, 64
    %vm719 = vcmp.lt.s32.totalorder %v687, 64
    %vm720 = vcmp.lt.s32.totalorder %v688, 64
    %vm721 = vcmp.lt.s32.totalorder %v689, 64
    %vm722 = vcmp.lt.s32.totalorder %v690, 64
    %vm723 = vcmp.lt.s32.totalorder %v691, 64
    %vm724 = vcmp.lt.s32.totalorder %v692, 64
    %vm725 = vcmp.lt.s32.totalorder %v693, 64
    %vm726 = vcmp.lt.s32.totalorder %v694, 64
    %vm727 = vmand %vm695, %vm711
    %vm728 = vmand %vm696, %vm712
    %vm729 = vmand %vm697, %vm713
    %vm730 = vmand %vm698, %vm714
    %vm731 = vmand %vm699, %vm715
    %vm732 = vmand %vm700, %vm716
    %vm733 = vmand %vm701, %vm717
    %vm734 = vmand %vm702, %vm718
    %vm735 = vmand %vm703, %vm719
    %vm736 = vmand %vm704, %vm720
    %vm737 = vmand %vm705, %vm721
    %vm738 = vmand %vm706, %vm722
    %vm739 = vmand %vm707, %vm723
    %vm740 = vmand %vm708, %vm724
    %vm741 = vmand %vm709, %vm725
    %vm742 = vmand %vm710, %vm726
    %v743 = vsel %vm727, %v663, 0.0
    %v744 = vsel %vm728, %v664, 0.0
    %v745 = vsel %vm729, %v665, 0.0
    %v746 = vsel %vm730, %v666, 0.0
    %v747 = vsel %vm731, %v667, 0.0
    %v748 = vsel %vm732, %v668, 0.0
    %v749 = vsel %vm733, %v669, 0.0
    %v750 = vsel %vm734, %v670, 0.0
    %v751 = vsel %vm735, %v671, 0.0
    %v752 = vsel %vm736, %v672, 0.0
    %v753 = vsel %vm737, %v673, 0.0
    %v754 = vsel %vm738, %v674, 0.0
    %v755 = vsel %vm739, %v675, 0.0
    %v756 = vsel %vm740, %v676, 0.0
    %v757 = vsel %vm741, %v677, 0.0
    %v758 = vsel %vm742, %v678, 0.0
    %v759 = vld [vmem:[#allocation11 + $0x2] sm:$0x1]
    %761 = vset.pattern.permute.xlu0 0
    %762 = vperm.xlu0 %761, %v743
    %v763 = vpop.permute.xlu0 %762
    %766 = vset.pattern.permute.xlu0 0
    %767 = vperm.xlu0 %766, %v744
    %v768 = vpop.permute.xlu0 %767
    %771 = vset.pattern.permute.xlu0 0
    %772 = vperm.xlu0 %771, %v745
    %v773 = vpop.permute.xlu0 %772
    %776 = vset.pattern.permute.xlu0 0
    %777 = vperm.xlu0 %776, %v746
    %v778 = vpop.permute.xlu0 %777
    %781 = vset.pattern.permute.xlu0 0
    %782 = vperm.xlu0 %781, %v747
    %v783 = vpop.permute.xlu0 %782
    %786 = vset.pattern.permute.xlu0 0
    %787 = vperm.xlu0 %786, %v748
    %v788 = vpop.permute.xlu0 %787
    %791 = vset.pattern.permute.xlu0 0
    %792 = vperm.xlu0 %791, %v749
    %v793 = vpop.permute.xlu0 %792
    %796 = vset.pattern.permute.xlu0 0
    %797 = vperm.xlu0 %796, %v750
    %v798 = vpop.permute.xlu0 %797
    %801 = vset.pattern.permute.xlu0 0
    %802 = vperm.xlu0 %801, %v751
    %v803 = vpop.permute.xlu0 %802
    %806 = vset.pattern.permute.xlu0 0
    %807 = vperm.xlu0 %806, %v752
    %v808 = vpop.permute.xlu0 %807
    %811 = vset.pattern.permute.xlu0 0
    %812 = vperm.xlu0 %811, %v753
    %v813 = vpop.permute.xlu0 %812
    %816 = vset.pattern.permute.xlu0 0
    %817 = vperm.xlu0 %816, %v754
    %v818 = vpop.permute.xlu0 %817
    %821 = vset.pattern.permute.xlu0 0
    %822 = vperm.xlu0 %821, %v755
    %v823 = vpop.permute.xlu0 %822
    %826 = vset.pattern.permute.xlu0 0
    %827 = vperm.xlu0 %826, %v756
    %v828 = vpop.permute.xlu0 %827
    %831 = vset.pattern.permute.xlu0 0
    %832 = vperm.xlu0 %831, %v757
    %v833 = vpop.permute.xlu0 %832
    %836 = vset.pattern.permute.xlu0 0
    %837 = vperm.xlu0 %836, %v758
    %v838 = vpop.permute.xlu0 %837
    %v840 = vlaneseq
    %v841 = vshrl.u32 %v840, 7
    %v842 = vsub.s32 0, %v841
    %v843 = vrot.slane %v759, %v842
    %v844 = vmul.f32 %v763, %v843
    %v845 = vmul.f32 %v768, %v843
    %v846 = vmul.f32 %v773, %v843
    %v847 = vmul.f32 %v778, %v843
    %v848 = vmul.f32 %v783, %v843
    %v849 = vmul.f32 %v788, %v843
    %v850 = vmul.f32 %v793, %v843
    %v851 = vmul.f32 %v798, %v843
    %v852 = vmul.f32 %v803, %v843
    %v853 = vmul.f32 %v808, %v843
    %v854 = vmul.f32 %v813, %v843
    %v855 = vmul.f32 %v818, %v843
    %v856 = vmul.f32 %v823, %v843
    %v857 = vmul.f32 %v828, %v843
    %v858 = vmul.f32 %v833, %v843
    %v859 = vmul.f32 %v838, %v843
    %v860 = vadd.f32 %v647, %v844
    %v861 = vadd.f32 %v648, %v845
    %v862 = vadd.f32 %v649, %v846
    %v863 = vadd.f32 %v650, %v847
    %v864 = vadd.f32 %v651, %v848
    %v865 = vadd.f32 %v652, %v849
    %v866 = vadd.f32 %v653, %v850
    %v867 = vadd.f32 %v654, %v851
    %v868 = vadd.f32 %v655, %v852
    %v869 = vadd.f32 %v656, %v853
    %v870 = vadd.f32 %v657, %v854
    %v871 = vadd.f32 %v658, %v855
    %v872 = vadd.f32 %v659, %v856
    %v873 = vadd.f32 %v660, %v857
    %v874 = vadd.f32 %v661, %v858
    %v875 = vadd.f32 %v662, %v859
    %v876 = vmax.f32 %v860, 0.0
    %v877 = vmax.f32 %v861, 0.0
    %v878 = vmax.f32 %v862, 0.0
    %v879 = vmax.f32 %v863, 0.0
    %v880 = vmax.f32 %v864, 0.0
    %v881 = vmax.f32 %v865, 0.0
    %v882 = vmax.f32 %v866, 0.0
    %v883 = vmax.f32 %v867, 0.0
    %v884 = vmax.f32 %v868, 0.0
    %v885 = vmax.f32 %v869, 0.0
    %v886 = vmax.f32 %v870, 0.0
    %v887 = vmax.f32 %v871, 0.0
    %v888 = vmax.f32 %v872, 0.0
    %v889 = vmax.f32 %v873, 0.0
    %v890 = vmax.f32 %v874, 0.0
    %v891 = vmax.f32 %v875, 0.0
    %vm892 = vcmask 31744
    %893 = vst.msk [vmem:[#allocation3 + $0x8] sm:$0xff] %vm892, %v876
    %894 = vst.msk [vmem:[#allocation3 + $0x10] sm:$0xff] %vm892, %v877
    %895 = vst.msk [vmem:[#allocation3 + $0x18] sm:$0xff] %vm892, %v878
    %896 = vst.msk [vmem:[#allocation3 + $0x20] sm:$0xff] %vm892, %v879
    %897 = vst.msk [vmem:[#allocation3 + $0x28] sm:$0xff] %vm892, %v880
    %898 = vst.msk [vmem:[#allocation3 + $0x30] sm:$0xff] %vm892, %v881
    %899 = vst.msk [vmem:[#allocation3 + $0x38] sm:$0xff] %vm892, %v882
    %900 = vst.msk [vmem:[#allocation3 + $0x40] sm:$0xff] %vm892, %v883
    %901 = vst.msk [vmem:[#allocation3 + $0x48] sm:$0xff] %vm892, %v884
    %902 = vst.msk [vmem:[#allocation3 + $0x50] sm:$0xff] %vm892, %v885
    %903 = vst.msk [vmem:[#allocation3 + $0x58] sm:$0xff] %vm892, %v886
    %904 = vst.msk [vmem:[#allocation3 + $0x60] sm:$0xff] %vm892, %v887
    %905 = vst.msk [vmem:[#allocation3 + $0x68] sm:$0xff] %vm892, %v888
    %906 = vst.msk [vmem:[#allocation3 + $0x70] sm:$0xff] %vm892, %v889
    %907 = vst.msk [vmem:[#allocation3 + $0x78] sm:$0xff] %vm892, %v890
    %908 = vst.msk [vmem:[#allocation3 + $0x80] sm:$0xff] %vm892, %v891
    %v909 = vld [vmem:[%s2 + $0x2] sm:$0x1]
    %v910 = vld [vmem:[%s2 + $0x3] sm:$0x1]
    %vm911 = vcmp.lt.s32.totalorder %v119, 0
    %v912 = vsub.s32 0, %v119
    %v913 = vsel %vm911, %v912, %v119
    %v914 = vshrl.u32 %v913, 5
    %v915 = vand.u32 %v913, 31
    %v916 = vsub.s32 0, %v915
    %v917 = vsel %vm911, %v916, %v915
    %vm918 = vcmp.lt.s32.totalorder %v120, 0
    %v919 = vsub.s32 0, %v120
    %v920 = vsel %vm918, %v919, %v120
    %v921 = vshrl.u32 %v920, 5
    %v922 = vand.u32 %v920, 31
    %v923 = vsub.s32 0, %v922
    %v924 = vsel %vm918, %v923, %v922
    %vm925 = vcmp.lt.s32.totalorder %v121, 0
    %v926 = vsub.s32 0, %v121
    %v927 = vsel %vm925, %v926, %v121
    %v928 = vshrl.u32 %v927, 5
    %v929 = vand.u32 %v927, 31
    %v930 = vsub.s32 0, %v929
    %v931 = vsel %vm925, %v930, %v929
    %vm932 = vcmp.lt.s32.totalorder %v122, 0
    %v933 = vsub.s32 0, %v122
    %v934 = vsel %vm932, %v933, %v122
    %v935 = vshrl.u32 %v934, 5
    %v936 = vand.u32 %v934, 31
    %v937 = vsub.s32 0, %v936
    %v938 = vsel %vm932, %v937, %v936
    %vm939 = vcmp.lt.s32.totalorder %v123, 0
    %v940 = vsub.s32 0, %v123
    %v941 = vsel %vm939, %v940, %v123
    %v942 = vshrl.u32 %v941, 5
    %v943 = vand.u32 %v941, 31
    %v944 = vsub.s32 0, %v943
    %v945 = vsel %vm939, %v944, %v943
    %vm946 = vcmp.lt.s32.totalorder %v124, 0
    %v947 = vsub.s32 0, %v124
    %v948 = vsel %vm946, %v947, %v124
    %v949 = vshrl.u32 %v948, 5
    %v950 = vand.u32 %v948, 31
    %v951 = vsub.s32 0, %v950
    %v952 = vsel %vm946, %v951, %v950
    %vm953 = vcmp.lt.s32.totalorder %v125, 0
    %v954 = vsub.s32 0, %v125
    %v955 = vsel %vm953, %v954, %v125
    %v956 = vshrl.u32 %v955, 5
    %v957 = vand.u32 %v955, 31
    %v958 = vsub.s32 0, %v957
    %v959 = vsel %vm953, %v958, %v957
    %vm960 = vcmp.lt.s32.totalorder %v126, 0
    %v961 = vsub.s32 0, %v126
    %v962 = vsel %vm960, %v961, %v126
    %v963 = vshrl.u32 %v962, 5
    %v964 = vand.u32 %v962, 31
    %v965 = vsub.s32 0, %v964
    %v966 = vsel %vm960, %v965, %v964
    %vm967 = vcmp.ne.s32.totalorder %v917, 0
    %vm968 = vcmp.ne.s32.totalorder %v924, 0
    %vm969 = vcmp.ne.s32.totalorder %v931, 0
    %vm970 = vcmp.ne.s32.totalorder %v938, 0
    %vm971 = vcmp.ne.s32.totalorder %v945, 0
    %vm972 = vcmp.ne.s32.totalorder %v952, 0
    %vm973 = vcmp.ne.s32.totalorder %v959, 0
    %vm974 = vcmp.ne.s32.totalorder %v966, 0
    %vm975 = vcmp.lt.s32.totalorder %v917, 0
    %vm976 = vcmp.lt.s32.totalorder %v924, 0
    %vm977 = vcmp.lt.s32.totalorder %v931, 0
    %vm978 = vcmp.lt.s32.totalorder %v938, 0
    %vm979 = vcmp.lt.s32.totalorder %v945, 0
    %vm980 = vcmp.lt.s32.totalorder %v952, 0
    %vm981 = vcmp.lt.s32.totalorder %v959, 0
    %vm982 = vcmp.lt.s32.totalorder %v966, 0
    %vm983 = vmand %vm975, %vm967
    %vm984 = vmand %vm976, %vm968
    %vm985 = vmand %vm977, %vm969
    %vm986 = vmand %vm978, %vm970
    %vm987 = vmand %vm979, %vm971
    %vm988 = vmand %vm980, %vm972
    %vm989 = vmand %vm981, %vm973
    %vm990 = vmand %vm982, %vm974
    %v991 = vadd.s32 %v917, 32
    %v992 = vadd.s32 %v924, 32
    %v993 = vadd.s32 %v931, 32
    %v994 = vadd.s32 %v938, 32
    %v995 = vadd.s32 %v945, 32
    %v996 = vadd.s32 %v952, 32
    %v997 = vadd.s32 %v959, 32
    %v998 = vadd.s32 %v966, 32
    %v999 = vsel %vm983, %v991, %v917
    %v1000 = vsel %vm984, %v992, %v924
    %v1001 = vsel %vm985, %v993, %v931
    %v1002 = vsel %vm986, %v994, %v938
    %v1003 = vsel %vm987, %v995, %v945
    %v1004 = vsel %vm988, %v996, %v952
    %v1005 = vsel %vm989, %v997, %v959
    %v1006 = vsel %vm990, %v998, %v966
    %v1007 = vld [vmem:[%s2 + $0x4] sm:$0x1]
    %v1008 = vlaneseq
    %v1009 = vshrl.u32 %v1008, 7
    %v1010 = vsub.s32 0, %v1009
    %v1011 = vrot.slane %v1007, %v1010
    %v1012 = vadd.f32 %v1011, 0.0
    %s1013 = scalar_lea.vmem [#allocation3], 6
    %v1014 = vld [vmem:[%s1013] ss:$2 sm:$0xff]
    %s1015 = scalar_lea.vmem [#allocation3], 22
    %v1016 = vld [vmem:[%s1015] ss:$2 sm:$0xff]
    %s1017 = scalar_lea.vmem [#allocation3], 38
    %v1018 = vld [vmem:[%s1017] ss:$2 sm:$0xff]
    %s1019 = scalar_lea.vmem [#allocation3], 54
    %v1020 = vld [vmem:[%s1019] ss:$2 sm:$0xff]
    %s1021 = scalar_lea.vmem [#allocation3], 70
    %v1022 = vld [vmem:[%s1021] ss:$2 sm:$0xff]
    %s1023 = scalar_lea.vmem [#allocation3], 86
    %v1024 = vld [vmem:[%s1023] ss:$2 sm:$0xff]
    %s1025 = scalar_lea.vmem [#allocation3], 102
    %v1026 = vld [vmem:[%s1025] ss:$2 sm:$0xff]
    %s1027 = scalar_lea.vmem [#allocation3], 118
    %v1028 = vld [vmem:[%s1027] ss:$2 sm:$0xff]
    %s1029 = scalar_lea.vmem [#allocation3], 7
    %v1030 = vld [vmem:[%s1029] ss:$2 sm:$0xff]
    %s1031 = scalar_lea.vmem [#allocation3], 23
    %v1032 = vld [vmem:[%s1031] ss:$2 sm:$0xff]
    %s1033 = scalar_lea.vmem [#allocation3], 39
    %v1034 = vld [vmem:[%s1033] ss:$2 sm:$0xff]
    %s1035 = scalar_lea.vmem [#allocation3], 55
    %v1036 = vld [vmem:[%s1035] ss:$2 sm:$0xff]
    %s1037 = scalar_lea.vmem [#allocation3], 71
    %v1038 = vld [vmem:[%s1037] ss:$2 sm:$0xff]
    %s1039 = scalar_lea.vmem [#allocation3], 87
    %v1040 = vld [vmem:[%s1039] ss:$2 sm:$0xff]
    %s1041 = scalar_lea.vmem [#allocation3], 103
    %v1042 = vld [vmem:[%s1041] ss:$2 sm:$0xff]
    %s1043 = scalar_lea.vmem [#allocation3], 119
    %v1044 = vld [vmem:[%s1043] ss:$2 sm:$0xff]
    %v1045 = vmax.f32 %v1014, %v1030
    %v1046 = vmax.f32 %v1016, %v1032
    %v1047 = vmax.f32 %v1018, %v1034
    %v1048 = vmax.f32 %v1020, %v1036
    %v1049 = vmax.f32 %v1022, %v1038
    %v1050 = vmax.f32 %v1024, %v1040
    %v1051 = vmax.f32 %v1026, %v1042
    %v1052 = vmax.f32 %v1028, %v1044
    %v1053 = vlaneseq
    %v1054 = vshrl.u32 %v1053, 7
    %v1055 = vsub.s32 0, %v1054
    %v1056 = vrot.slane %v909, %v1055
    %v1057 = vmul.f32 %v1045, %v1056
    %v1058 = vmul.f32 %v1046, %v1056
    %v1059 = vmul.f32 %v1047, %v1056
    %v1060 = vmul.f32 %v1048, %v1056
    %v1061 = vmul.f32 %v1049, %v1056
    %v1062 = vmul.f32 %v1050, %v1056
    %v1063 = vmul.f32 %v1051, %v1056
    %v1064 = vmul.f32 %v1052, %v1056
    %v1065 = vlaneseq
    %v1066 = vshrl.u32 %v1065, 7
    %v1067 = vsub.s32 0, %v1066
    %v1068 = vrot.slane %v910, %v1067
    %v1069 = vadd.f32 %v1057, %v1068
    %v1070 = vadd.f32 %v1058, %v1068
    %v1071 = vadd.f32 %v1059, %v1068
    %v1072 = vadd.f32 %v1060, %v1068
    %v1073 = vadd.f32 %v1061, %v1068
    %v1074 = vadd.f32 %v1062, %v1068
    %v1075 = vadd.f32 %v1063, %v1068
    %v1076 = vadd.f32 %v1064, %v1068
    %v1077 = vadd.s32 %v999, 4294967295
    %v1078 = vadd.s32 %v1000, 4294967295
    %v1079 = vadd.s32 %v1001, 4294967295
    %v1080 = vadd.s32 %v1002, 4294967295
    %v1081 = vadd.s32 %v1003, 4294967295
    %v1082 = vadd.s32 %v1004, 4294967295
    %v1083 = vadd.s32 %v1005, 4294967295
    %v1084 = vadd.s32 %v1006, 4294967295
    %vm1085 = vcmp.ge.s32.totalorder %v1077, 0
    %vm1086 = vcmp.ge.s32.totalorder %v1078, 0
    %vm1087 = vcmp.ge.s32.totalorder %v1079, 0
    %vm1088 = vcmp.ge.s32.totalorder %v1080, 0
    %vm1089 = vcmp.ge.s32.totalorder %v1081, 0
    %vm1090 = vcmp.ge.s32.totalorder %v1082, 0
    %vm1091 = vcmp.ge.s32.totalorder %v1083, 0
    %vm1092 = vcmp.ge.s32.totalorder %v1084, 0
    %vm1093 = vcmp.lt.s32.totalorder %v1077, 32
    %vm1094 = vcmp.lt.s32.totalorder %v1078, 32
    %vm1095 = vcmp.lt.s32.totalorder %v1079, 32
    %vm1096 = vcmp.lt.s32.totalorder %v1080, 32
    %vm1097 = vcmp.lt.s32.totalorder %v1081, 32
    %vm1098 = vcmp.lt.s32.totalorder %v1082, 32
    %vm1099 = vcmp.lt.s32.totalorder %v1083, 32
    %vm1100 = vcmp.lt.s32.totalorder %v1084, 32
    %vm1101 = vmand %vm1085, %vm1093
    %vm1102 = vmand %vm1086, %vm1094
    %vm1103 = vmand %vm1087, %vm1095
    %vm1104 = vmand %vm1088, %vm1096
    %vm1105 = vmand %vm1089, %vm1097
    %vm1106 = vmand %vm1090, %vm1098
    %vm1107 = vmand %vm1091, %vm1099
    %vm1108 = vmand %vm1092, %vm1100
    %v1109 = vsel %vm1101, 1, 0
    %v1110 = vsel %vm1102, 1, 0
    %v1111 = vsel %vm1103, 1, 0
    %v1112 = vsel %vm1104, 1, 0
    %v1113 = vsel %vm1105, 1, 0
    %v1114 = vsel %vm1106, 1, 0
    %v1115 = vsel %vm1107, 1, 0
    %v1116 = vsel %vm1108, 1, 0
    %vm1117 = vcmp.eq.s32.totalorder %v1109, 1
    %vm1118 = vcmp.eq.s32.totalorder %v1110, 1
    %vm1119 = vcmp.eq.s32.totalorder %v1111, 1
    %vm1120 = vcmp.eq.s32.totalorder %v1112, 1
    %vm1121 = vcmp.eq.s32.totalorder %v1113, 1
    %vm1122 = vcmp.eq.s32.totalorder %v1114, 1
    %vm1123 = vcmp.eq.s32.totalorder %v1115, 1
    %vm1124 = vcmp.eq.s32.totalorder %v1116, 1
    %v1125 = vsel %vm1117, %v1069, 0.0
    %v1126 = vsel %vm1118, %v1070, 0.0
    %v1127 = vsel %vm1119, %v1071, 0.0
    %v1128 = vsel %vm1120, %v1072, 0.0
    %v1129 = vsel %vm1121, %v1073, 0.0
    %v1130 = vsel %vm1122, %v1074, 0.0
    %v1131 = vsel %vm1123, %v1075, 0.0
    %v1132 = vsel %vm1124, %v1076, 0.0
    %v1133 = vld [vmem:[#allocation11 + $0x8] sm:$0xf]
    %v1135 = vsel %vm892, %v1125, 0
    %v1138 = vsel %vm892, %v1126, 0
    %v1141 = vsel %vm892, %v1127, 0
    %v1144 = vsel %vm892, %v1128, 0
    %v1147 = vsel %vm892, %v1129, 0
    %v1150 = vsel %vm892, %v1130, 0
    %v1153 = vsel %vm892, %v1131, 0
    %v1156 = vsel %vm892, %v1132, 0
    %vm1158 = vcmask 1043456
    %v1160 = vsel %vm1158, %v1133, 0
    %1162 = vmatprep.subr.mxu0 0.0
    %1163 = vmatpush1.msra.mxu0 0.0
    %1164 = vmatprep.subr.mxu0 0.0
    %1165 = vmatpush1.msra.mxu0 0.0
    %1166 = vmatprep.subr.mxu0 0.0
    %1167 = vmatpush1.msra.mxu0 0.0
    %1168 = vmatprep.subr.mxu0 0.0
    %1169 = vmatpush1.msra.mxu0 0.0
    %1170 = vmatprep.subr.mxu0 0.0
    %1171 = vmatpush1.msra.mxu0 0.0
    %1172 = vmatprep.subr.mxu0 0.0
    %1173 = vmatpush1.msra.mxu0 0.0
    %1174 = vmatprep.subr.mxu0 0.0
    %1175 = vmatpush1.msra.mxu0 0.0
    %1176 = vmatprep.subr.mxu0 0.0
    %1177 = vmatpush1.msra.mxu0 0.0
    %1178 = vmatprep.subr.mxu0 0.0
    %1179 = vmatpush1.msra.mxu0 0.0
    %1180 = vmatprep.subr.mxu0 0.0
    %1181 = vmatpush1.msra.mxu0 0.0
    %1182 = vmatprep.subr.mxu0 0.0
    %1183 = vmatpush1.msra.mxu0 0.0
    %1184 = vmatprep.subr.mxu0 0.0
    %1185 = vmatpush1.msra.mxu0 0.0
    %1186 = vmatprep.subr.mxu0 0.0
    %1187 = vmatpush1.msra.mxu0 0.0
    %1188 = vmatprep.subr.mxu0 0.0
    %1189 = vmatpush1.msra.mxu0 0.0
    %1190 = vmatprep.subr.mxu0 0.0
    %1191 = vmatpush1.msra.mxu0 0.0
    %1192 = vmatprep.subr.mxu0 0.0
    %1193 = vmatpush1.msra.mxu0 %v1160
    %1194 = vmatprep.subr.mxu0 0.0
    %1195 = vmatpush2.msra.mxu0 0.0
    %1196 = vmatprep.subr.mxu0 0.0
    %1197 = vmatpush2.msra.mxu0 0.0
    %1198 = vmatprep.subr.mxu0 0.0
    %1199 = vmatpush2.msra.mxu0 0.0
    %1200 = vmatprep.subr.mxu0 0.0
    %1201 = vmatpush2.msra.mxu0 0.0
    %1202 = vmatprep.subr.mxu0 0.0
    %1203 = vmatpush2.msra.mxu0 0.0
    %1204 = vmatprep.subr.mxu0 0.0
    %1205 = vmatpush2.msra.mxu0 0.0
    %1206 = vmatprep.subr.mxu0 0.0
    %1207 = vmatpush2.msra.mxu0 0.0
    %1208 = vmatprep.subr.mxu0 0.0
    %1209 = vmatpush2.msra.mxu0 0.0
    %1210 = vmatprep.subr.mxu0 0.0
    %1211 = vmatpush2.msra.mxu0 0.0
    %1212 = vmatprep.subr.mxu0 0.0
    %1213 = vmatpush2.msra.mxu0 0.0
    %1214 = vmatprep.subr.mxu0 0.0
    %1215 = vmatpush2.msra.mxu0 0.0
    %1216 = vmatprep.subr.mxu0 0.0
    %1217 = vmatpush2.msra.mxu0 0.0
    %1218 = vmatprep.subr.mxu0 0.0
    %1219 = vmatpush2.msra.mxu0 0.0
    %1220 = vmatprep.subr.mxu0 0.0
    %1221 = vmatpush2.msra.mxu0 0.0
    %1222 = vmatprep.subr.mxu0 0.0
    %1223 = vmatpush2.msra.mxu0 0.0
    %1224 = vmatprep.subr.mxu0 0.0
    %1225 = vmatpush2.msra.mxu0 0.0
    %1226 = vmatprep.mubr.f32.mxu0 0.0
    %1227 = vmatmul.mubr.f32.gmra.mxu0 %v1135
    %v1228 = vpop.f32.mrf.mxu0
    %v1229 = vadd.f32 0.0, %v1228
    %v1230 = vpop.f32.mrf.mxu0
    %1231 = vmatprep.mubr.f32.mxu0 0.0
    %1232 = vmatmul.mubr.f32.gmra.mxu0 %v1138
    %v1233 = vpop.f32.mrf.mxu0
    %v1234 = vadd.f32 0.0, %v1233
    %v1235 = vpop.f32.mrf.mxu0
    %1236 = vmatprep.mubr.f32.mxu0 0.0
    %1237 = vmatmul.mubr.f32.gmra.mxu0 %v1141
    %v1238 = vpop.f32.mrf.mxu0
    %v1239 = vadd.f32 0.0, %v1238
    %v1240 = vpop.f32.mrf.mxu0
    %1241 = vmatprep.mubr.f32.mxu0 0.0
    %1242 = vmatmul.mubr.f32.gmra.mxu0 %v1144
    %v1243 = vpop.f32.mrf.mxu0
    %v1244 = vadd.f32 0.0, %v1243
    %v1245 = vpop.f32.mrf.mxu0
    %1246 = vmatprep.mubr.f32.mxu0 0.0
    %1247 = vmatmul.mubr.f32.gmra.mxu0 %v1147
    %v1248 = vpop.f32.mrf.mxu0
    %v1249 = vadd.f32 0.0, %v1248
    %v1250 = vpop.f32.mrf.mxu0
    %1251 = vmatprep.mubr.f32.mxu0 0.0
    %1252 = vmatmul.mubr.f32.gmra.mxu0 %v1150
    %v1253 = vpop.f32.mrf.mxu0
    %v1254 = vadd.f32 0.0, %v1253
    %v1255 = vpop.f32.mrf.mxu0
    %1256 = vmatprep.mubr.f32.mxu0 0.0
    %1257 = vmatmul.mubr.f32.gmra.mxu0 %v1153
    %v1258 = vpop.f32.mrf.mxu0
    %v1259 = vadd.f32 0.0, %v1258
    %v1260 = vpop.f32.mrf.mxu0
    %1261 = vmatprep.mubr.f32.mxu0 0.0
    %1262 = vmatmul.mubr.f32.gmra.mxu0 %v1156
    %v1263 = vpop.f32.mrf.mxu0
    %v1264 = vadd.f32 0.0, %v1263
    %v1265 = vpop.f32.mrf.mxu0
    %1266 = vdwg.mxu0
    %v1267 = vadd.f32 %v1012, %v1229
    %v1268 = vadd.f32 %v1012, %v1234
    %v1269 = vadd.f32 %v1012, %v1239
    %v1270 = vadd.f32 %v1012, %v1244
    %v1271 = vadd.f32 %v1012, %v1249
    %v1272 = vadd.f32 %v1012, %v1254
    %v1273 = vadd.f32 %v1012, %v1259
    %v1274 = vadd.f32 %v1012, %v1264
    %s1275 = scalar_lea.vmem [#allocation3], 8
    %v1276 = vld [vmem:[%s1275] ss:$2 sm:$0xff]
    %s1277 = scalar_lea.vmem [#allocation3], 24
    %v1278 = vld [vmem:[%s1277] ss:$2 sm:$0xff]
    %s1279 = scalar_lea.vmem [#allocation3], 40
    %v1280 = vld [vmem:[%s1279] ss:$2 sm:$0xff]
    %s1281 = scalar_lea.vmem [#allocation3], 56
    %v1282 = vld [vmem:[%s1281] ss:$2 sm:$0xff]
    %s1283 = scalar_lea.vmem [#allocation3], 72
    %v1284 = vld [vmem:[%s1283] ss:$2 sm:$0xff]
    %s1285 = scalar_lea.vmem [#allocation3], 88
    %v1286 = vld [vmem:[%s1285] ss:$2 sm:$0xff]
    %s1287 = scalar_lea.vmem [#allocation3], 104
    %v1288 = vld [vmem:[%s1287] ss:$2 sm:$0xff]
    %s1289 = scalar_lea.vmem [#allocation3], 120
    %v1290 = vld [vmem:[%s1289] ss:$2 sm:$0xff]
    %s1291 = scalar_lea.vmem [#allocation3], 9
    %v1292 = vld [vmem:[%s1291] ss:$2 sm:$0xff]
    %s1293 = scalar_lea.vmem [#allocation3], 25
    %v1294 = vld [vmem:[%s1293] ss:$2 sm:$0xff]
    %s1295 = scalar_lea.vmem [#allocation3], 41
    %v1296 = vld [vmem:[%s1295] ss:$2 sm:$0xff]
    %s1297 = scalar_lea.vmem [#allocation3], 57
    %v1298 = vld [vmem:[%s1297] ss:$2 sm:$0xff]
    %s1299 = scalar_lea.vmem [#allocation3], 73
    %v1300 = vld [vmem:[%s1299] ss:$2 sm:$0xff]
    %s1301 = scalar_lea.vmem [#allocation3], 89
    %v1302 = vld [vmem:[%s1301] ss:$2 sm:$0xff]
    %s1303 = scalar_lea.vmem [#allocation3], 105
    %v1304 = vld [vmem:[%s1303] ss:$2 sm:$0xff]
    %s1305 = scalar_lea.vmem [#allocation3], 121
    %v1306 = vld [vmem:[%s1305] ss:$2 sm:$0xff]
    %v1307 = vmax.f32 %v1276, %v1292
    %v1308 = vmax.f32 %v1278, %v1294
    %v1309 = vmax.f32 %v1280, %v1296
    %v1310 = vmax.f32 %v1282, %v1298
    %v1311 = vmax.f32 %v1284, %v1300
    %v1312 = vmax.f32 %v1286, %v1302
    %v1313 = vmax.f32 %v1288, %v1304
    %v1314 = vmax.f32 %v1290, %v1306
    %v1315 = vmul.f32 %v1307, %v1056
    %v1316 = vmul.f32 %v1308, %v1056
    %v1317 = vmul.f32 %v1309, %v1056
    %v1318 = vmul.f32 %v1310, %v1056
    %v1319 = vmul.f32 %v1311, %v1056
    %v1320 = vmul.f32 %v1312, %v1056
    %v1321 = vmul.f32 %v1313, %v1056
    %v1322 = vmul.f32 %v1314, %v1056
    %v1323 = vadd.f32 %v1315, %v1068
    %v1324 = vadd.f32 %v1316, %v1068
    %v1325 = vadd.f32 %v1317, %v1068
    %v1326 = vadd.f32 %v1318, %v1068
    %v1327 = vadd.f32 %v1319, %v1068
    %v1328 = vadd.f32 %v1320, %v1068
    %v1329 = vadd.f32 %v1321, %v1068
    %v1330 = vadd.f32 %v1322, %v1068
    %v1331 = vld [vmem:[#allocation11 + $0xc] sm:$0xf]
    %v1333 = vsel %vm892, %v1323, 0
    %v1336 = vsel %vm892, %v1324, 0
    %v1339 = vsel %vm892, %v1325, 0
    %v1342 = vsel %vm892, %v1326, 0
    %v1345 = vsel %vm892, %v1327, 0
    %v1348 = vsel %vm892, %v1328, 0
    %v1351 = vsel %vm892, %v1329, 0
    %v1354 = vsel %vm892, %v1330, 0
    %v1357 = vsel %vm1158, %v1331, 0
    %1359 = vmatprep.subr.mxu0 0.0
    %1360 = vmatpush1.msra.mxu0 0.0
    %1361 = vmatprep.subr.mxu0 0.0
    %1362 = vmatpush1.msra.mxu0 0.0
    %1363 = vmatprep.subr.mxu0 0.0
    %1364 = vmatpush1.msra.mxu0 0.0
    %1365 = vmatprep.subr.mxu0 0.0
    %1366 = vmatpush1.msra.mxu0 0.0
    %1367 = vmatprep.subr.mxu0 0.0
    %1368 = vmatpush1.msra.mxu0 0.0
    %1369 = vmatprep.subr.mxu0 0.0
    %1370 = vmatpush1.msra.mxu0 0.0
    %1371 = vmatprep.subr.mxu0 0.0
    %1372 = vmatpush1.msra.mxu0 0.0
    %1373 = vmatprep.subr.mxu0 0.0
    %1374 = vmatpush1.msra.mxu0 0.0
    %1375 = vmatprep.subr.mxu0 0.0
    %1376 = vmatpush1.msra.mxu0 0.0
    %1377 = vmatprep.subr.mxu0 0.0
    %1378 = vmatpush1.msra.mxu0 0.0
    %1379 = vmatprep.subr.mxu0 0.0
    %1380 = vmatpush1.msra.mxu0 0.0
    %1381 = vmatprep.subr.mxu0 0.0
    %1382 = vmatpush1.msra.mxu0 0.0
    %1383 = vmatprep.subr.mxu0 0.0
    %1384 = vmatpush1.msra.mxu0 0.0
    %1385 = vmatprep.subr.mxu0 0.0
    %1386 = vmatpush1.msra.mxu0 0.0
    %1387 = vmatprep.subr.mxu0 0.0
    %1388 = vmatpush1.msra.mxu0 0.0
    %1389 = vmatprep.subr.mxu0 0.0
    %1390 = vmatpush1.msra.mxu0 %v1357
    %1391 = vmatprep.subr.mxu0 0.0
    %1392 = vmatpush2.msra.mxu0 0.0
    %1393 = vmatprep.subr.mxu0 0.0
    %1394 = vmatpush2.msra.mxu0 0.0
    %1395 = vmatprep.subr.mxu0 0.0
    %1396 = vmatpush2.msra.mxu0 0.0
    %1397 = vmatprep.subr.mxu0 0.0
    %1398 = vmatpush2.msra.mxu0 0.0
    %1399 = vmatprep.subr.mxu0 0.0
    %1400 = vmatpush2.msra.mxu0 0.0
    %1401 = vmatprep.subr.mxu0 0.0
    %1402 = vmatpush2.msra.mxu0 0.0
    %1403 = vmatprep.subr.mxu0 0.0
    %1404 = vmatpush2.msra.mxu0 0.0
    %1405 = vmatprep.subr.mxu0 0.0
    %1406 = vmatpush2.msra.mxu0 0.0
    %1407 = vmatprep.subr.mxu0 0.0
    %1408 = vmatpush2.msra.mxu0 0.0
    %1409 = vmatprep.subr.mxu0 0.0
    %1410 = vmatpush2.msra.mxu0 0.0
    %1411 = vmatprep.subr.mxu0 0.0
    %1412 = vmatpush2.msra.mxu0 0.0
    %1413 = vmatprep.subr.mxu0 0.0
    %1414 = vmatpush2.msra.mxu0 0.0
    %1415 = vmatprep.subr.mxu0 0.0
    %1416 = vmatpush2.msra.mxu0 0.0
    %1417 = vmatprep.subr.mxu0 0.0
    %1418 = vmatpush2.msra.mxu0 0.0
    %1419 = vmatprep.subr.mxu0 0.0
    %1420 = vmatpush2.msra.mxu0 0.0
    %1421 = vmatprep.subr.mxu0 0.0
    %1422 = vmatpush2.msra.mxu0 0.0
    %1423 = vmatprep.mubr.f32.mxu0 0.0
    %1424 = vmatmul.mubr.f32.gmra.mxu0 %v1333
    %v1425 = vpop.f32.mrf.mxu0
    %v1426 = vadd.f32 0.0, %v1425
    %v1427 = vpop.f32.mrf.mxu0
    %1428 = vmatprep.mubr.f32.mxu0 0.0
    %1429 = vmatmul.mubr.f32.gmra.mxu0 %v1336
    %v1430 = vpop.f32.mrf.mxu0
    %v1431 = vadd.f32 0.0, %v1430
    %v1432 = vpop.f32.mrf.mxu0
    %1433 = vmatprep.mubr.f32.mxu0 0.0
    %1434 = vmatmul.mubr.f32.gmra.mxu0 %v1339
    %v1435 = vpop.f32.mrf.mxu0
    %v1436 = vadd.f32 0.0, %v1435
    %v1437 = vpop.f32.mrf.mxu0
    %1438 = vmatprep.mubr.f32.mxu0 0.0
    %1439 = vmatmul.mubr.f32.gmra.mxu0 %v1342
    %v1440 = vpop.f32.mrf.mxu0
    %v1441 = vadd.f32 0.0, %v1440
    %v1442 = vpop.f32.mrf.mxu0
    %1443 = vmatprep.mubr.f32.mxu0 0.0
    %1444 = vmatmul.mubr.f32.gmra.mxu0 %v1345
    %v1445 = vpop.f32.mrf.mxu0
    %v1446 = vadd.f32 0.0, %v1445
    %v1447 = vpop.f32.mrf.mxu0
    %1448 = vmatprep.mubr.f32.mxu0 0.0
    %1449 = vmatmul.mubr.f32.gmra.mxu0 %v1348
    %v1450 = vpop.f32.mrf.mxu0
    %v1451 = vadd.f32 0.0, %v1450
    %v1452 = vpop.f32.mrf.mxu0
    %1453 = vmatprep.mubr.f32.mxu0 0.0
    %1454 = vmatmul.mubr.f32.gmra.mxu0 %v1351
    %v1455 = vpop.f32.mrf.mxu0
    %v1456 = vadd.f32 0.0, %v1455
    %v1457 = vpop.f32.mrf.mxu0
    %1458 = vmatprep.mubr.f32.mxu0 0.0
    %1459 = vmatmul.mubr.f32.gmra.mxu0 %v1354
    %v1460 = vpop.f32.mrf.mxu0
    %v1461 = vadd.f32 0.0, %v1460
    %v1462 = vpop.f32.mrf.mxu0
    %1463 = vdwg.mxu0
    %v1464 = vadd.f32 %v1267, %v1426
    %v1465 = vadd.f32 %v1268, %v1431
    %v1466 = vadd.f32 %v1269, %v1436
    %v1467 = vadd.f32 %v1270, %v1441
    %v1468 = vadd.f32 %v1271, %v1446
    %v1469 = vadd.f32 %v1272, %v1451
    %v1470 = vadd.f32 %v1273, %v1456
    %v1471 = vadd.f32 %v1274, %v1461
    %s1472 = scalar_lea.vmem [#allocation3], 10
    %v1473 = vld [vmem:[%s1472] ss:$2 sm:$0xff]
    %s1474 = scalar_lea.vmem [#allocation3], 26
    %v1475 = vld [vmem:[%s1474] ss:$2 sm:$0xff]
    %s1476 = scalar_lea.vmem [#allocation3], 42
    %v1477 = vld [vmem:[%s1476] ss:$2 sm:$0xff]
    %s1478 = scalar_lea.vmem [#allocation3], 58
    %v1479 = vld [vmem:[%s1478] ss:$2 sm:$0xff]
    %s1480 = scalar_lea.vmem [#allocation3], 74
    %v1481 = vld [vmem:[%s1480] ss:$2 sm:$0xff]
    %s1482 = scalar_lea.vmem [#allocation3], 90
    %v1483 = vld [vmem:[%s1482] ss:$2 sm:$0xff]
    %s1484 = scalar_lea.vmem [#allocation3], 106
    %v1485 = vld [vmem:[%s1484] ss:$2 sm:$0xff]
    %s1486 = scalar_lea.vmem [#allocation3], 122
    %v1487 = vld [vmem:[%s1486] ss:$2 sm:$0xff]
    %s1488 = scalar_lea.vmem [#allocation3], 11
    %v1489 = vld [vmem:[%s1488] ss:$2 sm:$0xff]
    %s1490 = scalar_lea.vmem [#allocation3], 27
    %v1491 = vld [vmem:[%s1490] ss:$2 sm:$0xff]
    %s1492 = scalar_lea.vmem [#allocation3], 43
    %v1493 = vld [vmem:[%s1492] ss:$2 sm:$0xff]
    %s1494 = scalar_lea.vmem [#allocation3], 59
    %v1495 = vld [vmem:[%s1494] ss:$2 sm:$0xff]
    %s1496 = scalar_lea.vmem [#allocation3], 75
    %v1497 = vld [vmem:[%s1496] ss:$2 sm:$0xff]
    %s1498 = scalar_lea.vmem [#allocation3], 91
    %v1499 = vld [vmem:[%s1498] ss:$2 sm:$0xff]
    %s1500 = scalar_lea.vmem [#allocation3], 107
    %v1501 = vld [vmem:[%s1500] ss:$2 sm:$0xff]
    %s1502 = scalar_lea.vmem [#allocation3], 123
    %v1503 = vld [vmem:[%s1502] ss:$2 sm:$0xff]
    %v1504 = vmax.f32 %v1473, %v1489
    %v1505 = vmax.f32 %v1475, %v1491
    %v1506 = vmax.f32 %v1477, %v1493
    %v1507 = vmax.f32 %v1479, %v1495
    %v1508 = vmax.f32 %v1481, %v1497
    %v1509 = vmax.f32 %v1483, %v1499
    %v1510 = vmax.f32 %v1485, %v1501
    %v1511 = vmax.f32 %v1487, %v1503
    %v1512 = vmul.f32 %v1504, %v1056
    %v1513 = vmul.f32 %v1505, %v1056
    %v1514 = vmul.f32 %v1506, %v1056
    %v1515 = vmul.f32 %v1507, %v1056
    %v1516 = vmul.f32 %v1508, %v1056
    %v1517 = vmul.f32 %v1509, %v1056
    %v1518 = vmul.f32 %v1510, %v1056
    %v1519 = vmul.f32 %v1511, %v1056
    %v1520 = vadd.f32 %v1512, %v1068
    %v1521 = vadd.f32 %v1513, %v1068
    %v1522 = vadd.f32 %v1514, %v1068
    %v1523 = vadd.f32 %v1515, %v1068
    %v1524 = vadd.f32 %v1516, %v1068
    %v1525 = vadd.f32 %v1517, %v1068
    %v1526 = vadd.f32 %v1518, %v1068
    %v1527 = vadd.f32 %v1519, %v1068
    %v1528 = vadd.s32 %v999, 1
    %v1529 = vadd.s32 %v1000, 1
    %v1530 = vadd.s32 %v1001, 1
    %v1531 = vadd.s32 %v1002, 1
    %v1532 = vadd.s32 %v1003, 1
    %v1533 = vadd.s32 %v1004, 1
    %v1534 = vadd.s32 %v1005, 1
    %v1535 = vadd.s32 %v1006, 1
    %vm1536 = vcmp.ge.s32.totalorder %v1528, 0
    %vm1537 = vcmp.ge.s32.totalorder %v1529, 0
    %vm1538 = vcmp.ge.s32.totalorder %v1530, 0
    %vm1539 = vcmp.ge.s32.totalorder %v1531, 0
    %vm1540 = vcmp.ge.s32.totalorder %v1532, 0
    %vm1541 = vcmp.ge.s32.totalorder %v1533, 0
    %vm1542 = vcmp.ge.s32.totalorder %v1534, 0
    %vm1543 = vcmp.ge.s32.totalorder %v1535, 0
    %vm1544 = vcmp.lt.s32.totalorder %v1528, 32
    %vm1545 = vcmp.lt.s32.totalorder %v1529, 32
    %vm1546 = vcmp.lt.s32.totalorder %v1530, 32
    %vm1547 = vcmp.lt.s32.totalorder %v1531, 32
    %vm1548 = vcmp.lt.s32.totalorder %v1532, 32
    %vm1549 = vcmp.lt.s32.totalorder %v1533, 32
    %vm1550 = vcmp.lt.s32.totalorder %v1534, 32
    %vm1551 = vcmp.lt.s32.totalorder %v1535, 32
    %vm1552 = vmand %vm1536, %vm1544
    %vm1553 = vmand %vm1537, %vm1545
    %vm1554 = vmand %vm1538, %vm1546
    %vm1555 = vmand %vm1539, %vm1547
    %vm1556 = vmand %vm1540, %vm1548
    %vm1557 = vmand %vm1541, %vm1549
    %vm1558 = vmand %vm1542, %vm1550
    %vm1559 = vmand %vm1543, %vm1551
    %v1560 = vsel %vm1552, 1, 0
    %v1561 = vsel %vm1553, 1, 0
    %v1562 = vsel %vm1554, 1, 0
    %v1563 = vsel %vm1555, 1, 0
    %v1564 = vsel %vm1556, 1, 0
    %v1565 = vsel %vm1557, 1, 0
    %v1566 = vsel %vm1558, 1, 0
    %v1567 = vsel %vm1559, 1, 0
    %vm1568 = vcmp.eq.s32.totalorder %v1560, 1
    %vm1569 = vcmp.eq.s32.totalorder %v1561, 1
    %vm1570 = vcmp.eq.s32.totalorder %v1562, 1
    %vm1571 = vcmp.eq.s32.totalorder %v1563, 1
    %vm1572 = vcmp.eq.s32.totalorder %v1564, 1
    %vm1573 = vcmp.eq.s32.totalorder %v1565, 1
    %vm1574 = vcmp.eq.s32.totalorder %v1566, 1
    %vm1575 = vcmp.eq.s32.totalorder %v1567, 1
    %v1576 = vsel %vm1568, %v1520, 0.0
    %v1577 = vsel %vm1569, %v1521, 0.0
    %v1578 = vsel %vm1570, %v1522, 0.0
    %v1579 = vsel %vm1571, %v1523, 0.0
    %v1580 = vsel %vm1572, %v1524, 0.0
    %v1581 = vsel %vm1573, %v1525, 0.0
    %v1582 = vsel %vm1574, %v1526, 0.0
    %v1583 = vsel %vm1575, %v1527, 0.0
    %v1584 = vld [vmem:[#allocation11 + $0x10] sm:$0xf]
    %v1586 = vsel %vm892, %v1576, 0
    %v1589 = vsel %vm892, %v1577, 0
    %v1592 = vsel %vm892, %v1578, 0
    %v1595 = vsel %vm892, %v1579, 0
    %v1598 = vsel %vm892, %v1580, 0
    %v1601 = vsel %vm892, %v1581, 0
    %v1604 = vsel %vm892, %v1582, 0
    %v1607 = vsel %vm892, %v1583, 0
    %v1610 = vsel %vm1158, %v1584, 0
    %1612 = vmatprep.subr.mxu0 0.0
    %1613 = vmatpush1.msra.mxu0 0.0
    %1614 = vmatprep.subr.mxu0 0.0
    %1615 = vmatpush1.msra.mxu0 0.0
    %1616 = vmatprep.subr.mxu0 0.0
    %1617 = vmatpush1.msra.mxu0 0.0
    %1618 = vmatprep.subr.mxu0 0.0
    %1619 = vmatpush1.msra.mxu0 0.0
    %1620 = vmatprep.subr.mxu0 0.0
    %1621 = vmatpush1.msra.mxu0 0.0
    %1622 = vmatprep.subr.mxu0 0.0
    %1623 = vmatpush1.msra.mxu0 0.0
    %1624 = vmatprep.subr.mxu0 0.0
    %1625 = vmatpush1.msra.mxu0 0.0
    %1626 = vmatprep.subr.mxu0 0.0
    %1627 = vmatpush1.msra.mxu0 0.0
    %1628 = vmatprep.subr.mxu0 0.0
    %1629 = vmatpush1.msra.mxu0 0.0
    %1630 = vmatprep.subr.mxu0 0.0
    %1631 = vmatpush1.msra.mxu0 0.0
    %1632 = vmatprep.subr.mxu0 0.0
    %1633 = vmatpush1.msra.mxu0 0.0
    %1634 = vmatprep.subr.mxu0 0.0
    %1635 = vmatpush1.msra.mxu0 0.0
    %1636 = vmatprep.subr.mxu0 0.0
    %1637 = vmatpush1.msra.mxu0 0.0
    %1638 = vmatprep.subr.mxu0 0.0
    %1639 = vmatpush1.msra.mxu0 0.0
    %1640 = vmatprep.subr.mxu0 0.0
    %1641 = vmatpush1.msra.mxu0 0.0
    %1642 = vmatprep.subr.mxu0 0.0
    %1643 = vmatpush1.msra.mxu0 %v1610
    %1644 = vmatprep.subr.mxu0 0.0
    %1645 = vmatpush2.msra.mxu0 0.0
    %1646 = vmatprep.subr.mxu0 0.0
    %1647 = vmatpush2.msra.mxu0 0.0
    %1648 = vmatprep.subr.mxu0 0.0
    %1649 = vmatpush2.msra.mxu0 0.0
    %1650 = vmatprep.subr.mxu0 0.0
    %1651 = vmatpush2.msra.mxu0 0.0
    %1652 = vmatprep.subr.mxu0 0.0
    %1653 = vmatpush2.msra.mxu0 0.0
    %1654 = vmatprep.subr.mxu0 0.0
    %1655 = vmatpush2.msra.mxu0 0.0
    %1656 = vmatprep.subr.mxu0 0.0
    %1657 = vmatpush2.msra.mxu0 0.0
    %1658 = vmatprep.subr.mxu0 0.0
    %1659 = vmatpush2.msra.mxu0 0.0
    %1660 = vmatprep.subr.mxu0 0.0
    %1661 = vmatpush2.msra.mxu0 0.0
    %1662 = vmatprep.subr.mxu0 0.0
    %1663 = vmatpush2.msra.mxu0 0.0
    %1664 = vmatprep.subr.mxu0 0.0
    %1665 = vmatpush2.msra.mxu0 0.0
    %1666 = vmatprep.subr.mxu0 0.0
    %1667 = vmatpush2.msra.mxu0 0.0
    %1668 = vmatprep.subr.mxu0 0.0
    %1669 = vmatpush2.msra.mxu0 0.0
    %1670 = vmatprep.subr.mxu0 0.0
    %1671 = vmatpush2.msra.mxu0 0.0
    %1672 = vmatprep.subr.mxu0 0.0
    %1673 = vmatpush2.msra.mxu0 0.0
    %1674 = vmatprep.subr.mxu0 0.0
    %1675 = vmatpush2.msra.mxu0 0.0
    %1676 = vmatprep.mubr.f32.mxu0 0.0
    %1677 = vmatmul.mubr.f32.gmra.mxu0 %v1586
    %v1678 = vpop.f32.mrf.mxu0
    %v1679 = vadd.f32 0.0, %v1678
    %v1680 = vpop.f32.mrf.mxu0
    %1681 = vmatprep.mubr.f32.mxu0 0.0
    %1682 = vmatmul.mubr.f32.gmra.mxu0 %v1589
    %v1683 = vpop.f32.mrf.mxu0
    %v1684 = vadd.f32 0.0, %v1683
    %v1685 = vpop.f32.mrf.mxu0
    %1686 = vmatprep.mubr.f32.mxu0 0.0
    %1687 = vmatmul.mubr.f32.gmra.mxu0 %v1592
    %v1688 = vpop.f32.mrf.mxu0
    %v1689 = vadd.f32 0.0, %v1688
    %v1690 = vpop.f32.mrf.mxu0
    %1691 = vmatprep.mubr.f32.mxu0 0.0
    %1692 = vmatmul.mubr.f32.gmra.mxu0 %v1595
    %v1693 = vpop.f32.mrf.mxu0
    %v1694 = vadd.f32 0.0, %v1693
    %v1695 = vpop.f32.mrf.mxu0
    %1696 = vmatprep.mubr.f32.mxu0 0.0
    %1697 = vmatmul.mubr.f32.gmra.mxu0 %v1598
    %v1698 = vpop.f32.mrf.mxu0
    %v1699 = vadd.f32 0.0, %v1698
    %v1700 = vpop.f32.mrf.mxu0
    %1701 = vmatprep.mubr.f32.mxu0 0.0
    %1702 = vmatmul.mubr.f32.gmra.mxu0 %v1601
    %v1703 = vpop.f32.mrf.mxu0
    %v1704 = vadd.f32 0.0, %v1703
    %v1705 = vpop.f32.mrf.mxu0
    %1706 = vmatprep.mubr.f32.mxu0 0.0
    %1707 = vmatmul.mubr.f32.gmra.mxu0 %v1604
    %v1708 = vpop.f32.mrf.mxu0
    %v1709 = vadd.f32 0.0, %v1708
    %v1710 = vpop.f32.mrf.mxu0
    %1711 = vmatprep.mubr.f32.mxu0 0.0
    %1712 = vmatmul.mubr.f32.gmra.mxu0 %v1607
    %v1713 = vpop.f32.mrf.mxu0
    %v1714 = vadd.f32 0.0, %v1713
    %v1715 = vpop.f32.mrf.mxu0
    %1716 = vdwg.mxu0
    %v1717 = vadd.f32 %v1464, %v1679
    %v1718 = vadd.f32 %v1465, %v1684
    %v1719 = vadd.f32 %v1466, %v1689
    %v1720 = vadd.f32 %v1467, %v1694
    %v1721 = vadd.f32 %v1468, %v1699
    %v1722 = vadd.f32 %v1469, %v1704
    %v1723 = vadd.f32 %v1470, %v1709
    %v1724 = vadd.f32 %v1471, %v1714
    %v1725 = vmax.f32 %v1717, 0.0
    %v1726 = vmax.f32 %v1718, 0.0
    %v1727 = vmax.f32 %v1719, 0.0
    %v1728 = vmax.f32 %v1720, 0.0
    %v1729 = vmax.f32 %v1721, 0.0
    %v1730 = vmax.f32 %v1722, 0.0
    %v1731 = vmax.f32 %v1723, 0.0
    %v1732 = vmax.f32 %v1724, 0.0
    %vm1733 = vcmask 64512
    %1734 = vst.msk [vmem:[#allocation4 + $0x8] sm:$0xff] %vm1733, %v1725
    %1735 = vst.msk [vmem:[#allocation4 + $0x10] sm:$0xff] %vm1733, %v1726
    %1736 = vst.msk [vmem:[#allocation4 + $0x18] sm:$0xff] %vm1733, %v1727
    %1737 = vst.msk [vmem:[#allocation4 + $0x20] sm:$0xff] %vm1733, %v1728
    %1738 = vst.msk [vmem:[#allocation4 + $0x28] sm:$0xff] %vm1733, %v1729
    %1739 = vst.msk [vmem:[#allocation4 + $0x30] sm:$0xff] %vm1733, %v1730
    %1740 = vst.msk [vmem:[#allocation4 + $0x38] sm:$0xff] %vm1733, %v1731
    %1741 = vst.msk [vmem:[#allocation4 + $0x40] sm:$0xff] %vm1733, %v1732
    %v1742 = vld [vmem:[%s2 + $0x5] sm:$0x1]
    %v1743 = vlaneseq
    %v1744 = vshrl.u32 %v1743, 7
    %v1745 = vsub.s32 0, %v1744
    %v1746 = vrot.slane %v1742, %v1745
    %v1747 = vadd.f32 %v1746, 0.0
    %v1748 = vld [vmem:[#allocation4 + $0x7] sm:$0xff]
    %v1749 = vld [vmem:[#allocation4 + $0xf] sm:$0xff]
    %v1750 = vld [vmem:[#allocation4 + $0x17] sm:$0xff]
    %v1751 = vld [vmem:[#allocation4 + $0x1f] sm:$0xff]
    %v1752 = vld [vmem:[#allocation4 + $0x27] sm:$0xff]
    %v1753 = vld [vmem:[#allocation4 + $0x2f] sm:$0xff]
    %v1754 = vld [vmem:[#allocation4 + $0x37] sm:$0xff]
    %v1755 = vld [vmem:[#allocation4 + $0x3f] sm:$0xff]
    %v1756 = vsel %vm1117, %v1748, 0.0
    %v1757 = vsel %vm1118, %v1749, 0.0
    %v1758 = vsel %vm1119, %v1750, 0.0
    %v1759 = vsel %vm1120, %v1751, 0.0
    %v1760 = vsel %vm1121, %v1752, 0.0
    %v1761 = vsel %vm1122, %v1753, 0.0
    %v1762 = vsel %vm1123, %v1754, 0.0
    %v1763 = vsel %vm1124, %v1755, 0.0
    %v1764 = vld [vmem:[#allocation11 + $0x18] sm:$0xff]
    %v1766 = vsel %vm1733, %v1756, 0
    %v1769 = vsel %vm1733, %v1757, 0
    %v1772 = vsel %vm1733, %v1758, 0
    %v1775 = vsel %vm1733, %v1759, 0
    %v1778 = vsel %vm1733, %v1760, 0
    %v1781 = vsel %vm1733, %v1761, 0
    %v1784 = vsel %vm1733, %v1762, 0
    %v1787 = vsel %vm1733, %v1763, 0
    %1789 = vmatprep.subr.mxu0 0.0
    %1790 = vmatpush1.msra.mxu0 0.0
    %1791 = vmatprep.subr.mxu0 0.0
    %1792 = vmatpush1.msra.mxu0 0.0
    %1793 = vmatprep.subr.mxu0 0.0
    %1794 = vmatpush1.msra.mxu0 0.0
    %1795 = vmatprep.subr.mxu0 0.0
    %1796 = vmatpush1.msra.mxu0 0.0
    %1797 = vmatprep.subr.mxu0 0.0
    %1798 = vmatpush1.msra.mxu0 0.0
    %1799 = vmatprep.subr.mxu0 0.0
    %1800 = vmatpush1.msra.mxu0 0.0
    %1801 = vmatprep.subr.mxu0 0.0
    %1802 = vmatpush1.msra.mxu0 0.0
    %1803 = vmatprep.subr.mxu0 0.0
    %1804 = vmatpush1.msra.mxu0 0.0
    %1805 = vmatprep.subr.mxu0 0.0
    %1806 = vmatpush1.msra.mxu0 0.0
    %1807 = vmatprep.subr.mxu0 0.0
    %1808 = vmatpush1.msra.mxu0 0.0
    %1809 = vmatprep.subr.mxu0 0.0
    %1810 = vmatpush1.msra.mxu0 0.0
    %1811 = vmatprep.subr.mxu0 0.0
    %1812 = vmatpush1.msra.mxu0 0.0
    %1813 = vmatprep.subr.mxu0 0.0
    %1814 = vmatpush1.msra.mxu0 0.0
    %1815 = vmatprep.subr.mxu0 0.0
    %1816 = vmatpush1.msra.mxu0 0.0
    %1817 = vmatprep.subr.mxu0 0.0
    %1818 = vmatpush1.msra.mxu0 0.0
    %1819 = vmatprep.subr.mxu0 0.0
    %1820 = vmatpush1.msra.mxu0 %v1764
    %1821 = vmatprep.subr.mxu0 0.0
    %1822 = vmatpush2.msra.mxu0 0.0
    %1823 = vmatprep.subr.mxu0 0.0
    %1824 = vmatpush2.msra.mxu0 0.0
    %1825 = vmatprep.subr.mxu0 0.0
    %1826 = vmatpush2.msra.mxu0 0.0
    %1827 = vmatprep.subr.mxu0 0.0
    %1828 = vmatpush2.msra.mxu0 0.0
    %1829 = vmatprep.subr.mxu0 0.0
    %1830 = vmatpush2.msra.mxu0 0.0
    %1831 = vmatprep.subr.mxu0 0.0
    %1832 = vmatpush2.msra.mxu0 0.0
    %1833 = vmatprep.subr.mxu0 0.0
    %1834 = vmatpush2.msra.mxu0 0.0
    %1835 = vmatprep.subr.mxu0 0.0
    %1836 = vmatpush2.msra.mxu0 0.0
    %1837 = vmatprep.subr.mxu0 0.0
    %1838 = vmatpush2.msra.mxu0 0.0
    %1839 = vmatprep.subr.mxu0 0.0
    %1840 = vmatpush2.msra.mxu0 0.0
    %1841 = vmatprep.subr.mxu0 0.0
    %1842 = vmatpush2.msra.mxu0 0.0
    %1843 = vmatprep.subr.mxu0 0.0
    %1844 = vmatpush2.msra.mxu0 0.0
    %1845 = vmatprep.subr.mxu0 0.0
    %1846 = vmatpush2.msra.mxu0 0.0
    %1847 = vmatprep.subr.mxu0 0.0
    %1848 = vmatpush2.msra.mxu0 0.0
    %1849 = vmatprep.subr.mxu0 0.0
    %1850 = vmatpush2.msra.mxu0 0.0
    %1851 = vmatprep.subr.mxu0 0.0
    %1852 = vmatpush2.msra.mxu0 0.0
    %1853 = vmatprep.mubr.f32.mxu0 0.0
    %1854 = vmatmul.mubr.f32.gmra.mxu0 %v1766
    %v1855 = vpop.f32.mrf.mxu0
    %v1856 = vadd.f32 0.0, %v1855
    %v1857 = vpop.f32.mrf.mxu0
    %1858 = vmatprep.mubr.f32.mxu0 0.0
    %1859 = vmatmul.mubr.f32.gmra.mxu0 %v1769
    %v1860 = vpop.f32.mrf.mxu0
    %v1861 = vadd.f32 0.0, %v1860
    %v1862 = vpop.f32.mrf.mxu0
    %1863 = vmatprep.mubr.f32.mxu0 0.0
    %1864 = vmatmul.mubr.f32.gmra.mxu0 %v1772
    %v1865 = vpop.f32.mrf.mxu0
    %v1866 = vadd.f32 0.0, %v1865
    %v1867 = vpop.f32.mrf.mxu0
    %1868 = vmatprep.mubr.f32.mxu0 0.0
    %1869 = vmatmul.mubr.f32.gmra.mxu0 %v1775
    %v1870 = vpop.f32.mrf.mxu0
    %v1871 = vadd.f32 0.0, %v1870
    %v1872 = vpop.f32.mrf.mxu0
    %1873 = vmatprep.mubr.f32.mxu0 0.0
    %1874 = vmatmul.mubr.f32.gmra.mxu0 %v1778
    %v1875 = vpop.f32.mrf.mxu0
    %v1876 = vadd.f32 0.0, %v1875
    %v1877 = vpop.f32.mrf.mxu0
    %1878 = vmatprep.mubr.f32.mxu0 0.0
    %1879 = vmatmul.mubr.f32.gmra.mxu0 %v1781
    %v1880 = vpop.f32.mrf.mxu0
    %v1881 = vadd.f32 0.0, %v1880
    %v1882 = vpop.f32.mrf.mxu0
    %1883 = vmatprep.mubr.f32.mxu0 0.0
    %1884 = vmatmul.mubr.f32.gmra.mxu0 %v1784
    %v1885 = vpop.f32.mrf.mxu0
    %v1886 = vadd.f32 0.0, %v1885
    %v1887 = vpop.f32.mrf.mxu0
    %1888 = vmatprep.mubr.f32.mxu0 0.0
    %1889 = vmatmul.mubr.f32.gmra.mxu0 %v1787
    %v1890 = vpop.f32.mrf.mxu0
    %v1891 = vadd.f32 0.0, %v1890
    %v1892 = vpop.f32.mrf.mxu0
    %1893 = vdwg.mxu0
    %v1894 = vadd.f32 %v1747, %v1856
    %v1895 = vadd.f32 %v1747, %v1861
    %v1896 = vadd.f32 %v1747, %v1866
    %v1897 = vadd.f32 %v1747, %v1871
    %v1898 = vadd.f32 %v1747, %v1876
    %v1899 = vadd.f32 %v1747, %v1881
    %v1900 = vadd.f32 %v1747, %v1886
    %v1901 = vadd.f32 %v1747, %v1891
    %v1902 = vld [vmem:[#allocation11 + $0x20] sm:$0xff]
    %v1904 = vsel %vm1733, %v1725, 0
    %v1907 = vsel %vm1733, %v1726, 0
    %v1910 = vsel %vm1733, %v1727, 0
    %v1913 = vsel %vm1733, %v1728, 0
    %v1916 = vsel %vm1733, %v1729, 0
    %v1919 = vsel %vm1733, %v1730, 0
    %v1922 = vsel %vm1733, %v1731, 0
    %v1925 = vsel %vm1733, %v1732, 0
    %1927 = vmatprep.subr.mxu0 0.0
    %1928 = vmatpush1.msra.mxu0 0.0
    %1929 = vmatprep.subr.mxu0 0.0
    %1930 = vmatpush1.msra.mxu0 0.0
    %1931 = vmatprep.subr.mxu0 0.0
    %1932 = vmatpush1.msra.mxu0 0.0
    %1933 = vmatprep.subr.mxu0 0.0
    %1934 = vmatpush1.msra.mxu0 0.0
    %1935 = vmatprep.subr.mxu0 0.0
    %1936 = vmatpush1.msra.mxu0 0.0
    %1937 = vmatprep.subr.mxu0 0.0
    %1938 = vmatpush1.msra.mxu0 0.0
    %1939 = vmatprep.subr.mxu0 0.0
    %1940 = vmatpush1.msra.mxu0 0.0
    %1941 = vmatprep.subr.mxu0 0.0
    %1942 = vmatpush1.msra.mxu0 0.0
    %1943 = vmatprep.subr.mxu0 0.0
    %1944 = vmatpush1.msra.mxu0 0.0
    %1945 = vmatprep.subr.mxu0 0.0
    %1946 = vmatpush1.msra.mxu0 0.0
    %1947 = vmatprep.subr.mxu0 0.0
    %1948 = vmatpush1.msra.mxu0 0.0
    %1949 = vmatprep.subr.mxu0 0.0
    %1950 = vmatpush1.msra.mxu0 0.0
    %1951 = vmatprep.subr.mxu0 0.0
    %1952 = vmatpush1.msra.mxu0 0.0
    %1953 = vmatprep.subr.mxu0 0.0
    %1954 = vmatpush1.msra.mxu0 0.0
    %1955 = vmatprep.subr.mxu0 0.0
    %1956 = vmatpush1.msra.mxu0 0.0
    %1957 = vmatprep.subr.mxu0 0.0
    %1958 = vmatpush1.msra.mxu0 %v1902
    %1959 = vmatprep.subr.mxu0 0.0
    %1960 = vmatpush2.msra.mxu0 0.0
    %1961 = vmatprep.subr.mxu0 0.0
    %1962 = vmatpush2.msra.mxu0 0.0
    %1963 = vmatprep.subr.mxu0 0.0
    %1964 = vmatpush2.msra.mxu0 0.0
    %1965 = vmatprep.subr.mxu0 0.0
    %1966 = vmatpush2.msra.mxu0 0.0
    %1967 = vmatprep.subr.mxu0 0.0
    %1968 = vmatpush2.msra.mxu0 0.0
    %1969 = vmatprep.subr.mxu0 0.0
    %1970 = vmatpush2.msra.mxu0 0.0
    %1971 = vmatprep.subr.mxu0 0.0
    %1972 = vmatpush2.msra.mxu0 0.0
    %1973 = vmatprep.subr.mxu0 0.0
    %1974 = vmatpush2.msra.mxu0 0.0
    %1975 = vmatprep.subr.mxu0 0.0
    %1976 = vmatpush2.msra.mxu0 0.0
    %1977 = vmatprep.subr.mxu0 0.0
    %1978 = vmatpush2.msra.mxu0 0.0
    %1979 = vmatprep.subr.mxu0 0.0
    %1980 = vmatpush2.msra.mxu0 0.0
    %1981 = vmatprep.subr.mxu0 0.0
    %1982 = vmatpush2.msra.mxu0 0.0
    %1983 = vmatprep.subr.mxu0 0.0
    %1984 = vmatpush2.msra.mxu0 0.0
    %1985 = vmatprep.subr.mxu0 0.0
    %1986 = vmatpush2.msra.mxu0 0.0
    %1987 = vmatprep.subr.mxu0 0.0
    %1988 = vmatpush2.msra.mxu0 0.0
    %1989 = vmatprep.subr.mxu0 0.0
    %1990 = vmatpush2.msra.mxu0 0.0
    %1991 = vmatprep.mubr.f32.mxu0 0.0
    %1992 = vmatmul.mubr.f32.gmra.mxu0 %v1904
    %v1993 = vpop.f32.mrf.mxu0
    %v1994 = vadd.f32 0.0, %v1993
    %v1995 = vpop.f32.mrf.mxu0
    %1996 = vmatprep.mubr.f32.mxu0 0.0
    %1997 = vmatmul.mubr.f32.gmra.mxu0 %v1907
    %v1998 = vpop.f32.mrf.mxu0
    %v1999 = vadd.f32 0.0, %v1998
    %v2000 = vpop.f32.mrf.mxu0
    %2001 = vmatprep.mubr.f32.mxu0 0.0
    %2002 = vmatmul.mubr.f32.gmra.mxu0 %v1910
    %v2003 = vpop.f32.mrf.mxu0
    %v2004 = vadd.f32 0.0, %v2003
    %v2005 = vpop.f32.mrf.mxu0
    %2006 = vmatprep.mubr.f32.mxu0 0.0
    %2007 = vmatmul.mubr.f32.gmra.mxu0 %v1913
    %v2008 = vpop.f32.mrf.mxu0
    %v2009 = vadd.f32 0.0, %v2008
    %v2010 = vpop.f32.mrf.mxu0
    %2011 = vmatprep.mubr.f32.mxu0 0.0
    %2012 = vmatmul.mubr.f32.gmra.mxu0 %v1916
    %v2013 = vpop.f32.mrf.mxu0
    %v2014 = vadd.f32 0.0, %v2013
    %v2015 = vpop.f32.mrf.mxu0
    %2016 = vmatprep.mubr.f32.mxu0 0.0
    %2017 = vmatmul.mubr.f32.gmra.mxu0 %v1919
    %v2018 = vpop.f32.mrf.mxu0
    %v2019 = vadd.f32 0.0, %v2018
    %v2020 = vpop.f32.mrf.mxu0
    %2021 = vmatprep.mubr.f32.mxu0 0.0
    %2022 = vmatmul.mubr.f32.gmra.mxu0 %v1922
    %v2023 = vpop.f32.mrf.mxu0
    %v2024 = vadd.f32 0.0, %v2023
    %v2025 = vpop.f32.mrf.mxu0
    %2026 = vmatprep.mubr.f32.mxu0 0.0
    %2027 = vmatmul.mubr.f32.gmra.mxu0 %v1925
    %v2028 = vpop.f32.mrf.mxu0
    %v2029 = vadd.f32 0.0, %v2028
    %v2030 = vpop.f32.mrf.mxu0
    %2031 = vdwg.mxu0
    %v2032 = vadd.f32 %v1894, %v1994
    %v2033 = vadd.f32 %v1895, %v1999
    %v2034 = vadd.f32 %v1896, %v2004
    %v2035 = vadd.f32 %v1897, %v2009
    %v2036 = vadd.f32 %v1898, %v2014
    %v2037 = vadd.f32 %v1899, %v2019
    %v2038 = vadd.f32 %v1900, %v2024
    %v2039 = vadd.f32 %v1901, %v2029
    %v2040 = vld [vmem:[#allocation4 + $0x9] sm:$0xff]
    %v2041 = vld [vmem:[#allocation4 + $0x11] sm:$0xff]
    %v2042 = vld [vmem:[#allocation4 + $0x19] sm:$0xff]
    %v2043 = vld [vmem:[#allocation4 + $0x21] sm:$0xff]
    %v2044 = vld [vmem:[#allocation4 + $0x29] sm:$0xff]
    %v2045 = vld [vmem:[#allocation4 + $0x31] sm:$0xff]
    %v2046 = vld [vmem:[#allocation4 + $0x39] sm:$0xff]
    %v2047 = vld [vmem:[#allocation4 + $0x41] sm:$0xff]
    %v2048 = vsel %vm1568, %v2040, 0.0
    %v2049 = vsel %vm1569, %v2041, 0.0
    %v2050 = vsel %vm1570, %v2042, 0.0
    %v2051 = vsel %vm1571, %v2043, 0.0
    %v2052 = vsel %vm1572, %v2044, 0.0
    %v2053 = vsel %vm1573, %v2045, 0.0
    %v2054 = vsel %vm1574, %v2046, 0.0
    %v2055 = vsel %vm1575, %v2047, 0.0
    %v2056 = vld [vmem:[#allocation11 + $0x28] sm:$0xff]
    %v2058 = vsel %vm1733, %v2048, 0
    %v2061 = vsel %vm1733, %v2049, 0
    %v2064 = vsel %vm1733, %v2050, 0
    %v2067 = vsel %vm1733, %v2051, 0
    %v2070 = vsel %vm1733, %v2052, 0
    %v2073 = vsel %vm1733, %v2053, 0
    %v2076 = vsel %vm1733, %v2054, 0
    %v2079 = vsel %vm1733, %v2055, 0
    %2081 = vmatprep.subr.mxu0 0.0
    %2082 = vmatpush1.msra.mxu0 0.0
    %2083 = vmatprep.subr.mxu0 0.0
    %2084 = vmatpush1.msra.mxu0 0.0
    %2085 = vmatprep.subr.mxu0 0.0
    %2086 = vmatpush1.msra.mxu0 0.0
    %2087 = vmatprep.subr.mxu0 0.0
    %2088 = vmatpush1.msra.mxu0 0.0
    %2089 = vmatprep.subr.mxu0 0.0
    %2090 = vmatpush1.msra.mxu0 0.0
    %2091 = vmatprep.subr.mxu0 0.0
    %2092 = vmatpush1.msra.mxu0 0.0
    %2093 = vmatprep.subr.mxu0 0.0
    %2094 = vmatpush1.msra.mxu0 0.0
    %2095 = vmatprep.subr.mxu0 0.0
    %2096 = vmatpush1.msra.mxu0 0.0
    %2097 = vmatprep.subr.mxu0 0.0
    %2098 = vmatpush1.msra.mxu0 0.0
    %2099 = vmatprep.subr.mxu0 0.0
    %2100 = vmatpush1.msra.mxu0 0.0
    %2101 = vmatprep.subr.mxu0 0.0
    %2102 = vmatpush1.msra.mxu0 0.0
    %2103 = vmatprep.subr.mxu0 0.0
    %2104 = vmatpush1.msra.mxu0 0.0
    %2105 = vmatprep.subr.mxu0 0.0
    %2106 = vmatpush1.msra.mxu0 0.0
    %2107 = vmatprep.subr.mxu0 0.0
    %2108 = vmatpush1.msra.mxu0 0.0
    %2109 = vmatprep.subr.mxu0 0.0
    %2110 = vmatpush1.msra.mxu0 0.0
    %2111 = vmatprep.subr.mxu0 0.0
    %2112 = vmatpush1.msra.mxu0 %v2056
    %2113 = vmatprep.subr.mxu0 0.0
    %2114 = vmatpush2.msra.mxu0 0.0
    %2115 = vmatprep.subr.mxu0 0.0
    %2116 = vmatpush2.msra.mxu0 0.0
    %2117 = vmatprep.subr.mxu0 0.0
    %2118 = vmatpush2.msra.mxu0 0.0
    %2119 = vmatprep.subr.mxu0 0.0
    %2120 = vmatpush2.msra.mxu0 0.0
    %2121 = vmatprep.subr.mxu0 0.0
    %2122 = vmatpush2.msra.mxu0 0.0
    %2123 = vmatprep.subr.mxu0 0.0
    %2124 = vmatpush2.msra.mxu0 0.0
    %2125 = vmatprep.subr.mxu0 0.0
    %2126 = vmatpush2.msra.mxu0 0.0
    %2127 = vmatprep.subr.mxu0 0.0
    %2128 = vmatpush2.msra.mxu0 0.0
    %2129 = vmatprep.subr.mxu0 0.0
    %2130 = vmatpush2.msra.mxu0 0.0
    %2131 = vmatprep.subr.mxu0 0.0
    %2132 = vmatpush2.msra.mxu0 0.0
    %2133 = vmatprep.subr.mxu0 0.0
    %2134 = vmatpush2.msra.mxu0 0.0
    %2135 = vmatprep.subr.mxu0 0.0
    %2136 = vmatpush2.msra.mxu0 0.0
    %2137 = vmatprep.subr.mxu0 0.0
    %2138 = vmatpush2.msra.mxu0 0.0
    %2139 = vmatprep.subr.mxu0 0.0
    %2140 = vmatpush2.msra.mxu0 0.0
    %2141 = vmatprep.subr.mxu0 0.0
    %2142 = vmatpush2.msra.mxu0 0.0
    %2143 = vmatprep.subr.mxu0 0.0
    %2144 = vmatpush2.msra.mxu0 0.0
    %2145 = vmatprep.mubr.f32.mxu0 0.0
    %2146 = vmatmul.mubr.f32.gmra.mxu0 %v2058
    %v2147 = vpop.f32.mrf.mxu0
    %v2148 = vadd.f32 0.0, %v2147
    %v2149 = vpop.f32.mrf.mxu0
    %2150 = vmatprep.mubr.f32.mxu0 0.0
    %2151 = vmatmul.mubr.f32.gmra.mxu0 %v2061
    %v2152 = vpop.f32.mrf.mxu0
    %v2153 = vadd.f32 0.0, %v2152
    %v2154 = vpop.f32.mrf.mxu0
    %2155 = vmatprep.mubr.f32.mxu0 0.0
    %2156 = vmatmul.mubr.f32.gmra.mxu0 %v2064
    %v2157 = vpop.f32.mrf.mxu0
    %v2158 = vadd.f32 0.0, %v2157
    %v2159 = vpop.f32.mrf.mxu0
    %2160 = vmatprep.mubr.f32.mxu0 0.0
    %2161 = vmatmul.mubr.f32.gmra.mxu0 %v2067
    %v2162 = vpop.f32.mrf.mxu0
    %v2163 = vadd.f32 0.0, %v2162
    %v2164 = vpop.f32.mrf.mxu0
    %2165 = vmatprep.mubr.f32.mxu0 0.0
    %2166 = vmatmul.mubr.f32.gmra.mxu0 %v2070
    %v2167 = vpop.f32.mrf.mxu0
    %v2168 = vadd.f32 0.0, %v2167
    %v2169 = vpop.f32.mrf.mxu0
    %2170 = vmatprep.mubr.f32.mxu0 0.0
    %2171 = vmatmul.mubr.f32.gmra.mxu0 %v2073
    %v2172 = vpop.f32.mrf.mxu0
    %v2173 = vadd.f32 0.0, %v2172
    %v2174 = vpop.f32.mrf.mxu0
    %2175 = vmatprep.mubr.f32.mxu0 0.0
    %2176 = vmatmul.mubr.f32.gmra.mxu0 %v2076
    %v2177 = vpop.f32.mrf.mxu0
    %v2178 = vadd.f32 0.0, %v2177
    %v2179 = vpop.f32.mrf.mxu0
    %2180 = vmatprep.mubr.f32.mxu0 0.0
    %2181 = vmatmul.mubr.f32.gmra.mxu0 %v2079
    %v2182 = vpop.f32.mrf.mxu0
    %v2183 = vadd.f32 0.0, %v2182
    %v2184 = vpop.f32.mrf.mxu0
    %2185 = vdwg.mxu0
    %v2186 = vadd.f32 %v2032, %v2148
    %v2187 = vadd.f32 %v2033, %v2153
    %v2188 = vadd.f32 %v2034, %v2158
    %v2189 = vadd.f32 %v2035, %v2163
    %v2190 = vadd.f32 %v2036, %v2168
    %v2191 = vadd.f32 %v2037, %v2173
    %v2192 = vadd.f32 %v2038, %v2178
    %v2193 = vadd.f32 %v2039, %v2183
    %v2194 = vmax.f32 %v2186, 0.0
    %v2195 = vmax.f32 %v2187, 0.0
    %v2196 = vmax.f32 %v2188, 0.0
    %v2197 = vmax.f32 %v2189, 0.0
    %v2198 = vmax.f32 %v2190, 0.0
    %v2199 = vmax.f32 %v2191, 0.0
    %v2200 = vmax.f32 %v2192, 0.0
    %v2201 = vmax.f32 %v2193, 0.0
    %vm2202 = vcmask 130048
    %2203 = vst.msk [vmem:[#allocation5 + $0x8] sm:$0xff] %vm2202, %v2194
    %2204 = vst.msk [vmem:[#allocation5 + $0x10] sm:$0xff] %vm2202, %v2195
    %2205 = vst.msk [vmem:[#allocation5 + $0x18] sm:$0xff] %vm2202, %v2196
    %2206 = vst.msk [vmem:[#allocation5 + $0x20] sm:$0xff] %vm2202, %v2197
    %2207 = vst.msk [vmem:[#allocation5 + $0x28] sm:$0xff] %vm2202, %v2198
    %2208 = vst.msk [vmem:[#allocation5 + $0x30] sm:$0xff] %vm2202, %v2199
    %2209 = vst.msk [vmem:[#allocation5 + $0x38] sm:$0xff] %vm2202, %v2200
    %2210 = vst.msk [vmem:[#allocation5 + $0x40] sm:$0xff] %vm2202, %v2201
    %v2211 = vld [vmem:[%s2 + $0x6] sm:$0x1]
    %v2212 = vld [vmem:[%s2 + $0x7] sm:$0x1]
    %vm2213 = vcmp.lt.s32.totalorder %v119, 0
    %v2214 = vsub.s32 0, %v119
    %v2215 = vsel %vm2213, %v2214, %v119
    %v2216 = vshrl.u32 %v2215, 4
    %v2217 = vand.u32 %v2215, 15
    %v2218 = vsub.s32 0, %v2217
    %v2219 = vsel %vm2213, %v2218, %v2217
    %vm2220 = vcmp.lt.s32.totalorder %v120, 0
    %v2221 = vsub.s32 0, %v120
    %v2222 = vsel %vm2220, %v2221, %v120
    %v2223 = vshrl.u32 %v2222, 4
    %v2224 = vand.u32 %v2222, 15
    %v2225 = vsub.s32 0, %v2224
    %v2226 = vsel %vm2220, %v2225, %v2224
    %vm2227 = vcmp.lt.s32.totalorder %v121, 0
    %v2228 = vsub.s32 0, %v121
    %v2229 = vsel %vm2227, %v2228, %v121
    %v2230 = vshrl.u32 %v2229, 4
    %v2231 = vand.u32 %v2229, 15
    %v2232 = vsub.s32 0, %v2231
    %v2233 = vsel %vm2227, %v2232, %v2231
    %vm2234 = vcmp.lt.s32.totalorder %v122, 0
    %v2235 = vsub.s32 0, %v122
    %v2236 = vsel %vm2234, %v2235, %v122
    %v2237 = vshrl.u32 %v2236, 4
    %v2238 = vand.u32 %v2236, 15
    %v2239 = vsub.s32 0, %v2238
    %v2240 = vsel %vm2234, %v2239, %v2238
    %vm2241 = vcmp.ne.s32.totalorder %v2219, 0
    %vm2242 = vcmp.ne.s32.totalorder %v2226, 0
    %vm2243 = vcmp.ne.s32.totalorder %v2233, 0
    %vm2244 = vcmp.ne.s32.totalorder %v2240, 0
    %vm2245 = vcmp.lt.s32.totalorder %v2219, 0
    %vm2246 = vcmp.lt.s32.totalorder %v2226, 0
    %vm2247 = vcmp.lt.s32.totalorder %v2233, 0
    %vm2248 = vcmp.lt.s32.totalorder %v2240, 0
    %vm2249 = vmand %vm2245, %vm2241
    %vm2250 = vmand %vm2246, %vm2242
    %vm2251 = vmand %vm2247, %vm2243
    %vm2252 = vmand %vm2248, %vm2244
    %v2253 = vadd.s32 %v2219, 16
    %v2254 = vadd.s32 %v2226, 16
    %v2255 = vadd.s32 %v2233, 16
    %v2256 = vadd.s32 %v2240, 16
    %v2257 = vsel %vm2249, %v2253, %v2219
    %v2258 = vsel %vm2250, %v2254, %v2226
    %v2259 = vsel %vm2251, %v2255, %v2233
    %v2260 = vsel %vm2252, %v2256, %v2240
    %v2261 = vld [vmem:[%s2 + $0x8] sm:$0x1]
    %v2262 = vlaneseq
    %v2263 = vshrl.u32 %v2262, 7
    %v2264 = vsub.s32 0, %v2263
    %v2265 = vrot.slane %v2261, %v2264
    %v2266 = vadd.f32 %v2265, 0.0
    %s2267 = scalar_lea.vmem [#allocation5], 6
    %v2268 = vld [vmem:[%s2267] ss:$2 sm:$0xff]
    %s2269 = scalar_lea.vmem [#allocation5], 22
    %v2270 = vld [vmem:[%s2269] ss:$2 sm:$0xff]
    %s2271 = scalar_lea.vmem [#allocation5], 38
    %v2272 = vld [vmem:[%s2271] ss:$2 sm:$0xff]
    %s2273 = scalar_lea.vmem [#allocation5], 54
    %v2274 = vld [vmem:[%s2273] ss:$2 sm:$0xff]
    %s2275 = scalar_lea.vmem [#allocation5], 7
    %v2276 = vld [vmem:[%s2275] ss:$2 sm:$0xff]
    %s2277 = scalar_lea.vmem [#allocation5], 23
    %v2278 = vld [vmem:[%s2277] ss:$2 sm:$0xff]
    %s2279 = scalar_lea.vmem [#allocation5], 39
    %v2280 = vld [vmem:[%s2279] ss:$2 sm:$0xff]
    %s2281 = scalar_lea.vmem [#allocation5], 55
    %v2282 = vld [vmem:[%s2281] ss:$2 sm:$0xff]
    %v2283 = vmax.f32 %v2268, %v2276
    %v2284 = vmax.f32 %v2270, %v2278
    %v2285 = vmax.f32 %v2272, %v2280
    %v2286 = vmax.f32 %v2274, %v2282
    %v2287 = vlaneseq
    %v2288 = vshrl.u32 %v2287, 7
    %v2289 = vsub.s32 0, %v2288
    %v2290 = vrot.slane %v2211, %v2289
    %v2291 = vmul.f32 %v2283, %v2290
    %v2292 = vmul.f32 %v2284, %v2290
    %v2293 = vmul.f32 %v2285, %v2290
    %v2294 = vmul.f32 %v2286, %v2290
    %v2295 = vlaneseq
    %v2296 = vshrl.u32 %v2295, 7
    %v2297 = vsub.s32 0, %v2296
    %v2298 = vrot.slane %v2212, %v2297
    %v2299 = vadd.f32 %v2291, %v2298
    %v2300 = vadd.f32 %v2292, %v2298
    %v2301 = vadd.f32 %v2293, %v2298
    %v2302 = vadd.f32 %v2294, %v2298
    %v2303 = vadd.s32 %v2257, 4294967295
    %v2304 = vadd.s32 %v2258, 4294967295
    %v2305 = vadd.s32 %v2259, 4294967295
    %v2306 = vadd.s32 %v2260, 4294967295
    %vm2307 = vcmp.ge.s32.totalorder %v2303, 0
    %vm2308 = vcmp.ge.s32.totalorder %v2304, 0
    %vm2309 = vcmp.ge.s32.totalorder %v2305, 0
    %vm2310 = vcmp.ge.s32.totalorder %v2306, 0
    %vm2311 = vcmp.lt.s32.totalorder %v2303, 16
    %vm2312 = vcmp.lt.s32.totalorder %v2304, 16
    %vm2313 = vcmp.lt.s32.totalorder %v2305, 16
    %vm2314 = vcmp.lt.s32.totalorder %v2306, 16
    %vm2315 = vmand %vm2307, %vm2311
    %vm2316 = vmand %vm2308, %vm2312
    %vm2317 = vmand %vm2309, %vm2313
    %vm2318 = vmand %vm2310, %vm2314
    %v2319 = vsel %vm2315, 1, 0
    %v2320 = vsel %vm2316, 1, 0
    %v2321 = vsel %vm2317, 1, 0
    %v2322 = vsel %vm2318, 1, 0
    %vm2323 = vcmp.eq.s32.totalorder %v2319, 1
    %vm2324 = vcmp.eq.s32.totalorder %v2320, 1
    %vm2325 = vcmp.eq.s32.totalorder %v2321, 1
    %vm2326 = vcmp.eq.s32.totalorder %v2322, 1
    %v2327 = vsel %vm2323, %v2299, 0.0
    %v2328 = vsel %vm2324, %v2300, 0.0
    %v2329 = vsel %vm2325, %v2301, 0.0
    %v2330 = vsel %vm2326, %v2302, 0.0
    %v2331 = vld [vmem:[#allocation11 + $0x30] sm:$0xff]
    %v2332 = vld [vmem:[#allocation11 + $0x38] sm:$0xff]
    %v2334 = vsel %vm2202, %v2327, 0
    %v2337 = vsel %vm2202, %v2328, 0
    %v2340 = vsel %vm2202, %v2329, 0
    %v2343 = vsel %vm2202, %v2330, 0
    %2345 = vmatprep.subr.mxu0 0.0
    %2346 = vmatpush1.msra.mxu0 0.0
    %2347 = vmatprep.subr.mxu0 0.0
    %2348 = vmatpush1.msra.mxu0 0.0
    %2349 = vmatprep.subr.mxu0 0.0
    %2350 = vmatpush1.msra.mxu0 0.0
    %2351 = vmatprep.subr.mxu0 0.0
    %2352 = vmatpush1.msra.mxu0 0.0
    %2353 = vmatprep.subr.mxu0 0.0
    %2354 = vmatpush1.msra.mxu0 0.0
    %2355 = vmatprep.subr.mxu0 0.0
    %2356 = vmatpush1.msra.mxu0 0.0
    %2357 = vmatprep.subr.mxu0 0.0
    %2358 = vmatpush1.msra.mxu0 0.0
    %2359 = vmatprep.subr.mxu0 0.0
    %2360 = vmatpush1.msra.mxu0 0.0
    %2361 = vmatprep.subr.mxu0 0.0
    %2362 = vmatpush1.msra.mxu0 0.0
    %2363 = vmatprep.subr.mxu0 0.0
    %2364 = vmatpush1.msra.mxu0 0.0
    %2365 = vmatprep.subr.mxu0 0.0
    %2366 = vmatpush1.msra.mxu0 0.0
    %2367 = vmatprep.subr.mxu0 0.0
    %2368 = vmatpush1.msra.mxu0 0.0
    %2369 = vmatprep.subr.mxu0 0.0
    %2370 = vmatpush1.msra.mxu0 0.0
    %2371 = vmatprep.subr.mxu0 0.0
    %2372 = vmatpush1.msra.mxu0 0.0
    %2373 = vmatprep.subr.mxu0 0.0
    %2374 = vmatpush1.msra.mxu0 %v2332
    %2375 = vmatprep.subr.mxu0 0.0
    %2376 = vmatpush1.msra.mxu0 %v2331
    %2377 = vmatprep.subr.mxu0 0.0
    %2378 = vmatpush2.msra.mxu0 0.0
    %2379 = vmatprep.subr.mxu0 0.0
    %2380 = vmatpush2.msra.mxu0 0.0
    %2381 = vmatprep.subr.mxu0 0.0
    %2382 = vmatpush2.msra.mxu0 0.0
    %2383 = vmatprep.subr.mxu0 0.0
    %2384 = vmatpush2.msra.mxu0 0.0
    %2385 = vmatprep.subr.mxu0 0.0
    %2386 = vmatpush2.msra.mxu0 0.0
    %2387 = vmatprep.subr.mxu0 0.0
    %2388 = vmatpush2.msra.mxu0 0.0
    %2389 = vmatprep.subr.mxu0 0.0
    %2390 = vmatpush2.msra.mxu0 0.0
    %2391 = vmatprep.subr.mxu0 0.0
    %2392 = vmatpush2.msra.mxu0 0.0
    %2393 = vmatprep.subr.mxu0 0.0
    %2394 = vmatpush2.msra.mxu0 0.0
    %2395 = vmatprep.subr.mxu0 0.0
    %2396 = vmatpush2.msra.mxu0 0.0
    %2397 = vmatprep.subr.mxu0 0.0
    %2398 = vmatpush2.msra.mxu0 0.0
    %2399 = vmatprep.subr.mxu0 0.0
    %2400 = vmatpush2.msra.mxu0 0.0
    %2401 = vmatprep.subr.mxu0 0.0
    %2402 = vmatpush2.msra.mxu0 0.0
    %2403 = vmatprep.subr.mxu0 0.0
    %2404 = vmatpush2.msra.mxu0 0.0
    %2405 = vmatprep.subr.mxu0 0.0
    %2406 = vmatpush2.msra.mxu0 0.0
    %2407 = vmatprep.subr.mxu0 0.0
    %2408 = vmatpush2.msra.mxu0 0.0
    %2409 = vmatprep.mubr.f32.mxu0 0.0
    %2410 = vmatmul.mubr.f32.gmra.mxu0 %v2334
    %v2411 = vpop.f32.mrf.mxu0
    %v2412 = vadd.f32 0.0, %v2411
    %v2413 = vpop.f32.mrf.mxu0
    %2414 = vmatprep.mubr.f32.mxu0 0.0
    %2415 = vmatmul.mubr.f32.gmra.mxu0 %v2337
    %v2416 = vpop.f32.mrf.mxu0
    %v2417 = vadd.f32 0.0, %v2416
    %v2418 = vpop.f32.mrf.mxu0
    %2419 = vmatprep.mubr.f32.mxu0 0.0
    %2420 = vmatmul.mubr.f32.gmra.mxu0 %v2340
    %v2421 = vpop.f32.mrf.mxu0
    %v2422 = vadd.f32 0.0, %v2421
    %v2423 = vpop.f32.mrf.mxu0
    %2424 = vmatprep.mubr.f32.mxu0 0.0
    %2425 = vmatmul.mubr.f32.gmra.mxu0 %v2343
    %v2426 = vpop.f32.mrf.mxu0
    %v2427 = vadd.f32 0.0, %v2426
    %v2428 = vpop.f32.mrf.mxu0
    %2429 = vdwg.mxu0
    %v2430 = vadd.f32 %v2266, %v2412
    %v2431 = vadd.f32 %v2266, %v2417
    %v2432 = vadd.f32 %v2266, %v2422
    %v2433 = vadd.f32 %v2266, %v2427
    %s2434 = scalar_lea.vmem [#allocation5], 8
    %v2435 = vld [vmem:[%s2434] ss:$2 sm:$0xff]
    %s2436 = scalar_lea.vmem [#allocation5], 24
    %v2437 = vld [vmem:[%s2436] ss:$2 sm:$0xff]
    %s2438 = scalar_lea.vmem [#allocation5], 40
    %v2439 = vld [vmem:[%s2438] ss:$2 sm:$0xff]
    %s2440 = scalar_lea.vmem [#allocation5], 56
    %v2441 = vld [vmem:[%s2440] ss:$2 sm:$0xff]
    %s2442 = scalar_lea.vmem [#allocation5], 9
    %v2443 = vld [vmem:[%s2442] ss:$2 sm:$0xff]
    %s2444 = scalar_lea.vmem [#allocation5], 25
    %v2445 = vld [vmem:[%s2444] ss:$2 sm:$0xff]
    %s2446 = scalar_lea.vmem [#allocation5], 41
    %v2447 = vld [vmem:[%s2446] ss:$2 sm:$0xff]
    %s2448 = scalar_lea.vmem [#allocation5], 57
    %v2449 = vld [vmem:[%s2448] ss:$2 sm:$0xff]
    %v2450 = vmax.f32 %v2435, %v2443
    %v2451 = vmax.f32 %v2437, %v2445
    %v2452 = vmax.f32 %v2439, %v2447
    %v2453 = vmax.f32 %v2441, %v2449
    %v2454 = vmul.f32 %v2450, %v2290
    %v2455 = vmul.f32 %v2451, %v2290
    %v2456 = vmul.f32 %v2452, %v2290
    %v2457 = vmul.f32 %v2453, %v2290
    %v2458 = vadd.f32 %v2454, %v2298
    %v2459 = vadd.f32 %v2455, %v2298
    %v2460 = vadd.f32 %v2456, %v2298
    %v2461 = vadd.f32 %v2457, %v2298
    %v2462 = vld [vmem:[#allocation11 + $0x40] sm:$0xff]
    %v2463 = vld [vmem:[#allocation11 + $0x48] sm:$0xff]
    %v2465 = vsel %vm2202, %v2458, 0
    %v2468 = vsel %vm2202, %v2459, 0
    %v2471 = vsel %vm2202, %v2460, 0
    %v2474 = vsel %vm2202, %v2461, 0
    %2476 = vmatprep.subr.mxu0 0.0
    %2477 = vmatpush1.msra.mxu0 0.0
    %2478 = vmatprep.subr.mxu0 0.0
    %2479 = vmatpush1.msra.mxu0 0.0
    %2480 = vmatprep.subr.mxu0 0.0
    %2481 = vmatpush1.msra.mxu0 0.0
    %2482 = vmatprep.subr.mxu0 0.0
    %2483 = vmatpush1.msra.mxu0 0.0
    %2484 = vmatprep.subr.mxu0 0.0
    %2485 = vmatpush1.msra.mxu0 0.0
    %2486 = vmatprep.subr.mxu0 0.0
    %2487 = vmatpush1.msra.mxu0 0.0
    %2488 = vmatprep.subr.mxu0 0.0
    %2489 = vmatpush1.msra.mxu0 0.0
    %2490 = vmatprep.subr.mxu0 0.0
    %2491 = vmatpush1.msra.mxu0 0.0
    %2492 = vmatprep.subr.mxu0 0.0
    %2493 = vmatpush1.msra.mxu0 0.0
    %2494 = vmatprep.subr.mxu0 0.0
    %2495 = vmatpush1.msra.mxu0 0.0
    %2496 = vmatprep.subr.mxu0 0.0
    %2497 = vmatpush1.msra.mxu0 0.0
    %2498 = vmatprep.subr.mxu0 0.0
    %2499 = vmatpush1.msra.mxu0 0.0
    %2500 = vmatprep.subr.mxu0 0.0
    %2501 = vmatpush1.msra.mxu0 0.0
    %2502 = vmatprep.subr.mxu0 0.0
    %2503 = vmatpush1.msra.mxu0 0.0
    %2504 = vmatprep.subr.mxu0 0.0
    %2505 = vmatpush1.msra.mxu0 %v2463
    %2506 = vmatprep.subr.mxu0 0.0
    %2507 = vmatpush1.msra.mxu0 %v2462
    %2508 = vmatprep.subr.mxu0 0.0
    %2509 = vmatpush2.msra.mxu0 0.0
    %2510 = vmatprep.subr.mxu0 0.0
    %2511 = vmatpush2.msra.mxu0 0.0
    %2512 = vmatprep.subr.mxu0 0.0
    %2513 = vmatpush2.msra.mxu0 0.0
    %2514 = vmatprep.subr.mxu0 0.0
    %2515 = vmatpush2.msra.mxu0 0.0
    %2516 = vmatprep.subr.mxu0 0.0
    %2517 = vmatpush2.msra.mxu0 0.0
    %2518 = vmatprep.subr.mxu0 0.0
    %2519 = vmatpush2.msra.mxu0 0.0
    %2520 = vmatprep.subr.mxu0 0.0
    %2521 = vmatpush2.msra.mxu0 0.0
    %2522 = vmatprep.subr.mxu0 0.0
    %2523 = vmatpush2.msra.mxu0 0.0
    %2524 = vmatprep.subr.mxu0 0.0
    %2525 = vmatpush2.msra.mxu0 0.0
    %2526 = vmatprep.subr.mxu0 0.0
    %2527 = vmatpush2.msra.mxu0 0.0
    %2528 = vmatprep.subr.mxu0 0.0
    %2529 = vmatpush2.msra.mxu0 0.0
    %2530 = vmatprep.subr.mxu0 0.0
    %2531 = vmatpush2.msra.mxu0 0.0
    %2532 = vmatprep.subr.mxu0 0.0
    %2533 = vmatpush2.msra.mxu0 0.0
    %2534 = vmatprep.subr.mxu0 0.0
    %2535 = vmatpush2.msra.mxu0 0.0
    %2536 = vmatprep.subr.mxu0 0.0
    %2537 = vmatpush2.msra.mxu0 0.0
    %2538 = vmatprep.subr.mxu0 0.0
    %2539 = vmatpush2.msra.mxu0 0.0
    %2540 = vmatprep.mubr.f32.mxu0 0.0
    %2541 = vmatmul.mubr.f32.gmra.mxu0 %v2465
    %v2542 = vpop.f32.mrf.mxu0
    %v2543 = vadd.f32 0.0, %v2542
    %v2544 = vpop.f32.mrf.mxu0
    %2545 = vmatprep.mubr.f32.mxu0 0.0
    %2546 = vmatmul.mubr.f32.gmra.mxu0 %v2468
    %v2547 = vpop.f32.mrf.mxu0
    %v2548 = vadd.f32 0.0, %v2547
    %v2549 = vpop.f32.mrf.mxu0
    %2550 = vmatprep.mubr.f32.mxu0 0.0
    %2551 = vmatmul.mubr.f32.gmra.mxu0 %v2471
    %v2552 = vpop.f32.mrf.mxu0
    %v2553 = vadd.f32 0.0, %v2552
    %v2554 = vpop.f32.mrf.mxu0
    %2555 = vmatprep.mubr.f32.mxu0 0.0
    %2556 = vmatmul.mubr.f32.gmra.mxu0 %v2474
    %v2557 = vpop.f32.mrf.mxu0
    %v2558 = vadd.f32 0.0, %v2557
    %v2559 = vpop.f32.mrf.mxu0
    %2560 = vdwg.mxu0
    %v2561 = vadd.f32 %v2430, %v2543
    %v2562 = vadd.f32 %v2431, %v2548
    %v2563 = vadd.f32 %v2432, %v2553
    %v2564 = vadd.f32 %v2433, %v2558
    %s2565 = scalar_lea.vmem [#allocation5], 10
    %v2566 = vld [vmem:[%s2565] ss:$2 sm:$0xff]
    %s2567 = scalar_lea.vmem [#allocation5], 26
    %v2568 = vld [vmem:[%s2567] ss:$2 sm:$0xff]
    %s2569 = scalar_lea.vmem [#allocation5], 42
    %v2570 = vld [vmem:[%s2569] ss:$2 sm:$0xff]
    %s2571 = scalar_lea.vmem [#allocation5], 58
    %v2572 = vld [vmem:[%s2571] ss:$2 sm:$0xff]
    %s2573 = scalar_lea.vmem [#allocation5], 11
    %v2574 = vld [vmem:[%s2573] ss:$2 sm:$0xff]
    %s2575 = scalar_lea.vmem [#allocation5], 27
    %v2576 = vld [vmem:[%s2575] ss:$2 sm:$0xff]
    %s2577 = scalar_lea.vmem [#allocation5], 43
    %v2578 = vld [vmem:[%s2577] ss:$2 sm:$0xff]
    %s2579 = scalar_lea.vmem [#allocation5], 59
    %v2580 = vld [vmem:[%s2579] ss:$2 sm:$0xff]
    %v2581 = vmax.f32 %v2566, %v2574
    %v2582 = vmax.f32 %v2568, %v2576
    %v2583 = vmax.f32 %v2570, %v2578
    %v2584 = vmax.f32 %v2572, %v2580
    %v2585 = vmul.f32 %v2581, %v2290
    %v2586 = vmul.f32 %v2582, %v2290
    %v2587 = vmul.f32 %v2583, %v2290
    %v2588 = vmul.f32 %v2584, %v2290
    %v2589 = vadd.f32 %v2585, %v2298
    %v2590 = vadd.f32 %v2586, %v2298
    %v2591 = vadd.f32 %v2587, %v2298
    %v2592 = vadd.f32 %v2588, %v2298
    %v2593 = vadd.s32 %v2257, 1
    %v2594 = vadd.s32 %v2258, 1
    %v2595 = vadd.s32 %v2259, 1
    %v2596 = vadd.s32 %v2260, 1
    %vm2597 = vcmp.ge.s32.totalorder %v2593, 0
    %vm2598 = vcmp.ge.s32.totalorder %v2594, 0
    %vm2599 = vcmp.ge.s32.totalorder %v2595, 0
    %vm2600 = vcmp.ge.s32.totalorder %v2596, 0
    %vm2601 = vcmp.lt.s32.totalorder %v2593, 16
    %vm2602 = vcmp.lt.s32.totalorder %v2594, 16
    %vm2603 = vcmp.lt.s32.totalorder %v2595, 16
    %vm2604 = vcmp.lt.s32.totalorder %v2596, 16
    %vm2605 = vmand %vm2597, %vm2601
    %vm2606 = vmand %vm2598, %vm2602
    %vm2607 = vmand %vm2599, %vm2603
    %vm2608 = vmand %vm2600, %vm2604
    %v2609 = vsel %vm2605, 1, 0
    %v2610 = vsel %vm2606, 1, 0
    %v2611 = vsel %vm2607, 1, 0
    %v2612 = vsel %vm2608, 1, 0
    %vm2613 = vcmp.eq.s32.totalorder %v2609, 1
    %vm2614 = vcmp.eq.s32.totalorder %v2610, 1
    %vm2615 = vcmp.eq.s32.totalorder %v2611, 1
    %vm2616 = vcmp.eq.s32.totalorder %v2612, 1
    %v2617 = vsel %vm2613, %v2589, 0.0
    %v2618 = vsel %vm2614, %v2590, 0.0
    %v2619 = vsel %vm2615, %v2591, 0.0
    %v2620 = vsel %vm2616, %v2592, 0.0
    %v2621 = vld [vmem:[#allocation11 + $0x50] sm:$0xff]
    %v2622 = vld [vmem:[#allocation11 + $0x58] sm:$0xff]
    %v2624 = vsel %vm2202, %v2617, 0
    %v2627 = vsel %vm2202, %v2618, 0
    %v2630 = vsel %vm2202, %v2619, 0
    %v2633 = vsel %vm2202, %v2620, 0
    %2635 = vmatprep.subr.mxu0 0.0
    %2636 = vmatpush1.msra.mxu0 0.0
    %2637 = vmatprep.subr.mxu0 0.0
    %2638 = vmatpush1.msra.mxu0 0.0
    %2639 = vmatprep.subr.mxu0 0.0
    %2640 = vmatpush1.msra.mxu0 0.0
    %2641 = vmatprep.subr.mxu0 0.0
    %2642 = vmatpush1.msra.mxu0 0.0
    %2643 = vmatprep.subr.mxu0 0.0
    %2644 = vmatpush1.msra.mxu0 0.0
    %2645 = vmatprep.subr.mxu0 0.0
    %2646 = vmatpush1.msra.mxu0 0.0
    %2647 = vmatprep.subr.mxu0 0.0
    %2648 = vmatpush1.msra.mxu0 0.0
    %2649 = vmatprep.subr.mxu0 0.0
    %2650 = vmatpush1.msra.mxu0 0.0
    %2651 = vmatprep.subr.mxu0 0.0
    %2652 = vmatpush1.msra.mxu0 0.0
    %2653 = vmatprep.subr.mxu0 0.0
    %2654 = vmatpush1.msra.mxu0 0.0
    %2655 = vmatprep.subr.mxu0 0.0
    %2656 = vmatpush1.msra.mxu0 0.0
    %2657 = vmatprep.subr.mxu0 0.0
    %2658 = vmatpush1.msra.mxu0 0.0
    %2659 = vmatprep.subr.mxu0 0.0
    %2660 = vmatpush1.msra.mxu0 0.0
    %2661 = vmatprep.subr.mxu0 0.0
    %2662 = vmatpush1.msra.mxu0 0.0
    %2663 = vmatprep.subr.mxu0 0.0
    %2664 = vmatpush1.msra.mxu0 %v2622
    %2665 = vmatprep.subr.mxu0 0.0
    %2666 = vmatpush1.msra.mxu0 %v2621
    %2667 = vmatprep.subr.mxu0 0.0
    %2668 = vmatpush2.msra.mxu0 0.0
    %2669 = vmatprep.subr.mxu0 0.0
    %2670 = vmatpush2.msra.mxu0 0.0
    %2671 = vmatprep.subr.mxu0 0.0
    %2672 = vmatpush2.msra.mxu0 0.0
    %2673 = vmatprep.subr.mxu0 0.0
    %2674 = vmatpush2.msra.mxu0 0.0
    %2675 = vmatprep.subr.mxu0 0.0
    %2676 = vmatpush2.msra.mxu0 0.0
    %2677 = vmatprep.subr.mxu0 0.0
    %2678 = vmatpush2.msra.mxu0 0.0
    %2679 = vmatprep.subr.mxu0 0.0
    %2680 = vmatpush2.msra.mxu0 0.0
    %2681 = vmatprep.subr.mxu0 0.0
    %2682 = vmatpush2.msra.mxu0 0.0
    %2683 = vmatprep.subr.mxu0 0.0
    %2684 = vmatpush2.msra.mxu0 0.0
    %2685 = vmatprep.subr.mxu0 0.0
    %2686 = vmatpush2.msra.mxu0 0.0
    %2687 = vmatprep.subr.mxu0 0.0
    %2688 = vmatpush2.msra.mxu0 0.0
    %2689 = vmatprep.subr.mxu0 0.0
    %2690 = vmatpush2.msra.mxu0 0.0
    %2691 = vmatprep.subr.mxu0 0.0
    %2692 = vmatpush2.msra.mxu0 0.0
    %2693 = vmatprep.subr.mxu0 0.0
    %2694 = vmatpush2.msra.mxu0 0.0
    %2695 = vmatprep.subr.mxu0 0.0
    %2696 = vmatpush2.msra.mxu0 0.0
    %2697 = vmatprep.subr.mxu0 0.0
    %2698 = vmatpush2.msra.mxu0 0.0
    %2699 = vmatprep.mubr.f32.mxu0 0.0
    %2700 = vmatmul.mubr.f32.gmra.mxu0 %v2624
    %v2701 = vpop.f32.mrf.mxu0
    %v2702 = vadd.f32 0.0, %v2701
    %v2703 = vpop.f32.mrf.mxu0
    %2704 = vmatprep.mubr.f32.mxu0 0.0
    %2705 = vmatmul.mubr.f32.gmra.mxu0 %v2627
    %v2706 = vpop.f32.mrf.mxu0
    %v2707 = vadd.f32 0.0, %v2706
    %v2708 = vpop.f32.mrf.mxu0
    %2709 = vmatprep.mubr.f32.mxu0 0.0
    %2710 = vmatmul.mubr.f32.gmra.mxu0 %v2630
    %v2711 = vpop.f32.mrf.mxu0
    %v2712 = vadd.f32 0.0, %v2711
    %v2713 = vpop.f32.mrf.mxu0
    %2714 = vmatprep.mubr.f32.mxu0 0.0
    %2715 = vmatmul.mubr.f32.gmra.mxu0 %v2633
    %v2716 = vpop.f32.mrf.mxu0
    %v2717 = vadd.f32 0.0, %v2716
    %v2718 = vpop.f32.mrf.mxu0
    %2719 = vdwg.mxu0
    %v2720 = vadd.f32 %v2561, %v2702
    %v2721 = vadd.f32 %v2562, %v2707
    %v2722 = vadd.f32 %v2563, %v2712
    %v2723 = vadd.f32 %v2564, %v2717
    %v2724 = vmax.f32 %v2720, 0.0
    %v2725 = vmax.f32 %v2721, 0.0
    %v2726 = vmax.f32 %v2722, 0.0
    %v2727 = vmax.f32 %v2723, 0.0
    %vm2728 = vcmask 261120
    %2729 = vst.msk [vmem:[#allocation6 + $0x8] sm:$0xff] %vm2728, %v2724
    %2730 = vst.msk [vmem:[#allocation6 + $0x10] sm:$0xff] %vm2728, %v2725
    %2731 = vst.msk [vmem:[#allocation6 + $0x18] sm:$0xff] %vm2728, %v2726
    %2732 = vst.msk [vmem:[#allocation6 + $0x20] sm:$0xff] %vm2728, %v2727
    %v2733 = vld [vmem:[%s2 + $0x9] sm:$0x1]
    %v2734 = vlaneseq
    %v2735 = vshrl.u32 %v2734, 7
    %v2736 = vsub.s32 0, %v2735
    %v2737 = vrot.slane %v2733, %v2736
    %v2738 = vadd.f32 %v2737, 0.0
    %v2739 = vld [vmem:[#allocation6 + $0x7] sm:$0xff]
    %v2740 = vld [vmem:[#allocation6 + $0xf] sm:$0xff]
    %v2741 = vld [vmem:[#allocation6 + $0x17] sm:$0xff]
    %v2742 = vld [vmem:[#allocation6 + $0x1f] sm:$0xff]
    %v2743 = vsel %vm2323, %v2739, 0.0
    %v2744 = vsel %vm2324, %v2740, 0.0
    %v2745 = vsel %vm2325, %v2741, 0.0
    %v2746 = vsel %vm2326, %v2742, 0.0
    %v2747 = vld [vmem:[#allocation11 + $0x60] sm:$0xff]
    %v2748 = vld [vmem:[#allocation11 + $0x68] sm:$0xff]
    %v2749 = vld [vmem:[#allocation11 + $0x70] sm:$0xff]
    %v2750 = vld [vmem:[#allocation11 + $0x78] sm:$0xff]
    %v2752 = vsel %vm2728, %v2743, 0
    %v2755 = vsel %vm2728, %v2744, 0
    %v2758 = vsel %vm2728, %v2745, 0
    %v2761 = vsel %vm2728, %v2746, 0
    %2763 = vmatprep.subr.mxu0 0.0
    %2764 = vmatpush1.msra.mxu0 0.0
    %2765 = vmatprep.subr.mxu0 0.0
    %2766 = vmatpush1.msra.mxu0 0.0
    %2767 = vmatprep.subr.mxu0 0.0
    %2768 = vmatpush1.msra.mxu0 0.0
    %2769 = vmatprep.subr.mxu0 0.0
    %2770 = vmatpush1.msra.mxu0 0.0
    %2771 = vmatprep.subr.mxu0 0.0
    %2772 = vmatpush1.msra.mxu0 0.0
    %2773 = vmatprep.subr.mxu0 0.0
    %2774 = vmatpush1.msra.mxu0 0.0
    %2775 = vmatprep.subr.mxu0 0.0
    %2776 = vmatpush1.msra.mxu0 0.0
    %2777 = vmatprep.subr.mxu0 0.0
    %2778 = vmatpush1.msra.mxu0 0.0
    %2779 = vmatprep.subr.mxu0 0.0
    %2780 = vmatpush1.msra.mxu0 0.0
    %2781 = vmatprep.subr.mxu0 0.0
    %2782 = vmatpush1.msra.mxu0 0.0
    %2783 = vmatprep.subr.mxu0 0.0
    %2784 = vmatpush1.msra.mxu0 0.0
    %2785 = vmatprep.subr.mxu0 0.0
    %2786 = vmatpush1.msra.mxu0 0.0
    %2787 = vmatprep.subr.mxu0 0.0
    %2788 = vmatpush1.msra.mxu0 %v2750
    %2789 = vmatprep.subr.mxu0 0.0
    %2790 = vmatpush1.msra.mxu0 %v2749
    %2791 = vmatprep.subr.mxu0 0.0
    %2792 = vmatpush1.msra.mxu0 %v2748
    %2793 = vmatprep.subr.mxu0 0.0
    %2794 = vmatpush1.msra.mxu0 %v2747
    %2795 = vmatprep.subr.mxu0 0.0
    %2796 = vmatpush2.msra.mxu0 0.0
    %2797 = vmatprep.subr.mxu0 0.0
    %2798 = vmatpush2.msra.mxu0 0.0
    %2799 = vmatprep.subr.mxu0 0.0
    %2800 = vmatpush2.msra.mxu0 0.0
    %2801 = vmatprep.subr.mxu0 0.0
    %2802 = vmatpush2.msra.mxu0 0.0
    %2803 = vmatprep.subr.mxu0 0.0
    %2804 = vmatpush2.msra.mxu0 0.0
    %2805 = vmatprep.subr.mxu0 0.0
    %2806 = vmatpush2.msra.mxu0 0.0
    %2807 = vmatprep.subr.mxu0 0.0
    %2808 = vmatpush2.msra.mxu0 0.0
    %2809 = vmatprep.subr.mxu0 0.0
    %2810 = vmatpush2.msra.mxu0 0.0
    %2811 = vmatprep.subr.mxu0 0.0
    %2812 = vmatpush2.msra.mxu0 0.0
    %2813 = vmatprep.subr.mxu0 0.0
    %2814 = vmatpush2.msra.mxu0 0.0
    %2815 = vmatprep.subr.mxu0 0.0
    %2816 = vmatpush2.msra.mxu0 0.0
    %2817 = vmatprep.subr.mxu0 0.0
    %2818 = vmatpush2.msra.mxu0 0.0
    %2819 = vmatprep.subr.mxu0 0.0
    %2820 = vmatpush2.msra.mxu0 0.0
    %2821 = vmatprep.subr.mxu0 0.0
    %2822 = vmatpush2.msra.mxu0 0.0
    %2823 = vmatprep.subr.mxu0 0.0
    %2824 = vmatpush2.msra.mxu0 0.0
    %2825 = vmatprep.subr.mxu0 0.0
    %2826 = vmatpush2.msra.mxu0 0.0
    %2827 = vmatprep.mubr.f32.mxu0 0.0
    %2828 = vmatmul.mubr.f32.gmra.mxu0 %v2752
    %v2829 = vpop.f32.mrf.mxu0
    %v2830 = vadd.f32 0.0, %v2829
    %v2831 = vpop.f32.mrf.mxu0
    %2832 = vmatprep.mubr.f32.mxu0 0.0
    %2833 = vmatmul.mubr.f32.gmra.mxu0 %v2755
    %v2834 = vpop.f32.mrf.mxu0
    %v2835 = vadd.f32 0.0, %v2834
    %v2836 = vpop.f32.mrf.mxu0
    %2837 = vmatprep.mubr.f32.mxu0 0.0
    %2838 = vmatmul.mubr.f32.gmra.mxu0 %v2758
    %v2839 = vpop.f32.mrf.mxu0
    %v2840 = vadd.f32 0.0, %v2839
    %v2841 = vpop.f32.mrf.mxu0
    %2842 = vmatprep.mubr.f32.mxu0 0.0
    %2843 = vmatmul.mubr.f32.gmra.mxu0 %v2761
    %v2844 = vpop.f32.mrf.mxu0
    %v2845 = vadd.f32 0.0, %v2844
    %v2846 = vpop.f32.mrf.mxu0
    %2847 = vdwg.mxu0
    %v2848 = vadd.f32 %v2738, %v2830
    %v2849 = vadd.f32 %v2738, %v2835
    %v2850 = vadd.f32 %v2738, %v2840
    %v2851 = vadd.f32 %v2738, %v2845
    %v2852 = vld [vmem:[#allocation11 + $0x80] sm:$0xff]
    %v2853 = vld [vmem:[#allocation11 + $0x88] sm:$0xff]
    %v2854 = vld [vmem:[#allocation11 + $0x90] sm:$0xff]
    %v2855 = vld [vmem:[#allocation11 + $0x98] sm:$0xff]
    %v2857 = vsel %vm2728, %v2724, 0
    %v2860 = vsel %vm2728, %v2725, 0
    %v2863 = vsel %vm2728, %v2726, 0
    %v2866 = vsel %vm2728, %v2727, 0
    %2868 = vmatprep.subr.mxu0 0.0
    %2869 = vmatpush1.msra.mxu0 0.0
    %2870 = vmatprep.subr.mxu0 0.0
    %2871 = vmatpush1.msra.mxu0 0.0
    %2872 = vmatprep.subr.mxu0 0.0
    %2873 = vmatpush1.msra.mxu0 0.0
    %2874 = vmatprep.subr.mxu0 0.0
    %2875 = vmatpush1.msra.mxu0 0.0
    %2876 = vmatprep.subr.mxu0 0.0
    %2877 = vmatpush1.msra.mxu0 0.0
    %2878 = vmatprep.subr.mxu0 0.0
    %2879 = vmatpush1.msra.mxu0 0.0
    %2880 = vmatprep.subr.mxu0 0.0
    %2881 = vmatpush1.msra.mxu0 0.0
    %2882 = vmatprep.subr.mxu0 0.0
    %2883 = vmatpush1.msra.mxu0 0.0
    %2884 = vmatprep.subr.mxu0 0.0
    %2885 = vmatpush1.msra.mxu0 0.0
    %2886 = vmatprep.subr.mxu0 0.0
    %2887 = vmatpush1.msra.mxu0 0.0
    %2888 = vmatprep.subr.mxu0 0.0
    %2889 = vmatpush1.msra.mxu0 0.0
    %2890 = vmatprep.subr.mxu0 0.0
    %2891 = vmatpush1.msra.mxu0 0.0
    %2892 = vmatprep.subr.mxu0 0.0
    %2893 = vmatpush1.msra.mxu0 %v2855
    %2894 = vmatprep.subr.mxu0 0.0
    %2895 = vmatpush1.msra.mxu0 %v2854
    %2896 = vmatprep.subr.mxu0 0.0
    %2897 = vmatpush1.msra.mxu0 %v2853
    %2898 = vmatprep.subr.mxu0 0.0
    %2899 = vmatpush1.msra.mxu0 %v2852
    %2900 = vmatprep.subr.mxu0 0.0
    %2901 = vmatpush2.msra.mxu0 0.0
    %2902 = vmatprep.subr.mxu0 0.0
    %2903 = vmatpush2.msra.mxu0 0.0
    %2904 = vmatprep.subr.mxu0 0.0
    %2905 = vmatpush2.msra.mxu0 0.0
    %2906 = vmatprep.subr.mxu0 0.0
    %2907 = vmatpush2.msra.mxu0 0.0
    %2908 = vmatprep.subr.mxu0 0.0
    %2909 = vmatpush2.msra.mxu0 0.0
    %2910 = vmatprep.subr.mxu0 0.0
    %2911 = vmatpush2.msra.mxu0 0.0
    %2912 = vmatprep.subr.mxu0 0.0
    %2913 = vmatpush2.msra.mxu0 0.0
    %2914 = vmatprep.subr.mxu0 0.0
    %2915 = vmatpush2.msra.mxu0 0.0
    %2916 = vmatprep.subr.mxu0 0.0
    %2917 = vmatpush2.msra.mxu0 0.0
    %2918 = vmatprep.subr.mxu0 0.0
    %2919 = vmatpush2.msra.mxu0 0.0
    %2920 = vmatprep.subr.mxu0 0.0
    %2921 = vmatpush2.msra.mxu0 0.0
    %2922 = vmatprep.subr.mxu0 0.0
    %2923 = vmatpush2.msra.mxu0 0.0
    %2924 = vmatprep.subr.mxu0 0.0
    %2925 = vmatpush2.msra.mxu0 0.0
    %2926 = vmatprep.subr.mxu0 0.0
    %2927 = vmatpush2.msra.mxu0 0.0
    %2928 = vmatprep.subr.mxu0 0.0
    %2929 = vmatpush2.msra.mxu0 0.0
    %2930 = vmatprep.subr.mxu0 0.0
    %2931 = vmatpush2.msra.mxu0 0.0
    %2932 = vmatprep.mubr.f32.mxu0 0.0
    %2933 = vmatmul.mubr.f32.gmra.mxu0 %v2857
    %v2934 = vpop.f32.mrf.mxu0
    %v2935 = vadd.f32 0.0, %v2934
    %v2936 = vpop.f32.mrf.mxu0
    %2937 = vmatprep.mubr.f32.mxu0 0.0
    %2938 = vmatmul.mubr.f32.gmra.mxu0 %v2860
    %v2939 = vpop.f32.mrf.mxu0
    %v2940 = vadd.f32 0.0, %v2939
    %v2941 = vpop.f32.mrf.mxu0
    %2942 = vmatprep.mubr.f32.mxu0 0.0
    %2943 = vmatmul.mubr.f32.gmra.mxu0 %v2863
    %v2944 = vpop.f32.mrf.mxu0
    %v2945 = vadd.f32 0.0, %v2944
    %v2946 = vpop.f32.mrf.mxu0
    %2947 = vmatprep.mubr.f32.mxu0 0.0
    %2948 = vmatmul.mubr.f32.gmra.mxu0 %v2866
    %v2949 = vpop.f32.mrf.mxu0
    %v2950 = vadd.f32 0.0, %v2949
    %v2951 = vpop.f32.mrf.mxu0
    %2952 = vdwg.mxu0
    %v2953 = vadd.f32 %v2848, %v2935
    %v2954 = vadd.f32 %v2849, %v2940
    %v2955 = vadd.f32 %v2850, %v2945
    %v2956 = vadd.f32 %v2851, %v2950
    %v2957 = vld [vmem:[#allocation6 + $0x9] sm:$0xff]
    %v2958 = vld [vmem:[#allocation6 + $0x11] sm:$0xff]
    %v2959 = vld [vmem:[#allocation6 + $0x19] sm:$0xff]
    %v2960 = vld [vmem:[#allocation6 + $0x21] sm:$0xff]
    %v2961 = vsel %vm2613, %v2957, 0.0
    %v2962 = vsel %vm2614, %v2958, 0.0
    %v2963 = vsel %vm2615, %v2959, 0.0
    %v2964 = vsel %vm2616, %v2960, 0.0
    %v2965 = vld [vmem:[#allocation11 + $0xa0] sm:$0xff]
    %v2966 = vld [vmem:[#allocation11 + $0xa8] sm:$0xff]
    %v2967 = vld [vmem:[#allocation11 + $0xb0] sm:$0xff]
    %v2968 = vld [vmem:[#allocation11 + $0xb8] sm:$0xff]
    %v2970 = vsel %vm2728, %v2961, 0
    %v2973 = vsel %vm2728, %v2962, 0
    %v2976 = vsel %vm2728, %v2963, 0
    %v2979 = vsel %vm2728, %v2964, 0
    %2981 = vmatprep.subr.mxu0 0.0
    %2982 = vmatpush1.msra.mxu0 0.0
    %2983 = vmatprep.subr.mxu0 0.0
    %2984 = vmatpush1.msra.mxu0 0.0
    %2985 = vmatprep.subr.mxu0 0.0
    %2986 = vmatpush1.msra.mxu0 0.0
    %2987 = vmatprep.subr.mxu0 0.0
    %2988 = vmatpush1.msra.mxu0 0.0
    %2989 = vmatprep.subr.mxu0 0.0
    %2990 = vmatpush1.msra.mxu0 0.0
    %2991 = vmatprep.subr.mxu0 0.0
    %2992 = vmatpush1.msra.mxu0 0.0
    %2993 = vmatprep.subr.mxu0 0.0
    %2994 = vmatpush1.msra.mxu0 0.0
    %2995 = vmatprep.subr.mxu0 0.0
    %2996 = vmatpush1.msra.mxu0 0.0
    %2997 = vmatprep.subr.mxu0 0.0
    %2998 = vmatpush1.msra.mxu0 0.0
    %2999 = vmatprep.subr.mxu0 0.0
    %3000 = vmatpush1.msra.mxu0 0.0
    %3001 = vmatprep.subr.mxu0 0.0
    %3002 = vmatpush1.msra.mxu0 0.0
    %3003 = vmatprep.subr.mxu0 0.0
    %3004 = vmatpush1.msra.mxu0 0.0
    %3005 = vmatprep.subr.mxu0 0.0
    %3006 = vmatpush1.msra.mxu0 %v2968
    %3007 = vmatprep.subr.mxu0 0.0
    %3008 = vmatpush1.msra.mxu0 %v2967
    %3009 = vmatprep.subr.mxu0 0.0
    %3010 = vmatpush1.msra.mxu0 %v2966
    %3011 = vmatprep.subr.mxu0 0.0
    %3012 = vmatpush1.msra.mxu0 %v2965
    %3013 = vmatprep.subr.mxu0 0.0
    %3014 = vmatpush2.msra.mxu0 0.0
    %3015 = vmatprep.subr.mxu0 0.0
    %3016 = vmatpush2.msra.mxu0 0.0
    %3017 = vmatprep.subr.mxu0 0.0
    %3018 = vmatpush2.msra.mxu0 0.0
    %3019 = vmatprep.subr.mxu0 0.0
    %3020 = vmatpush2.msra.mxu0 0.0
    %3021 = vmatprep.subr.mxu0 0.0
    %3022 = vmatpush2.msra.mxu0 0.0
    %3023 = vmatprep.subr.mxu0 0.0
    %3024 = vmatpush2.msra.mxu0 0.0
    %3025 = vmatprep.subr.mxu0 0.0
    %3026 = vmatpush2.msra.mxu0 0.0
    %3027 = vmatprep.subr.mxu0 0.0
    %3028 = vmatpush2.msra.mxu0 0.0
    %3029 = vmatprep.subr.mxu0 0.0
    %3030 = vmatpush2.msra.mxu0 0.0
    %3031 = vmatprep.subr.mxu0 0.0
    %3032 = vmatpush2.msra.mxu0 0.0
    %3033 = vmatprep.subr.mxu0 0.0
    %3034 = vmatpush2.msra.mxu0 0.0
    %3035 = vmatprep.subr.mxu0 0.0
    %3036 = vmatpush2.msra.mxu0 0.0
    %3037 = vmatprep.subr.mxu0 0.0
    %3038 = vmatpush2.msra.mxu0 0.0
    %3039 = vmatprep.subr.mxu0 0.0
    %3040 = vmatpush2.msra.mxu0 0.0
    %3041 = vmatprep.subr.mxu0 0.0
    %3042 = vmatpush2.msra.mxu0 0.0
    %3043 = vmatprep.subr.mxu0 0.0
    %3044 = vmatpush2.msra.mxu0 0.0
    %3045 = vmatprep.mubr.f32.mxu0 0.0
    %3046 = vmatmul.mubr.f32.gmra.mxu0 %v2970
    %v3047 = vpop.f32.mrf.mxu0
    %v3048 = vadd.f32 0.0, %v3047
    %v3049 = vpop.f32.mrf.mxu0
    %3050 = vmatprep.mubr.f32.mxu0 0.0
    %3051 = vmatmul.mubr.f32.gmra.mxu0 %v2973
    %v3052 = vpop.f32.mrf.mxu0
    %v3053 = vadd.f32 0.0, %v3052
    %v3054 = vpop.f32.mrf.mxu0
    %3055 = vmatprep.mubr.f32.mxu0 0.0
    %3056 = vmatmul.mubr.f32.gmra.mxu0 %v2976
    %v3057 = vpop.f32.mrf.mxu0
    %v3058 = vadd.f32 0.0, %v3057
    %v3059 = vpop.f32.mrf.mxu0
    %3060 = vmatprep.mubr.f32.mxu0 0.0
    %3061 = vmatmul.mubr.f32.gmra.mxu0 %v2979
    %v3062 = vpop.f32.mrf.mxu0
    %v3063 = vadd.f32 0.0, %v3062
    %v3064 = vpop.f32.mrf.mxu0
    %3065 = vdwg.mxu0
    %v3066 = vadd.f32 %v2953, %v3048
    %v3067 = vadd.f32 %v2954, %v3053
    %v3068 = vadd.f32 %v2955, %v3058
    %v3069 = vadd.f32 %v2956, %v3063
    %v3070 = vmax.f32 %v3066, 0.0
    %v3071 = vmax.f32 %v3067, 0.0
    %v3072 = vmax.f32 %v3068, 0.0
    %v3073 = vmax.f32 %v3069, 0.0
    %vm3074 = vcmask 523264
    %3075 = vst.msk [vmem:[#allocation7] sm:$0xff] %vm3074, %v3070
    %3076 = vst.msk [vmem:[#allocation7 + $0x8] sm:$0xff] %vm3074, %v3071
    %3077 = vst.msk [vmem:[#allocation7 + $0x10] sm:$0xff] %vm3074, %v3072
    %3078 = vst.msk [vmem:[#allocation7 + $0x18] sm:$0xff] %vm3074, %v3073
    %v3079 = vld [vmem:[%s2 + $0xa] sm:$0x1]
    %v3080 = vld [vmem:[%s2 + $0xb] sm:$0x1]
    %v3081 = vld [vmem:[#allocation7] ss:$16 sm:$0x3]
    %s3082 = scalar_lea.vmem [#allocation7], 1
    %v3083 = vld [vmem:[%s3082] ss:$16 sm:$0x3]
    %v3084 = vmax.f32 %v3081, %v3083
    %v3085 = vlaneseq
    %v3086 = vshrl.u32 %v3085, 7
    %v3087 = vsub.s32 0, %v3086
    %v3088 = vrot.slane %v3079, %v3087
    %v3089 = vmul.f32 %v3084, %v3088
    %v3090 = vlaneseq
    %v3091 = vshrl.u32 %v3090, 7
    %v3092 = vsub.s32 0, %v3091
    %v3093 = vrot.slane %v3080, %v3092
    %v3094 = vadd.f32 %v3089, %v3093
    %vm3095 = vcmask 517120
    %3096 = vst.msk [vmem:[#allocation8] sm:$0x3] %vm3095, %v3094
    %s3097 = scalar_lea.vmem [#allocation7], 2
    %v3098 = vld [vmem:[%s3097] ss:$16 sm:$0x3]
    %s3099 = scalar_lea.vmem [#allocation7], 3
    %v3100 = vld [vmem:[%s3099] ss:$16 sm:$0x3]
    %v3101 = vmax.f32 %v3098, %v3100
    %v3102 = vmul.f32 %v3101, %v3088
    %v3103 = vadd.f32 %v3102, %v3093
    %v3106 = vunpack.c.l.s4 1983009808
    %v3107 = vunpack.c.0.s8 %v3106
    %v3108 = vlaneseq
    %v3109 = vshrl.u32 %v3108, 7
    %v3110 = vsub.s32 %v3107, %v3109
    %v3111 = vrot.slane %v3103, %v3110
    %3112 = vrot.lane.b32.xlu0 %v3111, 64
    %v3113 = vpop.permute.xlu0 %3112
    %vm3115 = vcmask 1041920
    %3116 = vst.msk [vmem:[#allocation8] sm:$0x3] %vm3115, %v3113
    %s3117 = scalar_lea.vmem [#allocation7], 4
    %v3118 = vld [vmem:[%s3117] ss:$16 sm:$0x3]
    %s3119 = scalar_lea.vmem [#allocation7], 5
    %v3120 = vld [vmem:[%s3119] ss:$16 sm:$0x3]
    %v3121 = vmax.f32 %v3118, %v3120
    %v3122 = vmul.f32 %v3121, %v3088
    %v3123 = vadd.f32 %v3122, %v3093
    %3124 = vst.msk [vmem:[#allocation8 + $0x2] sm:$0x3] %vm3095, %v3123
    %s3125 = scalar_lea.vmem [#allocation7], 6
    %v3126 = vld [vmem:[%s3125] ss:$16 sm:$0x3]
    %s3127 = scalar_lea.vmem [#allocation7], 7
    %v3128 = vld [vmem:[%s3127] ss:$16 sm:$0x3]
    %v3129 = vmax.f32 %v3126, %v3128
    %v3130 = vmul.f32 %v3129, %v3088
    %v3131 = vadd.f32 %v3130, %v3093
    %v3134 = vunpack.c.l.s4 1983009808
    %v3135 = vunpack.c.0.s8 %v3134
    %v3136 = vlaneseq
    %v3137 = vshrl.u32 %v3136, 7
    %v3138 = vsub.s32 %v3135, %v3137
    %v3139 = vrot.slane %v3131, %v3138
    %3140 = vrot.lane.b32.xlu0 %v3139, 64
    %v3141 = vpop.permute.xlu0 %3140
    %3143 = vst.msk [vmem:[#allocation8 + $0x2] sm:$0x3] %vm3115, %v3141
    %s3144 = scalar_lea.vmem [#allocation7], 8
    %v3145 = vld [vmem:[%s3144] ss:$16 sm:$0x3]
    %s3146 = scalar_lea.vmem [#allocation7], 9
    %v3147 = vld [vmem:[%s3146] ss:$16 sm:$0x3]
    %v3148 = vmax.f32 %v3145, %v3147
    %v3149 = vmul.f32 %v3148, %v3088
    %v3150 = vadd.f32 %v3149, %v3093
    %3151 = vst.msk [vmem:[#allocation8 + $0x4] sm:$0x3] %vm3095, %v3150
    %s3152 = scalar_lea.vmem [#allocation7], 10
    %v3153 = vld [vmem:[%s3152] ss:$16 sm:$0x3]
    %s3154 = scalar_lea.vmem [#allocation7], 11
    %v3155 = vld [vmem:[%s3154] ss:$16 sm:$0x3]
    %v3156 = vmax.f32 %v3153, %v3155
    %v3157 = vmul.f32 %v3156, %v3088
    %v3158 = vadd.f32 %v3157, %v3093
    %v3161 = vunpack.c.l.s4 1983009808
    %v3162 = vunpack.c.0.s8 %v3161
    %v3163 = vlaneseq
    %v3164 = vshrl.u32 %v3163, 7
    %v3165 = vsub.s32 %v3162, %v3164
    %v3166 = vrot.slane %v3158, %v3165
    %3167 = vrot.lane.b32.xlu0 %v3166, 64
    %v3168 = vpop.permute.xlu0 %3167
    %3170 = vst.msk [vmem:[#allocation8 + $0x4] sm:$0x3] %vm3115, %v3168
    %s3171 = scalar_lea.vmem [#allocation7], 12
    %v3172 = vld [vmem:[%s3171] ss:$16 sm:$0x3]
    %s3173 = scalar_lea.vmem [#allocation7], 13
    %v3174 = vld [vmem:[%s3173] ss:$16 sm:$0x3]
    %v3175 = vmax.f32 %v3172, %v3174
    %v3176 = vmul.f32 %v3175, %v3088
    %v3177 = vadd.f32 %v3176, %v3093
    %3178 = vst.msk [vmem:[#allocation8 + $0x6] sm:$0x3] %vm3095, %v3177
    %s3179 = scalar_lea.vmem [#allocation7], 14
    %v3180 = vld [vmem:[%s3179] ss:$16 sm:$0x3]
    %s3181 = scalar_lea.vmem [#allocation7], 15
    %v3182 = vld [vmem:[%s3181] ss:$16 sm:$0x3]
    %v3183 = vmax.f32 %v3180, %v3182
    %v3184 = vmul.f32 %v3183, %v3088
    %v3185 = vadd.f32 %v3184, %v3093
    %v3188 = vunpack.c.l.s4 1983009808
    %v3189 = vunpack.c.0.s8 %v3188
    %v3190 = vlaneseq
    %v3191 = vshrl.u32 %v3190, 7
    %v3192 = vsub.s32 %v3189, %v3191
    %v3193 = vrot.slane %v3185, %v3192
    %3194 = vrot.lane.b32.xlu0 %v3193, 64
    %v3195 = vpop.permute.xlu0 %3194
    %3197 = vst.msk [vmem:[#allocation8 + $0x6] sm:$0x3] %vm3115, %v3195
    %s3198 = smul.u32 4, 64
    %s3199 = smul.u32 %s3198, 2
    %s3200 = sshll.u32 %s3199, 4
    %3201 = dma.done [#allocation10], %s3200
    %v3202 = vld [vmem:[#allocation8] sm:$0xff]
    %v3204 = vcombine.high %v3202, %v3202
    %v3206 = vunpack.c.l.s4 1983009808
    %v3207 = vunpack.c.0.s8 %v3206
    %v3208 = vlaneseq
    %v3209 = vshrl.u32 %v3208, 7
    %v3210 = vsub.s32 %v3207, %v3209
    %v3211 = vrot.slane %v3202, %v3210
    %v3213 = vunpack.c.l.s4 1983009808
    %v3214 = vunpack.c.0.s8 %v3213
    %v3215 = vlaneseq
    %v3216 = vshrl.u32 %v3215, 7
    %v3217 = vsub.s32 %v3214, %v3216
    %v3218 = vrot.slane %v3204, %v3217
    %v3219 = vcombine.high %v3211, %v3211
    %v3220 = vcombine.high %v3218, %v3218
    %v3225 = vpack.c.bf16 %v3211, %v3211
    %v3226 = vpack.c.bf16 %v3219, %v3219
    %v3227 = vpack.c.bf16 %v3218, %v3218
    %v3228 = vpack.c.bf16 %v3220, %v3220
    %v3229 = vld [vmem:[#allocation9] sm:$0xff]
    %v3230 = vld [vmem:[#allocation9 + $0x8] sm:$0xff]
    %v3231 = vld [vmem:[#allocation9 + $0x10] sm:$0xff]
    %v3232 = vld [vmem:[#allocation9 + $0x18] sm:$0xff]
    %v3233 = vld [vmem:[#allocation9 + $0x20] sm:$0xff]
    %v3234 = vld [vmem:[#allocation9 + $0x28] sm:$0xff]
    %v3235 = vld [vmem:[#allocation9 + $0x30] sm:$0xff]
    %v3236 = vld [vmem:[#allocation9 + $0x38] sm:$0xff]
    %v3237 = vld [vmem:[#allocation9 + $0x40] sm:$0xff]
    %v3238 = vld [vmem:[#allocation9 + $0x48] sm:$0xff]
    %v3239 = vld [vmem:[#allocation9 + $0x50] sm:$0xff]
    %v3240 = vld [vmem:[#allocation9 + $0x58] sm:$0xff]
    %v3241 = vld [vmem:[#allocation9 + $0x60] sm:$0xff]
    %v3242 = vld [vmem:[#allocation9 + $0x68] sm:$0xff]
    %v3243 = vld [vmem:[#allocation9 + $0x70] sm:$0xff]
    %v3244 = vld [vmem:[#allocation9 + $0x78] sm:$0xff]
    %v3245 = vld [vmem:[#allocation9 + $0x80] sm:$0xff]
    %v3246 = vld [vmem:[#allocation9 + $0x88] sm:$0xff]
    %v3247 = vld [vmem:[#allocation9 + $0x90] sm:$0xff]
    %v3248 = vld [vmem:[#allocation9 + $0x98] sm:$0xff]
    %v3249 = vld [vmem:[#allocation9 + $0xa0] sm:$0xff]
    %v3250 = vld [vmem:[#allocation9 + $0xa8] sm:$0xff]
    %v3251 = vld [vmem:[#allocation9 + $0xb0] sm:$0xff]
    %v3252 = vld [vmem:[#allocation9 + $0xb8] sm:$0xff]
    %v3253 = vld [vmem:[#allocation9 + $0xc0] sm:$0xff]
    %v3254 = vld [vmem:[#allocation9 + $0xc8] sm:$0xff]
    %v3255 = vld [vmem:[#allocation9 + $0xd0] sm:$0xff]
    %v3256 = vld [vmem:[#allocation9 + $0xd8] sm:$0xff]
    %v3257 = vld [vmem:[#allocation9 + $0xe0] sm:$0xff]
    %v3258 = vld [vmem:[#allocation9 + $0xe8] sm:$0xff]
    %v3259 = vld [vmem:[#allocation9 + $0xf0] sm:$0xff]
    %v3260 = vld [vmem:[#allocation9 + $0xf8] sm:$0xff]
    %v3261 = vld [vmem:[#allocation9 + $0x100] sm:$0xff]
    %v3262 = vld [vmem:[#allocation9 + $0x108] sm:$0xff]
    %v3263 = vld [vmem:[#allocation9 + $0x110] sm:$0xff]
    %v3264 = vld [vmem:[#allocation9 + $0x118] sm:$0xff]
    %v3265 = vld [vmem:[#allocation9 + $0x120] sm:$0xff]
    %v3266 = vld [vmem:[#allocation9 + $0x128] sm:$0xff]
    %v3267 = vld [vmem:[#allocation9 + $0x130] sm:$0xff]
    %v3268 = vld [vmem:[#allocation9 + $0x138] sm:$0xff]
    %v3269 = vld [vmem:[#allocation9 + $0x140] sm:$0xff]
    %v3270 = vld [vmem:[#allocation9 + $0x148] sm:$0xff]
    %v3271 = vld [vmem:[#allocation9 + $0x150] sm:$0xff]
    %v3272 = vld [vmem:[#allocation9 + $0x158] sm:$0xff]
    %v3273 = vld [vmem:[#allocation9 + $0x160] sm:$0xff]
    %v3274 = vld [vmem:[#allocation9 + $0x168] sm:$0xff]
    %v3275 = vld [vmem:[#allocation9 + $0x170] sm:$0xff]
    %v3276 = vld [vmem:[#allocation9 + $0x178] sm:$0xff]
    %v3277 = vld [vmem:[#allocation9 + $0x180] sm:$0xff]
    %v3278 = vld [vmem:[#allocation9 + $0x188] sm:$0xff]
    %v3279 = vld [vmem:[#allocation9 + $0x190] sm:$0xff]
    %v3280 = vld [vmem:[#allocation9 + $0x198] sm:$0xff]
    %v3281 = vld [vmem:[#allocation9 + $0x1a0] sm:$0xff]
    %v3282 = vld [vmem:[#allocation9 + $0x1a8] sm:$0xff]
    %v3283 = vld [vmem:[#allocation9 + $0x1b0] sm:$0xff]
    %v3284 = vld [vmem:[#allocation9 + $0x1b8] sm:$0xff]
    %v3285 = vld [vmem:[#allocation9 + $0x1c0] sm:$0xff]
    %v3286 = vld [vmem:[#allocation9 + $0x1c8] sm:$0xff]
    %v3287 = vld [vmem:[#allocation9 + $0x1d0] sm:$0xff]
    %v3288 = vld [vmem:[#allocation9 + $0x1d8] sm:$0xff]
    %v3289 = vld [vmem:[#allocation9 + $0x1e0] sm:$0xff]
    %v3290 = vld [vmem:[#allocation9 + $0x1e8] sm:$0xff]
    %v3291 = vld [vmem:[#allocation9 + $0x1f0] sm:$0xff]
    %v3292 = vld [vmem:[#allocation9 + $0x1f8] sm:$0xff]
    %v3293 = vld [vmem:[%s3] sm:$0x3]
    %v3295 = vlaneseq
    %v3296 = vshrl.u32 %v3295, 7
    %v3297 = vsub.s32 0, %v3296
    %v3298 = vrot.slane %v3293, %v3297
    %v3299 = vlaneseq
    %v3300 = vshrl.u32 %v3299, 7
    %v3301 = vsub.s32 1, %v3300
    %v3302 = vrot.slane %v3293, %v3301
    %v3369 = vunpack.c.l.b16 %v3229
    %v3370 = vunpack.c.h.b16 %v3229
    %v3371 = vunpack.c.l.b16 %v3230
    %v3372 = vunpack.c.h.b16 %v3230
    %v3373 = vunpack.c.l.b16 %v3231
    %v3374 = vunpack.c.h.b16 %v3231
    %v3375 = vunpack.c.l.b16 %v3232
    %v3376 = vunpack.c.h.b16 %v3232
    %v3377 = vunpack.c.l.b16 %v3233
    %v3378 = vunpack.c.h.b16 %v3233
    %v3379 = vunpack.c.l.b16 %v3234
    %v3380 = vunpack.c.h.b16 %v3234
    %v3381 = vunpack.c.l.b16 %v3235
    %v3382 = vunpack.c.h.b16 %v3235
    %v3383 = vunpack.c.l.b16 %v3236
    %v3384 = vunpack.c.h.b16 %v3236
    %v3385 = vunpack.c.l.b16 %v3237
    %v3386 = vunpack.c.h.b16 %v3237
    %v3387 = vunpack.c.l.b16 %v3238
    %v3388 = vunpack.c.h.b16 %v3238
    %v3389 = vunpack.c.l.b16 %v3239
    %v3390 = vunpack.c.h.b16 %v3239
    %v3391 = vunpack.c.l.b16 %v3240
    %v3392 = vunpack.c.h.b16 %v3240
    %v3393 = vunpack.c.l.b16 %v3241
    %v3394 = vunpack.c.h.b16 %v3241
    %v3395 = vunpack.c.l.b16 %v3242
    %v3396 = vunpack.c.h.b16 %v3242
    %v3397 = vunpack.c.l.b16 %v3243
    %v3398 = vunpack.c.h.b16 %v3243
    %v3399 = vunpack.c.l.b16 %v3244
    %v3400 = vunpack.c.h.b16 %v3244
    %v3401 = vunpack.c.l.b16 %v3245
    %v3402 = vunpack.c.h.b16 %v3245
    %v3403 = vunpack.c.l.b16 %v3246
    %v3404 = vunpack.c.h.b16 %v3246
    %v3405 = vunpack.c.l.b16 %v3247
    %v3406 = vunpack.c.h.b16 %v3247
    %v3407 = vunpack.c.l.b16 %v3248
    %v3408 = vunpack.c.h.b16 %v3248
    %v3409 = vunpack.c.l.b16 %v3249
    %v3410 = vunpack.c.h.b16 %v3249
    %v3411 = vunpack.c.l.b16 %v3250
    %v3412 = vunpack.c.h.b16 %v3250
    %v3413 = vunpack.c.l.b16 %v3251
    %v3414 = vunpack.c.h.b16 %v3251
    %v3415 = vunpack.c.l.b16 %v3252
    %v3416 = vunpack.c.h.b16 %v3252
    %v3417 = vunpack.c.l.b16 %v3253
    %v3418 = vunpack.c.h.b16 %v3253
    %v3419 = vunpack.c.l.b16 %v3254
    %v3420 = vunpack.c.h.b16 %v3254
    %v3421 = vunpack.c.l.b16 %v3255
    %v3422 = vunpack.c.h.b16 %v3255
    %v3423 = vunpack.c.l.b16 %v3256
    %v3424 = vunpack.c.h.b16 %v3256
    %v3425 = vunpack.c.l.b16 %v3257
    %v3426 = vunpack.c.h.b16 %v3257
    %v3427 = vunpack.c.l.b16 %v3258
    %v3428 = vunpack.c.h.b16 %v3258
    %v3429 = vunpack.c.l.b16 %v3259
    %v3430 = vunpack.c.h.b16 %v3259
    %v3431 = vunpack.c.l.b16 %v3260
    %v3432 = vunpack.c.h.b16 %v3260
    %v3433 = vunpack.c.l.b16 %v3261
    %v3434 = vunpack.c.h.b16 %v3261
    %v3435 = vunpack.c.l.b16 %v3262
    %v3436 = vunpack.c.h.b16 %v3262
    %v3437 = vunpack.c.l.b16 %v3263
    %v3438 = vunpack.c.h.b16 %v3263
    %v3439 = vunpack.c.l.b16 %v3264
    %v3440 = vunpack.c.h.b16 %v3264
    %v3441 = vunpack.c.l.b16 %v3265
    %v3442 = vunpack.c.h.b16 %v3265
    %v3443 = vunpack.c.l.b16 %v3266
    %v3444 = vunpack.c.h.b16 %v3266
    %v3445 = vunpack.c.l.b16 %v3267
    %v3446 = vunpack.c.h.b16 %v3267
    %v3447 = vunpack.c.l.b16 %v3268
    %v3448 = vunpack.c.h.b16 %v3268
    %v3449 = vunpack.c.l.b16 %v3269
    %v3450 = vunpack.c.h.b16 %v3269
    %v3451 = vunpack.c.l.b16 %v3270
    %v3452 = vunpack.c.h.b16 %v3270
    %v3453 = vunpack.c.l.b16 %v3271
    %v3454 = vunpack.c.h.b16 %v3271
    %v3455 = vunpack.c.l.b16 %v3272
    %v3456 = vunpack.c.h.b16 %v3272
    %v3457 = vunpack.c.l.b16 %v3273
    %v3458 = vunpack.c.h.b16 %v3273
    %v3459 = vunpack.c.l.b16 %v3274
    %v3460 = vunpack.c.h.b16 %v3274
    %v3461 = vunpack.c.l.b16 %v3275
    %v3462 = vunpack.c.h.b16 %v3275
    %v3463 = vunpack.c.l.b16 %v3276
    %v3464 = vunpack.c.h.b16 %v3276
    %v3465 = vunpack.c.l.b16 %v3277
    %v3466 = vunpack.c.h.b16 %v3277
    %v3467 = vunpack.c.l.b16 %v3278
    %v3468 = vunpack.c.h.b16 %v3278
    %v3469 = vunpack.c.l.b16 %v3279
    %v3470 = vunpack.c.h.b16 %v3279
    %v3471 = vunpack.c.l.b16 %v3280
    %v3472 = vunpack.c.h.b16 %v3280
    %v3473 = vunpack.c.l.b16 %v3281
    %v3474 = vunpack.c.h.b16 %v3281
    %v3475 = vunpack.c.l.b16 %v3282
    %v3476 = vunpack.c.h.b16 %v3282
    %v3477 = vunpack.c.l.b16 %v3283
    %v3478 = vunpack.c.h.b16 %v3283
    %v3479 = vunpack.c.l.b16 %v3284
    %v3480 = vunpack.c.h.b16 %v3284
    %v3481 = vunpack.c.l.b16 %v3285
    %v3482 = vunpack.c.h.b16 %v3285
    %v3483 = vunpack.c.l.b16 %v3286
    %v3484 = vunpack.c.h.b16 %v3286
    %v3485 = vunpack.c.l.b16 %v3287
    %v3486 = vunpack.c.h.b16 %v3287
    %v3487 = vunpack.c.l.b16 %v3288
    %v3488 = vunpack.c.h.b16 %v3288
    %v3489 = vunpack.c.l.b16 %v3289
    %v3490 = vunpack.c.h.b16 %v3289
    %v3491 = vunpack.c.l.b16 %v3290
    %v3492 = vunpack.c.h.b16 %v3290
    %v3493 = vunpack.c.l.b16 %v3291
    %v3494 = vunpack.c.h.b16 %v3291
    %v3495 = vunpack.c.l.b16 %v3292
    %v3496 = vunpack.c.h.b16 %v3292
    %v3497 = vpack.c.b16 %v3371, %v3369
    %v3498 = vpack.c.b16 %v3372, %v3370
    %v3499 = vpack.c.b16 %v3375, %v3373
    %v3500 = vpack.c.b16 %v3376, %v3374
    %v3501 = vpack.c.b16 %v3379, %v3377
    %v3502 = vpack.c.b16 %v3380, %v3378
    %v3503 = vpack.c.b16 %v3383, %v3381
    %v3504 = vpack.c.b16 %v3384, %v3382
    %v3505 = vpack.c.b16 %v3387, %v3385
    %v3506 = vpack.c.b16 %v3388, %v3386
    %v3507 = vpack.c.b16 %v3391, %v3389
    %v3508 = vpack.c.b16 %v3392, %v3390
    %v3509 = vpack.c.b16 %v3395, %v3393
    %v3510 = vpack.c.b16 %v3396, %v3394
    %v3511 = vpack.c.b16 %v3399, %v3397
    %v3512 = vpack.c.b16 %v3400, %v3398
    %v3513 = vpack.c.b16 %v3403, %v3401
    %v3514 = vpack.c.b16 %v3404, %v3402
    %v3515 = vpack.c.b16 %v3407, %v3405
    %v3516 = vpack.c.b16 %v3408, %v3406
    %v3517 = vpack.c.b16 %v3411, %v3409
    %v3518 = vpack.c.b16 %v3412, %v3410
    %v3519 = vpack.c.b16 %v3415, %v3413
    %v3520 = vpack.c.b16 %v3416, %v3414
    %v3521 = vpack.c.b16 %v3419, %v3417
    %v3522 = vpack.c.b16 %v3420, %v3418
    %v3523 = vpack.c.b16 %v3423, %v3421
    %v3524 = vpack.c.b16 %v3424, %v3422
    %v3525 = vpack.c.b16 %v3427, %v3425
    %v3526 = vpack.c.b16 %v3428, %v3426
    %v3527 = vpack.c.b16 %v3431, %v3429
    %v3528 = vpack.c.b16 %v3432, %v3430
    %v3529 = vpack.c.b16 %v3435, %v3433
    %v3530 = vpack.c.b16 %v3436, %v3434
    %v3531 = vpack.c.b16 %v3439, %v3437
    %v3532 = vpack.c.b16 %v3440, %v3438
    %v3533 = vpack.c.b16 %v3443, %v3441
    %v3534 = vpack.c.b16 %v3444, %v3442
    %v3535 = vpack.c.b16 %v3447, %v3445
    %v3536 = vpack.c.b16 %v3448, %v3446
    %v3537 = vpack.c.b16 %v3451, %v3449
    %v3538 = vpack.c.b16 %v3452, %v3450
    %v3539 = vpack.c.b16 %v3455, %v3453
    %v3540 = vpack.c.b16 %v3456, %v3454
    %v3541 = vpack.c.b16 %v3459, %v3457
    %v3542 = vpack.c.b16 %v3460, %v3458
    %v3543 = vpack.c.b16 %v3463, %v3461
    %v3544 = vpack.c.b16 %v3464, %v3462
    %v3545 = vpack.c.b16 %v3467, %v3465
    %v3546 = vpack.c.b16 %v3468, %v3466
    %v3547 = vpack.c.b16 %v3471, %v3469
    %v3548 = vpack.c.b16 %v3472, %v3470
    %v3549 = vpack.c.b16 %v3475, %v3473
    %v3550 = vpack.c.b16 %v3476, %v3474
    %v3551 = vpack.c.b16 %v3479, %v3477
    %v3552 = vpack.c.b16 %v3480, %v3478
    %v3553 = vpack.c.b16 %v3483, %v3481
    %v3554 = vpack.c.b16 %v3484, %v3482
    %v3555 = vpack.c.b16 %v3487, %v3485
    %v3556 = vpack.c.b16 %v3488, %v3486
    %v3557 = vpack.c.b16 %v3491, %v3489
    %v3558 = vpack.c.b16 %v3492, %v3490
    %v3559 = vpack.c.b16 %v3495, %v3493
    %v3560 = vpack.c.b16 %v3496, %v3494
    %3625 = vmatprep.subr.bf16.mxu0 %v3512
    %3626 = vmatpush1.bf16.msra.mxu0 %v3511
    %3627 = vmatprep.subr.bf16.mxu0 %v3510
    %3628 = vmatpush1.bf16.msra.mxu0 %v3509
    %3629 = vmatprep.subr.bf16.mxu0 %v3508
    %3630 = vmatpush1.bf16.msra.mxu0 %v3507
    %3631 = vmatprep.subr.bf16.mxu0 %v3506
    %3632 = vmatpush1.bf16.msra.mxu0 %v3505
    %3633 = vmatprep.subr.bf16.mxu0 %v3504
    %3634 = vmatpush1.bf16.msra.mxu0 %v3503
    %3635 = vmatprep.subr.bf16.mxu0 %v3502
    %3636 = vmatpush1.bf16.msra.mxu0 %v3501
    %3637 = vmatprep.subr.bf16.mxu0 %v3500
    %3638 = vmatpush1.bf16.msra.mxu0 %v3499
    %3639 = vmatprep.subr.bf16.mxu0 %v3498
    %3640 = vmatpush1.bf16.msra.mxu0 %v3497
    %3641 = vmatprep.subr.bf16.mxu0 %v3528
    %3642 = vmatpush2.bf16.msra.mxu0 %v3527
    %3643 = vmatprep.subr.bf16.mxu0 %v3526
    %3644 = vmatpush2.bf16.msra.mxu0 %v3525
    %3645 = vmatprep.subr.bf16.mxu0 %v3524
    %3646 = vmatpush2.bf16.msra.mxu0 %v3523
    %3647 = vmatprep.subr.bf16.mxu0 %v3522
    %3648 = vmatpush2.bf16.msra.mxu0 %v3521
    %3649 = vmatprep.subr.bf16.mxu0 %v3520
    %3650 = vmatpush2.bf16.msra.mxu0 %v3519
    %3651 = vmatprep.subr.bf16.mxu0 %v3518
    %3652 = vmatpush2.bf16.msra.mxu0 %v3517
    %3653 = vmatprep.subr.bf16.mxu0 %v3516
    %3654 = vmatpush2.bf16.msra.mxu0 %v3515
    %3655 = vmatprep.subr.bf16.mxu0 %v3514
    %3656 = vmatpush2.bf16.msra.mxu0 %v3513
    %3657 = vmatprep.mubr.bf16.mxu0 %v3226
    %3658 = vmatmul.mubr.bf16.gmra.mxu0 %v3225
    %v3659 = vpop.f32.mrf.mxu0
    %v3660 = vadd.f32 %v3298, %v3659
    %v3661 = vpop.f32.mrf.mxu0
    %v3662 = vadd.f32 %v3302, %v3661
    %v3663 = vpop.f32.mrf.mxu0
    %v3664 = vpop.f32.mrf.mxu0
    %3665 = vdwg.mxu0
    %3666 = vmatprep.subr.bf16.mxu0 %v3544
    %3667 = vmatpush1.bf16.msra.mxu0 %v3543
    %3668 = vmatprep.subr.bf16.mxu0 %v3542
    %3669 = vmatpush1.bf16.msra.mxu0 %v3541
    %3670 = vmatprep.subr.bf16.mxu0 %v3540
    %3671 = vmatpush1.bf16.msra.mxu0 %v3539
    %3672 = vmatprep.subr.bf16.mxu0 %v3538
    %3673 = vmatpush1.bf16.msra.mxu0 %v3537
    %3674 = vmatprep.subr.bf16.mxu0 %v3536
    %3675 = vmatpush1.bf16.msra.mxu0 %v3535
    %3676 = vmatprep.subr.bf16.mxu0 %v3534
    %3677 = vmatpush1.bf16.msra.mxu0 %v3533
    %3678 = vmatprep.subr.bf16.mxu0 %v3532
    %3679 = vmatpush1.bf16.msra.mxu0 %v3531
    %3680 = vmatprep.subr.bf16.mxu0 %v3530
    %3681 = vmatpush1.bf16.msra.mxu0 %v3529
    %3682 = vmatprep.subr.bf16.mxu0 %v3560
    %3683 = vmatpush2.bf16.msra.mxu0 %v3559
    %3684 = vmatprep.subr.bf16.mxu0 %v3558
    %3685 = vmatpush2.bf16.msra.mxu0 %v3557
    %3686 = vmatprep.subr.bf16.mxu0 %v3556
    %3687 = vmatpush2.bf16.msra.mxu0 %v3555
    %3688 = vmatprep.subr.bf16.mxu0 %v3554
    %3689 = vmatpush2.bf16.msra.mxu0 %v3553
    %3690 = vmatprep.subr.bf16.mxu0 %v3552
    %3691 = vmatpush2.bf16.msra.mxu0 %v3551
    %3692 = vmatprep.subr.bf16.mxu0 %v3550
    %3693 = vmatpush2.bf16.msra.mxu0 %v3549
    %3694 = vmatprep.subr.bf16.mxu0 %v3548
    %3695 = vmatpush2.bf16.msra.mxu0 %v3547
    %3696 = vmatprep.subr.bf16.mxu0 %v3546
    %3697 = vmatpush2.bf16.msra.mxu0 %v3545
    %3698 = vmatprep.mubr.bf16.mxu0 %v3228
    %3699 = vmatmul.mubr.bf16.gmra.mxu0 %v3227
    %v3700 = vpop.f32.mrf.mxu0
    %v3701 = vadd.f32 %v3660, %v3700
    %v3702 = vpop.f32.mrf.mxu0
    %v3703 = vadd.f32 %v3662, %v3702
    %v3704 = vpop.f32.mrf.mxu0
    %v3705 = vpop.f32.mrf.mxu0
    %3706 = vdwg.mxu0
    %v3707 = vmax.f32 %v3701, 0.0
    %v3708 = vmax.f32 %v3703, 0.0
    %v3709 = vld [vmem:[#allocation11 + $0xc0] sm:$0xff]
    %v3710 = vld [vmem:[#allocation11 + $0xc8] sm:$0xff]
    %v3711 = vld [vmem:[#allocation11 + $0xd0] sm:$0xff]
    %v3712 = vld [vmem:[#allocation11 + $0xd8] sm:$0xff]
    %v3713 = vld [vmem:[#allocation11 + $0xe0] sm:$0xff]
    %v3714 = vld [vmem:[#allocation11 + $0xe8] sm:$0xff]
    %v3715 = vld [vmem:[#allocation11 + $0xf0] sm:$0xff]
    %v3716 = vld [vmem:[#allocation11 + $0xf8] sm:$0xff]
    %v3717 = vld [vmem:[#allocation11 + $0x100] sm:$0xff]
    %v3718 = vld [vmem:[#allocation11 + $0x108] sm:$0xff]
    %v3719 = vld [vmem:[#allocation11 + $0x110] sm:$0xff]
    %v3720 = vld [vmem:[#allocation11 + $0x118] sm:$0xff]
    %v3721 = vld [vmem:[#allocation11 + $0x120] sm:$0xff]
    %v3722 = vld [vmem:[#allocation11 + $0x128] sm:$0xff]
    %v3723 = vld [vmem:[#allocation11 + $0x130] sm:$0xff]
    %v3724 = vld [vmem:[#allocation11 + $0x138] sm:$0xff]
    %v3725 = vld [vmem:[#allocation11 + $0x140] sm:$0xff]
    %v3726 = vld [vmem:[#allocation11 + $0x148] sm:$0xff]
    %v3727 = vld [vmem:[#allocation11 + $0x150] sm:$0xff]
    %v3728 = vld [vmem:[#allocation11 + $0x158] sm:$0xff]
    %v3729 = vld [vmem:[#allocation11 + $0x160] sm:$0xff]
    %v3730 = vld [vmem:[#allocation11 + $0x168] sm:$0xff]
    %v3731 = vld [vmem:[#allocation11 + $0x170] sm:$0xff]
    %v3732 = vld [vmem:[#allocation11 + $0x178] sm:$0xff]
    %v3733 = vld [vmem:[#allocation11 + $0x180] sm:$0xff]
    %v3734 = vld [vmem:[#allocation11 + $0x188] sm:$0xff]
    %v3735 = vld [vmem:[#allocation11 + $0x190] sm:$0xff]
    %v3736 = vld [vmem:[#allocation11 + $0x198] sm:$0xff]
    %v3737 = vld [vmem:[#allocation11 + $0x1a0] sm:$0xff]
    %v3738 = vld [vmem:[#allocation11 + $0x1a8] sm:$0xff]
    %v3739 = vld [vmem:[#allocation11 + $0x1b0] sm:$0xff]
    %v3740 = vld [vmem:[#allocation11 + $0x1b8] sm:$0xff]
    %v3741 = vld [vmem:[%s2 + $0xc] sm:$0x1]
    %v3742 = vlaneseq
    %v3743 = vshrl.u32 %v3742, 7
    %v3744 = vsub.s32 0, %v3743
    %v3745 = vrot.slane %v3741, %v3744
    %3746 = vmatprep.subr.mxu0 0.0
    %3747 = vmatpush1.msra.mxu0 %v3724
    %3748 = vmatprep.subr.mxu0 0.0
    %3749 = vmatpush1.msra.mxu0 %v3723
    %3750 = vmatprep.subr.mxu0 0.0
    %3751 = vmatpush1.msra.mxu0 %v3722
    %3752 = vmatprep.subr.mxu0 0.0
    %3753 = vmatpush1.msra.mxu0 %v3721
    %3754 = vmatprep.subr.mxu0 0.0
    %3755 = vmatpush1.msra.mxu0 %v3720
    %3756 = vmatprep.subr.mxu0 0.0
    %3757 = vmatpush1.msra.mxu0 %v3719
    %3758 = vmatprep.subr.mxu0 0.0
    %3759 = vmatpush1.msra.mxu0 %v3718
    %3760 = vmatprep.subr.mxu0 0.0
    %3761 = vmatpush1.msra.mxu0 %v3717
    %3762 = vmatprep.subr.mxu0 0.0
    %3763 = vmatpush1.msra.mxu0 %v3716
    %3764 = vmatprep.subr.mxu0 0.0
    %3765 = vmatpush1.msra.mxu0 %v3715
    %3766 = vmatprep.subr.mxu0 0.0
    %3767 = vmatpush1.msra.mxu0 %v3714
    %3768 = vmatprep.subr.mxu0 0.0
    %3769 = vmatpush1.msra.mxu0 %v3713
    %3770 = vmatprep.subr.mxu0 0.0
    %3771 = vmatpush1.msra.mxu0 %v3712
    %3772 = vmatprep.subr.mxu0 0.0
    %3773 = vmatpush1.msra.mxu0 %v3711
    %3774 = vmatprep.subr.mxu0 0.0
    %3775 = vmatpush1.msra.mxu0 %v3710
    %3776 = vmatprep.subr.mxu0 0.0
    %3777 = vmatpush1.msra.mxu0 %v3709
    %3778 = vmatprep.subr.mxu0 0.0
    %3779 = vmatpush2.msra.mxu0 %v3740
    %3780 = vmatprep.subr.mxu0 0.0
    %3781 = vmatpush2.msra.mxu0 %v3739
    %3782 = vmatprep.subr.mxu0 0.0
    %3783 = vmatpush2.msra.mxu0 %v3738
    %3784 = vmatprep.subr.mxu0 0.0
    %3785 = vmatpush2.msra.mxu0 %v3737
    %3786 = vmatprep.subr.mxu0 0.0
    %3787 = vmatpush2.msra.mxu0 %v3736
    %3788 = vmatprep.subr.mxu0 0.0
    %3789 = vmatpush2.msra.mxu0 %v3735
    %3790 = vmatprep.subr.mxu0 0.0
    %3791 = vmatpush2.msra.mxu0 %v3734
    %3792 = vmatprep.subr.mxu0 0.0
    %3793 = vmatpush2.msra.mxu0 %v3733
    %3794 = vmatprep.subr.mxu0 0.0
    %3795 = vmatpush2.msra.mxu0 %v3732
    %3796 = vmatprep.subr.mxu0 0.0
    %3797 = vmatpush2.msra.mxu0 %v3731
    %3798 = vmatprep.subr.mxu0 0.0
    %3799 = vmatpush2.msra.mxu0 %v3730
    %3800 = vmatprep.subr.mxu0 0.0
    %3801 = vmatpush2.msra.mxu0 %v3729
    %3802 = vmatprep.subr.mxu0 0.0
    %3803 = vmatpush2.msra.mxu0 %v3728
    %3804 = vmatprep.subr.mxu0 0.0
    %3805 = vmatpush2.msra.mxu0 %v3727
    %3806 = vmatprep.subr.mxu0 0.0
    %3807 = vmatpush2.msra.mxu0 %v3726
    %3808 = vmatprep.subr.mxu0 0.0
    %3809 = vmatpush2.msra.mxu0 %v3725
    %3810 = vmatprep.mubr.f32.mxu0 %v3708
    %3811 = vmatmul.mubr.f32.gmra.mxu0 %v3707
    %v3812 = vpop.f32.mrf.mxu0
    %v3813 = vadd.f32 %v3745, %v3812
    %v3814 = vpop.f32.mrf.mxu0
    %3815 = vdwg.mxu0
    %3816 = vst [vmem:[#allocation14] sm:$0x3] %v3813
    // Predicated region
    $region26: #{tpu_custom_call.1} parent=1 // pred_check
      _
    $region27: #{tpu_custom_call.1} parent=1 // pred_check_branch
      %3818 = sbr.rel (0) target = $region29
    $region28: #{tpu_custom_call.1} parent=1 // pred_region
      %s3820 = ssub.s32 32, 32
      %3821 = vsyncadd [#allocation13], %s3820
      %s3823 = sshll.u32 [#allocation14], 4
      %s3824 = int_to_ptr.vmem [resolvable:$true] %s3823
      %3826 = dma.vmem_to_hbm [thread:$0]  %s3824, 32, %s5, [#allocation13]
    $region29: #{tpu_custom_call.1} parent=1 // pred_fallthru
      _
    // Predicated region
    $region30: #{tpu_custom_call.1} parent=1 // pred_check
      _
    $region31: #{tpu_custom_call.1} parent=1 // pred_check_branch
      %3828 = sbr.rel (0) target = $region33
    $region32: #{tpu_custom_call.1} parent=1 // pred_region
      %3829 = dma.done [#allocation13], 32
    $region33: #{tpu_custom_call.1} parent=1 // pred_fallthru
      _
    %3830 = vsyncpa [#allocation12], 1
    %3831 = vsyncpa [#allocation13], 1
  %3832 = vsyncmov [#allocation10]
  %s3833 = vpop.sfrf %3832
  %p3834 = scmp.eq.s32.totalorder %s3833, 0
  %p3835 = pneg %p3834
  %3837 = shalt.err (%p3835)

</llo_original>
